<compile_context>
chip_gen: v7x
topology: tpu7x:2x2x1
jax: 0.10.0
libtpu: 0.0.40
codegen_flags: <defaults>
</compile_context>

<pallas_src>
import functools

import jax
import jax.numpy as jnp
from jax.experimental import pallas as pl
from jax.experimental.pallas import tpu as pltpu

EPS = 1e-5
NEG_INF = -1e30
LANE = 128


def _round_up(x, m):
    return pl.cdiv(x, m) * m


def _vmem_limit_bytes():
    """~80% of physical VMEM: ~102 MiB on v5e/v6e (128 MiB), ~51 MiB on v7x (64 MiB)."""
    try:
        cap = int(getattr(pltpu.get_tpu_info(), "vmem_capacity_bytes"))
        return max(32 * 1024 * 1024, int(cap * 0.8))
    except Exception:
        return 48 * 1024 * 1024


def _layernorm(x, gamma, beta, inv_c):
    # x: (R, Cp) f32 with exactly-zero padding beyond the true C columns, so
    # plain sums / C give PyTorch's biased-variance LayerNorm statistics.
    mu = jnp.sum(x, axis=-1, keepdims=True) * inv_c
    var = jnp.sum(x * x, axis=-1, keepdims=True) * inv_c - mu * mu
    return (x - mu) * jax.lax.rsqrt(var + EPS) * gamma + beta


# --------------------------------------------------------------------------
# Kernel 1: all transformer blocks fused, layer loop unrolled inside the body
# --------------------------------------------------------------------------
def transformer_stack_kernel(x_ref,
                             ln1g_ref, ln1b_ref, wqkv_ref, wo_ref, bo_ref,
                             ln2g_ref, ln2b_ref, w1_ref, b1_ref, w2_ref, b2_ref,
                             o_ref, *, num_layers, num_heads, seq_len,
                             true_c, head_slot):
    x = x_ref[...]                               # (R, Cp) f32, R = tile_b * T
    R, Cp = x.shape
    tile_b = R // seq_len
    Hp = num_heads * head_slot
    inv_c = 1.0 / true_c

    # In-kernel causal bias (no (R, R) f32 mask DMA).
    row = jax.lax.broadcasted_iota(jnp.int32, (tile_b, seq_len, seq_len), 1)
    col = jax.lax.broadcasted_iota(jnp.int32, (tile_b, seq_len, seq_len), 2)
    causal = jnp.where(col <= row, 0.0, NEG_INF).astype(jnp.float32)

    for l in range(num_layers):                  # whole layer stack fused in one call
        # ---- multi-head causal self-attention on LN1(x) ----
        h = _layernorm(x, ln1g_ref[l], ln1b_ref[l], inv_c).astype(jnp.bfloat16)
        # Fused QKV projection: contraction depth Cp, output width 3*Hp.
        # 1/sqrt(hs) is already folded into the Q columns on the host.
        qkv = jnp.dot(h, wqkv_ref[l], preferred_element_type=jnp.float32)
        q = qkv[:, :Hp].reshape(tile_b, seq_len, Hp)
        k = qkv[:, Hp:2 * Hp].reshape(tile_b, seq_len, Hp)
        v = qkv[:, 2 * Hp:].reshape(tile_b, seq_len, Hp)

        parts = []
        for hh in range(num_heads):              # static unroll, 128-aligned lane slices
            sl = slice(hh * head_slot, (hh + 1) * head_slot)
            q_h = q[..., sl].astype(jnp.bfloat16)
            k_h = k[..., sl].astype(jnp.bfloat16)
            v_h = v[..., sl].astype(jnp.bfloat16)
            # Per-sequence batched attention: O(tile_b*T^2), not O((tile_b*T)^2).
            s = jnp.einsum('bqd,bkd->bqk', q_h, k_h,
                           preferred_element_type=jnp.float32) + causal
            m = jnp.max(s, axis=-1, keepdims=True)
            p = jnp.exp(s - m)
            p = p / jnp.sum(p, axis=-1, keepdims=True)      # exact softmax (parity)
            o_h = jnp.einsum('bqk,bkd->bqd', p.astype(jnp.bfloat16), v_h,
                             preferred_element_type=jnp.float32)
            parts.append(o_h.reshape(R, head_slot))
        # Concat the 128-aligned per-head slabs -> one deep output projection.
        o_all = jnp.concatenate(parts, axis=-1).astype(jnp.bfloat16)    # (R, Hp)
        attn = jnp.dot(o_all, wo_ref[l], preferred_element_type=jnp.float32) + bo_ref[l]
        # TODO(synk): attention / residual / FF dropout omitted (inference: identity).
        x = x + attn

        # ---- feed-forward on LN2(x) ----
        h2 = _layernorm(x, ln2g_ref[l], ln2b_ref[l], inv_c).astype(jnp.bfloat16)
        hid = jnp.dot(h2, w1_ref[l], preferred_element_type=jnp.float32) + b1_ref[l]
        hid = jnp.maximum(hid, 0.0).astype(jnp.bfloat16)
        ff = jnp.dot(hid, w2_ref[l], preferred_element_type=jnp.float32) + b2_ref[l]
        x = x + ff

    o_ref[...] = x


def run_transformer_stack(x2d, stack, *, num_heads, tile_rows, seq_len,
                          true_c, head_slot):
    N, Cp = x2d.shape
    L = stack["wqkv"].shape[0]
    n_tiles = N // tile_rows

    names = ["ln1g", "ln1b", "wqkv", "wo", "bo",
             "ln2g", "ln2b", "w1", "b1", "w2", "b2"]

    # Full stacked weight set as a single resident VMEM block (tiny here).
    # If weights ever exceed ~half the VMEM budget, reintroduce a layer grid axis.
    def full_spec(a):
        nd = a.ndim
        return pl.BlockSpec(a.shape, lambda i, nd=nd: (0,) * nd)

    return pl.pallas_call(
        functools.partial(transformer_stack_kernel, num_layers=L,
                          num_heads=num_heads, seq_len=seq_len,
                          true_c=true_c, head_slot=head_slot),
        out_shape=jax.ShapeDtypeStruct((N, Cp), jnp.float32),
        grid=(n_tiles,),
        in_specs=[pl.BlockSpec((tile_rows, Cp), lambda i: (i, 0))]
                 + [full_spec(stack[n]) for n in names],
        out_specs=pl.BlockSpec((tile_rows, Cp), lambda i: (i, 0)),
        input_output_aliases={0: 0},             # donate x2d as the output buffer
        compiler_params=pltpu.CompilerParams(
            dimension_semantics=("parallel",),   # row tiles shard across TCs (megacore)
            vmem_limit_bytes=_vmem_limit_bytes()),
    )(x2d, *[stack[n] for n in names])


# --------------------------------------------------------------------------
# Kernel 2: final LayerNorm + lm-head + per-row cross-entropy (parallel rows)
# --------------------------------------------------------------------------
def head_loss_kernel(x_ref, g_ref, b_ref, wh_ref, bh_ref, tgt_ref,
                     logits_ref, loss_ref, *, vocab, true_c):
    x = x_ref[...]                                                  # (R, Cp)
    h = _layernorm(x, g_ref[...], b_ref[...], 1.0 / true_c).astype(jnp.bfloat16)
    logits = jnp.dot(h, wh_ref[...], preferred_element_type=jnp.float32) + bh_ref[...]
    logits_ref[...] = logits                                        # lane-dense store

    R, Vp = logits.shape
    col = jax.lax.broadcasted_iota(jnp.int32, (R, Vp), 1)
    valid = col < vocab                                             # mask padded vocab cols
    z = jnp.where(valid, logits, NEG_INF)
    m = jnp.max(z, axis=-1, keepdims=True)
    lse = m + jnp.log(jnp.sum(jnp.exp(z - m), axis=-1, keepdims=True))
    tgt = tgt_ref[...]                                              # (R, 1) int32
    tl = jnp.sum(jnp.where(col == tgt, logits, 0.0), axis=-1, keepdims=True)
    loss_ref[...] = lse - tl                                        # per-row NLL


def run_head_and_loss(x2d, lnf_g, lnf_b, wh_p, bh_p, tgt2d, *, vocab, true_c,
                      tile_rows):
    N, Cp = x2d.shape
    Vp = wh_p.shape[1]
    n_tiles = N // tile_rows
    logits_p, row_loss = pl.pallas_call(
        functools.partial(head_loss_kernel, vocab=vocab, true_c=true_c),
        out_shape=(jax.ShapeDtypeStruct((N, Vp), jnp.float32),
                   jax.ShapeDtypeStruct((N, 1), jnp.float32)),
        grid=(n_tiles,),
        in_specs=[
            pl.BlockSpec((tile_rows, Cp), lambda i: (i, 0)),
            pl.BlockSpec((1, Cp), lambda i: (0, 0)),
            pl.BlockSpec((1, Cp), lambda i: (0, 0)),
            pl.BlockSpec((Cp, Vp), lambda i: (0, 0)),
            pl.BlockSpec((1, Vp), lambda i: (0, 0)),
            pl.BlockSpec((tile_rows, 1), lambda i: (i, 0)),
        ],
        out_specs=(
            pl.BlockSpec((tile_rows, Vp), lambda i: (i, 0)),
            pl.BlockSpec((tile_rows, 1), lambda i: (i, 0)),
        ),
        compiler_params=pltpu.CompilerParams(
            dimension_semantics=("parallel",),   # no serial loss accumulator
            vmem_limit_bytes=_vmem_limit_bytes()),
    )(x2d, lnf_g, lnf_b, wh_p, bh_p, tgt2d)
    return logits_p, row_loss


# --------------------------------------------------------------------------
# Host-side glue
# --------------------------------------------------------------------------
def _pick_tile_rows(batch, seq_len, cap_rows=512):
    """Rows per grid tile: whole sequences, sublane-aligned, prefer >=2 tiles
    (so v7x megacore has work for both TensorCores), then the biggest tile."""
    candidates = []
    for tb in range(1, batch + 1):
        if batch % tb:
            continue
        rows = tb * seq_len
        if rows % 8 != 0 and rows != batch * seq_len:
            continue                                   # single full tile is always legal
        candidates.append((tb, rows))
    if not candidates:
        return batch * seq_len

    def score(c):
        tb, rows = c
        return (batch // tb >= 2, rows <= cap_rows, rows)

    return max(candidates, key=score)[1]


def init_params(key, vocab_size, block_size, num_embed, num_heads, num_blocks):
    C = num_embed
    assert C % num_heads == 0
    hs = C // num_heads
    Cp = _round_up(C, LANE)                      # lane-dense channel dim
    Sp = _round_up(hs, LANE)                     # 128-lane slot per head
    Hp = num_heads * Sp
    F = 4 * C
    Fp = _round_up(F, LANE)
    Vp = _round_up(vocab_size, LANE)
    init_scale = 0.02
    attn_scale = hs ** -0.5
    keys = jax.random.split(key, 3 + num_blocks)

    def nrm(k, shape):
        return init_scale * jax.random.normal(k, shape, jnp.float32)

    # Embeddings padded to Cp lanes; padded columns are exactly zero everywhere.
    tok = jnp.pad(nrm(keys[0], (vocab_size, C)), ((0, 0), (0, Cp - C)))
    pos = jnp.pad(nrm(keys[1], (block_size, C)), ((0, 0), (0, Cp - C)))

    # lm head padded to a lane-dense (Cp, 128k) slab (padded rows/cols are zero).
    khw, khb = jax.random.split(keys[2])
    wh = nrm(khw, (C, vocab_size))
    bh = nrm(khb, (1, vocab_size))
    wh_p = jnp.zeros((Cp, Vp), jnp.float32).at[:C, :vocab_size].set(wh).astype(jnp.bfloat16)
    bh_p = jnp.zeros((1, Vp), jnp.float32).at[:, :vocab_size].set(bh)

    def pad_gamma(g):                            # padded gamma cols MUST be zero
        return jnp.zeros((1, Cp), jnp.float32).at[:, :C].set(g)

    stack = {n: [] for n in ("ln1g", "ln1b", "wqkv", "wo", "bo",
                             "ln2g", "ln2b", "w1", "b1", "w2", "b2")}
    for bi in range(num_blocks):
        bk = jax.random.split(keys[3 + bi], 9)
        wq, wk_, wv = nrm(bk[0], (C, C)), nrm(bk[1], (C, C)), nrm(bk[2], (C, C))
        wo, bo = nrm(bk[3], (C, C)), nrm(bk[4], (1, C))
        w1, b1 = nrm(bk[5], (C, F)), nrm(bk[6], (1, F))
        w2, b2 = nrm(bk[7], (F, C)), nrm(bk[8], (1, C))

        # Fused QKV projection with one 128-lane slot per head; softmax scale
        # folded into the Q columns.  Output projection packed to match.
        wqkv = jnp.zeros((Cp, 3 * Hp), jnp.float32)
        wo_p = jnp.zeros((Hp, Cp), jnp.float32)
        for h in range(num_heads):
            cq = wq[:, h * hs:(h + 1) * hs] * attn_scale
            ck = wk_[:, h * hs:(h + 1) * hs]
            cv = wv[:, h * hs:(h + 1) * hs]
            wqkv = wqkv.at[:C, h * Sp:h * Sp + hs].set(cq)
            wqkv = wqkv.at[:C, Hp + h * Sp:Hp + h * Sp + hs].set(ck)
            wqkv = wqkv.at[:C, 2 * Hp + h * Sp:2 * Hp + h * Sp + hs].set(cv)
            wo_p = wo_p.at[h * Sp:h * Sp + hs, :C].set(wo[h * hs:(h + 1) * hs, :])

        stack["ln1g"].append(pad_gamma(jnp.ones((1, C), jnp.float32)))
        stack["ln1b"].append(jnp.zeros((1, Cp), jnp.float32))
        stack["ln2g"].append(pad_gamma(jnp.ones((1, C), jnp.float32)))
        stack["ln2b"].append(jnp.zeros((1, Cp), jnp.float32))
        stack["wqkv"].append(wqkv.astype(jnp.bfloat16))
        stack["wo"].append(wo_p.astype(jnp.bfloat16))
        stack["bo"].append(jnp.zeros((1, Cp), jnp.float32).at[:, :C].set(bo))
        stack["w1"].append(jnp.zeros((Cp, Fp), jnp.float32).at[:C, :F].set(w1).astype(jnp.bfloat16))
        stack["b1"].append(jnp.zeros((1, Fp), jnp.float32).at[:, :F].set(b1))
        stack["w2"].append(jnp.zeros((Fp, Cp), jnp.float32).at[:F, :C].set(w2).astype(jnp.bfloat16))
        stack["b2"].append(jnp.zeros((1, Cp), jnp.float32).at[:, :C].set(b2))

    return {
        "tok_emb": tok,
        "pos_emb": pos,
        "lnf_g": pad_gamma(jnp.ones((1, C), jnp.float32)),
        "lnf_b": jnp.zeros((1, Cp), jnp.float32),
        "wh_p": wh_p,
        "bh_p": bh_p,
        "stack": {n: jnp.stack(v) for n, v in stack.items()},
    }


def bigram_forward(params, idx, targets, *, num_heads, num_embed, vocab_size):
    B, T = idx.shape
    C = num_embed
    head_slot = _round_up(C // num_heads, LANE)

    # Token / position embedding gathers stay in plain JAX (glue).
    x = params["tok_emb"][idx] + params["pos_emb"][:T][None, :, :]
    Cp = x.shape[-1]
    x2d = x.reshape(B * T, Cp).astype(jnp.float32)

    tile_rows = _pick_tile_rows(B, T)
    x2d = run_transformer_stack(x2d, params["stack"], num_heads=num_heads,
                                tile_rows=tile_rows, seq_len=T, true_c=C,
                                head_slot=head_slot)

    # TODO(synk): when targets is None the (cheap) per-row loss is still computed
    # and discarded; a loss-free variant would skip it.
    tgt = targets if targets is not None else jnp.zeros((B, T), jnp.int32)
    tgt2d = tgt.reshape(B * T, 1).astype(jnp.int32)
    logits_p, row_loss = run_head_and_loss(
        x2d, params["lnf_g"], params["lnf_b"], params["wh_p"], params["bh_p"],
        tgt2d, vocab=vocab_size, true_c=C, tile_rows=tile_rows)

    logits = logits_p[:, :vocab_size].reshape(B, T, vocab_size)
    if targets is None:
        return logits, None
    return logits, jnp.mean(row_loss)            # F.cross_entropy mean reduction


if __name__ == "__main__":
    vocab_size = 32
    block_size = 8       # context length (seq)
    num_embed = 32
    attention_num_heads = 4
    num_blocks = 2
    batch = 2
    # dropout = 0.1 -> identity at inference

    params = init_params(jax.random.PRNGKey(0), vocab_size, block_size,
                         num_embed, attention_num_heads, num_blocks)

    kidx, ktgt = jax.random.split(jax.random.PRNGKey(1))
    idx = jax.random.randint(kidx, (batch, block_size), 0, vocab_size, dtype=jnp.int32)
    targets = jax.random.randint(ktgt, (batch, block_size), 0, vocab_size, dtype=jnp.int32)

    fwd = jax.jit(functools.partial(bigram_forward, num_heads=attention_num_heads,
                                    num_embed=num_embed, vocab_size=vocab_size))
    logits, loss = fwd(params, idx, targets)
    jax.block_until_ready((logits, loss))

    assert logits.shape == (batch, block_size, vocab_size)
    assert loss.shape == ()
    assert bool(jnp.isfinite(loss))
    print("KERNEL_OK")
</pallas_src>

<mosaic_0001>
module attributes {stable_mosaic.version = 11 : i64} {
  func.func @head_loss_kernel(%arg0: i32, %arg1: memref<8x128xf32, #tpu.memory_space<vmem>>, %arg2: memref<1x128xf32, #tpu.memory_space<vmem>>, %arg3: memref<1x128xf32, #tpu.memory_space<vmem>>, %arg4: memref<128x128xbf16, #tpu.memory_space<vmem>>, %arg5: memref<1x128xf32, #tpu.memory_space<vmem>>, %arg6: memref<8x1xi32, #tpu.memory_space<vmem>>, %arg7: memref<8x128xf32, #tpu.memory_space<vmem>>, %arg8: memref<8x1xf32, #tpu.memory_space<vmem>>) attributes {dimension_semantics = [#tpu.dimension_semantics<parallel>], iteration_bounds = array<i64: 2>, scalar_prefetch = 0 : i64, scratch_operands = 0 : i64, tpu.core_type = #tpu.core_type<tc>, window_params = [{transform_indices = @transform_0, window_bounds = array<i64: 8, 128>}, {pipeline_mode = #tpu.pipeline_mode<synchronous>, transform_indices = @transform_1, window_bounds = array<i64: 1, 128>}, {pipeline_mode = #tpu.pipeline_mode<synchronous>, transform_indices = @transform_2, window_bounds = array<i64: 1, 128>}, {pipeline_mode = #tpu.pipeline_mode<synchronous>, transform_indices = @transform_3, window_bounds = array<i64: 128, 128>}, {pipeline_mode = #tpu.pipeline_mode<synchronous>, transform_indices = @transform_4, window_bounds = array<i64: 1, 128>}, {transform_indices = @transform_5, window_bounds = array<i64: 8, 1>}, {transform_indices = @transform_6, window_bounds = array<i64: 8, 128>}, {transform_indices = @transform_7, window_bounds = array<i64: 8, 1>}]} {
    %c0 = arith.constant 0 : index
    %c0_0 = arith.constant 0 : index
    %0 = vector.load %arg1[%c0, %c0_0] : memref<8x128xf32, #tpu.memory_space<vmem>>, vector<8x128xf32>
    %c0_1 = arith.constant 0 : index
    %c0_2 = arith.constant 0 : index
    %1 = vector.load %arg2[%c0_1, %c0_2] : memref<1x128xf32, #tpu.memory_space<vmem>>, vector<1x128xf32>
    %c0_3 = arith.constant 0 : index
    %c0_4 = arith.constant 0 : index
    %2 = vector.load %arg3[%c0_3, %c0_4] : memref<1x128xf32, #tpu.memory_space<vmem>>, vector<1x128xf32>
    %cst = arith.constant dense<0.000000e+00> : vector<8xf32>
    %3 = vector.multi_reduction <add>, %0, %cst [1] : vector<8x128xf32> to vector<8xf32>
    %4 = vector.shape_cast %3 : vector<8xf32> to vector<8x1xf32>
    %cst_5 = arith.constant 3.125000e-02 : f32
    %5 = vector.broadcast %cst_5 : f32 to vector<8x1xf32>
    %6 = arith.mulf %4, %5 : vector<8x1xf32>
    %7 = arith.mulf %0, %0 : vector<8x128xf32>
    %cst_6 = arith.constant dense<0.000000e+00> : vector<8xf32>
    %8 = vector.multi_reduction <add>, %7, %cst_6 [1] : vector<8x128xf32> to vector<8xf32>
    %9 = vector.shape_cast %8 : vector<8xf32> to vector<8x1xf32>
    %cst_7 = arith.constant 3.125000e-02 : f32
    %10 = vector.broadcast %cst_7 : f32 to vector<8x1xf32>
    %11 = arith.mulf %9, %10 : vector<8x1xf32>
    %12 = arith.mulf %6, %6 : vector<8x1xf32>
    %13 = arith.subf %11, %12 : vector<8x1xf32>
    %14 = vector.broadcast %6 : vector<8x1xf32> to vector<8x128xf32>
    %15 = arith.subf %0, %14 : vector<8x128xf32>
    %cst_8 = arith.constant 9.99999974E-6 : f32
    %16 = vector.broadcast %cst_8 : f32 to vector<8x1xf32>
    %17 = arith.addf %13, %16 : vector<8x1xf32>
    %18 = math.rsqrt %17 : vector<8x1xf32>
    %19 = vector.broadcast %18 : vector<8x1xf32> to vector<8x128xf32>
    %20 = arith.mulf %15, %19 : vector<8x128xf32>
    %21 = vector.broadcast %1 : vector<1x128xf32> to vector<8x128xf32>
    %22 = arith.mulf %20, %21 : vector<8x128xf32>
    %23 = vector.broadcast %2 : vector<1x128xf32> to vector<8x128xf32>
    %24 = arith.addf %22, %23 : vector<8x128xf32>
    %25 = arith.truncf %24 : vector<8x128xf32> to vector<8x128xbf16>
    %c0_9 = arith.constant 0 : index
    %c0_10 = arith.constant 0 : index
    %26 = vector.load %arg4[%c0_9, %c0_10] : memref<128x128xbf16, #tpu.memory_space<vmem>>, vector<128x128xbf16>
    %cst_11 = arith.constant dense<0.000000e+00> : vector<8x128xf32>
    %27 = tpu.matmul %25, %26, %cst_11 {dimension_numbers = #tpu.dot_dimension_numbers<[1], [0], [0], [1], [0, 0, 1, 1], [], []>} : vector<8x128xbf16>, vector<128x128xbf16>, vector<8x128xf32> -> vector<8x128xf32>
    %c0_12 = arith.constant 0 : index
    %c0_13 = arith.constant 0 : index
    %28 = vector.load %arg5[%c0_12, %c0_13] : memref<1x128xf32, #tpu.memory_space<vmem>>, vector<1x128xf32>
    %29 = vector.broadcast %28 : vector<1x128xf32> to vector<8x128xf32>
    %30 = arith.addf %27, %29 : vector<8x128xf32>
    %c0_14 = arith.constant 0 : index
    %c0_15 = arith.constant 0 : index
    %31 = vector.load %arg7[%c0_14, %c0_15] : memref<8x128xf32, #tpu.memory_space<vmem>>, vector<8x128xf32>
    tpu.vector_store %arg7[%c0_14, %c0_15], %30 {strides = array<i32>} : memref<8x128xf32, #tpu.memory_space<vmem>>, vector<8x128xf32>,
    %32 = tpu.iota {dimensions = array<i32: 1>} : vector<8x128xi32>
    %c32_i32 = arith.constant 32 : i32
    %33 = vector.broadcast %c32_i32 : i32 to vector<8x128xi32>
    %34 = arith.cmpi slt, %32, %33 : vector<8x128xi32>
    %cst_16 = arith.constant -1.000000e+30 : f32
    %35 = vector.broadcast %cst_16 : f32 to vector<8x128xf32>
    %36 = arith.select %34, %30, %35 : vector<8x128xi1>, vector<8x128xf32>
    %cst_17 = arith.constant dense<0xFF800000> : vector<8xf32>
    %37 = vector.multi_reduction <maximumf>, %36, %cst_17 [1] : vector<8x128xf32> to vector<8xf32>
    %38 = vector.shape_cast %37 : vector<8xf32> to vector<8x1xf32>
    %39 = vector.broadcast %38 : vector<8x1xf32> to vector<8x128xf32>
    %40 = arith.subf %36, %39 : vector<8x128xf32>
    %41 = math.exp %40 : vector<8x128xf32>
    %cst_18 = arith.constant dense<0.000000e+00> : vector<8xf32>
    %42 = vector.multi_reduction <add>, %41, %cst_18 [1] : vector<8x128xf32> to vector<8xf32>
    %43 = vector.shape_cast %42 : vector<8xf32> to vector<8x1xf32>
    %44 = math.log %43 : vector<8x1xf32>
    %45 = arith.addf %38, %44 : vector<8x1xf32>
    %c0_19 = arith.constant 0 : index
    %c0_20 = arith.constant 0 : index
    %46 = vector.load %arg6[%c0_19, %c0_20] : memref<8x1xi32, #tpu.memory_space<vmem>>, vector<8x1xi32>
    %47 = vector.broadcast %46 : vector<8x1xi32> to vector<8x128xi32>
    %48 = arith.cmpi eq, %32, %47 : vector<8x128xi32>
    %cst_21 = arith.constant 0.000000e+00 : f32
    %49 = vector.broadcast %cst_21 : f32 to vector<8x128xf32>
    %50 = arith.select %48, %30, %49 : vector<8x128xi1>, vector<8x128xf32>
    %cst_22 = arith.constant dense<0.000000e+00> : vector<8xf32>
    %51 = vector.multi_reduction <add>, %50, %cst_22 [1] : vector<8x128xf32> to vector<8xf32>
    %52 = vector.shape_cast %51 : vector<8xf32> to vector<8x1xf32>
    %53 = arith.subf %45, %52 : vector<8x1xf32>
    %c0_23 = arith.constant 0 : index
    %c0_24 = arith.constant 0 : index
    %54 = vector.load %arg8[%c0_23, %c0_24] : memref<8x1xf32, #tpu.memory_space<vmem>>, vector<8x1xf32>
    tpu.vector_store %arg8[%c0_23, %c0_24], %53 {strides = array<i32>} : memref<8x1xf32, #tpu.memory_space<vmem>>, vector<8x1xf32>,
    return
  }
  func.func @transform_0(%arg0: i32) -> (i32, i32) {
    %c0_i32 = arith.constant 0 : i32
    %c0_i32_0 = arith.constant 0 : i32
    return %arg0, %c0_i32 : i32, i32
  }
  func.func @transform_1(%arg0: i32) -> (i32, i32) {
    %c0_i32 = arith.constant 0 : i32
    %c0_i32_0 = arith.constant 0 : i32
    %c0_i32_1 = arith.constant 0 : i32
    return %c0_i32, %c0_i32_0 : i32, i32
  }
  func.func @transform_2(%arg0: i32) -> (i32, i32) {
    %c0_i32 = arith.constant 0 : i32
    %c0_i32_0 = arith.constant 0 : i32
    %c0_i32_1 = arith.constant 0 : i32
    return %c0_i32, %c0_i32_0 : i32, i32
  }
  func.func @transform_3(%arg0: i32) -> (i32, i32) {
    %c0_i32 = arith.constant 0 : i32
    %c0_i32_0 = arith.constant 0 : i32
    %c0_i32_1 = arith.constant 0 : i32
    return %c0_i32, %c0_i32_0 : i32, i32
  }
  func.func @transform_4(%arg0: i32) -> (i32, i32) {
    %c0_i32 = arith.constant 0 : i32
    %c0_i32_0 = arith.constant 0 : i32
    %c0_i32_1 = arith.constant 0 : i32
    return %c0_i32, %c0_i32_0 : i32, i32
  }
  func.func @transform_5(%arg0: i32) -> (i32, i32) {
    %c0_i32 = arith.constant 0 : i32
    %c0_i32_0 = arith.constant 0 : i32
    return %arg0, %c0_i32 : i32, i32
  }
  func.func @transform_6(%arg0: i32) -> (i32, i32) {
    %c0_i32 = arith.constant 0 : i32
    %c0_i32_0 = arith.constant 0 : i32
    return %arg0, %c0_i32 : i32, i32
  }
  func.func @transform_7(%arg0: i32) -> (i32, i32) {
    %c0_i32 = arith.constant 0 : i32
    %c0_i32_0 = arith.constant 0 : i32
    return %arg0, %c0_i32 : i32, i32
  }
}

module attributes {stable_mosaic.version = 11 : i64} {
  func.func @transformer_stack_kernel(%arg0: i32, %arg1: memref<8x128xf32, #tpu.memory_space<vmem>>, %arg2: memref<2x1x128xf32, #tpu.memory_space<vmem>>, %arg3: memref<2x1x128xf32, #tpu.memory_space<vmem>>, %arg4: memref<2x128x1536xbf16, #tpu.memory_space<vmem>>, %arg5: memref<2x512x128xbf16, #tpu.memory_space<vmem>>, %arg6: memref<2x1x128xf32, #tpu.memory_space<vmem>>, %arg7: memref<2x1x128xf32, #tpu.memory_space<vmem>>, %arg8: memref<2x1x128xf32, #tpu.memory_space<vmem>>, %arg9: memref<2x128x128xbf16, #tpu.memory_space<vmem>>, %arg10: memref<2x1x128xf32, #tpu.memory_space<vmem>>, %arg11: memref<2x128x128xbf16, #tpu.memory_space<vmem>>, %arg12: memref<2x1x128xf32, #tpu.memory_space<vmem>>, %arg13: memref<8x128xf32, #tpu.memory_space<vmem>>) attributes {dimension_semantics = [#tpu.dimension_semantics<parallel>], iteration_bounds = array<i64: 2>, scalar_prefetch = 0 : i64, scratch_operands = 0 : i64, tpu.core_type = #tpu.core_type<tc>, window_params = [{transform_indices = @transform_0, window_bounds = array<i64: 8, 128>}, {pipeline_mode = #tpu.pipeline_mode<synchronous>, transform_indices = @transform_1, window_bounds = array<i64: 2, 1, 128>}, {pipeline_mode = #tpu.pipeline_mode<synchronous>, transform_indices = @transform_2, window_bounds = array<i64: 2, 1, 128>}, {pipeline_mode = #tpu.pipeline_mode<synchronous>, transform_indices = @transform_3, window_bounds = array<i64: 2, 128, 1536>}, {pipeline_mode = #tpu.pipeline_mode<synchronous>, transform_indices = @transform_4, window_bounds = array<i64: 2, 512, 128>}, {pipeline_mode = #tpu.pipeline_mode<synchronous>, transform_indices = @transform_5, window_bounds = array<i64: 2, 1, 128>}, {pipeline_mode = #tpu.pipeline_mode<synchronous>, transform_indices = @transform_6, window_bounds = array<i64: 2, 1, 128>}, {pipeline_mode = #tpu.pipeline_mode<synchronous>, transform_indices = @transform_7, window_bounds = array<i64: 2, 1, 128>}, {pipeline_mode = #tpu.pipeline_mode<synchronous>, transform_indices = @transform_8, window_bounds = array<i64: 2, 128, 128>}, {pipeline_mode = #tpu.pipeline_mode<synchronous>, transform_indices = @transform_9, window_bounds = array<i64: 2, 1, 128>}, {pipeline_mode = #tpu.pipeline_mode<synchronous>, transform_indices = @transform_10, window_bounds = array<i64: 2, 128, 128>}, {pipeline_mode = #tpu.pipeline_mode<synchronous>, transform_indices = @transform_11, window_bounds = array<i64: 2, 1, 128>}, {transform_indices = @transform_12, window_bounds = array<i64: 8, 128>}]} {
    %c0 = arith.constant 0 : index
    %c0_0 = arith.constant 0 : index
    %0 = vector.load %arg1[%c0, %c0_0] : memref<8x128xf32, #tpu.memory_space<vmem>>, vector<8x128xf32>
    %1 = tpu.iota {dimensions = array<i32: 1>} : vector<1x8x8xi32>
    %2 = tpu.iota {dimensions = array<i32: 2>} : vector<1x8x8xi32>
    %3 = arith.cmpi sle, %2, %1 : vector<1x8x8xi32>
    %cst = arith.constant 0.000000e+00 : f32
    %cst_1 = arith.constant -1.000000e+30 : f32
    %4 = vector.broadcast %cst : f32 to vector<1x8x8xf32>
    %5 = vector.broadcast %cst_1 : f32 to vector<1x8x8xf32>
    %6 = arith.select %3, %4, %5 : vector<1x8x8xi1>, vector<1x8x8xf32>
    %c0_2 = arith.constant 0 : index
    %c0_3 = arith.constant 0 : index
    %c0_4 = arith.constant 0 : index
    %7 = vector.load %arg2[%c0_2, %c0_3, %c0_4] : memref<2x1x128xf32, #tpu.memory_space<vmem>>, vector<1x1x128xf32>
    %8 = vector.shape_cast %7 : vector<1x1x128xf32> to vector<1x128xf32>
    %c0_5 = arith.constant 0 : index
    %c0_6 = arith.constant 0 : index
    %c0_7 = arith.constant 0 : index
    %9 = vector.load %arg3[%c0_5, %c0_6, %c0_7] : memref<2x1x128xf32, #tpu.memory_space<vmem>>, vector<1x1x128xf32>
    %10 = vector.shape_cast %9 : vector<1x1x128xf32> to vector<1x128xf32>
    %cst_8 = arith.constant dense<0.000000e+00> : vector<8xf32>
    %11 = vector.multi_reduction <add>, %0, %cst_8 [1] : vector<8x128xf32> to vector<8xf32>
    %12 = vector.shape_cast %11 : vector<8xf32> to vector<8x1xf32>
    %cst_9 = arith.constant 3.125000e-02 : f32
    %13 = vector.broadcast %cst_9 : f32 to vector<8x1xf32>
    %14 = arith.mulf %12, %13 : vector<8x1xf32>
    %15 = arith.mulf %0, %0 : vector<8x128xf32>
    %cst_10 = arith.constant dense<0.000000e+00> : vector<8xf32>
    %16 = vector.multi_reduction <add>, %15, %cst_10 [1] : vector<8x128xf32> to vector<8xf32>
    %17 = vector.shape_cast %16 : vector<8xf32> to vector<8x1xf32>
    %cst_11 = arith.constant 3.125000e-02 : f32
    %18 = vector.broadcast %cst_11 : f32 to vector<8x1xf32>
    %19 = arith.mulf %17, %18 : vector<8x1xf32>
    %20 = arith.mulf %14, %14 : vector<8x1xf32>
    %21 = arith.subf %19, %20 : vector<8x1xf32>
    %22 = vector.broadcast %14 : vector<8x1xf32> to vector<8x128xf32>
    %23 = arith.subf %0, %22 : vector<8x128xf32>
    %cst_12 = arith.constant 9.99999974E-6 : f32
    %24 = vector.broadcast %cst_12 : f32 to vector<8x1xf32>
    %25 = arith.addf %21, %24 : vector<8x1xf32>
    %26 = math.rsqrt %25 : vector<8x1xf32>
    %27 = vector.broadcast %26 : vector<8x1xf32> to vector<8x128xf32>
    %28 = arith.mulf %23, %27 : vector<8x128xf32>
    %29 = vector.broadcast %8 : vector<1x128xf32> to vector<8x128xf32>
    %30 = arith.mulf %28, %29 : vector<8x128xf32>
    %31 = vector.broadcast %10 : vector<1x128xf32> to vector<8x128xf32>
    %32 = arith.addf %30, %31 : vector<8x128xf32>
    %33 = arith.truncf %32 : vector<8x128xf32> to vector<8x128xbf16>
    %c0_13 = arith.constant 0 : index
    %c0_14 = arith.constant 0 : index
    %c0_15 = arith.constant 0 : index
    %34 = vector.load %arg4[%c0_13, %c0_14, %c0_15] : memref<2x128x1536xbf16, #tpu.memory_space<vmem>>, vector<1x128x1536xbf16>
    %35 = vector.shape_cast %34 : vector<1x128x1536xbf16> to vector<128x1536xbf16>
    %cst_16 = arith.constant dense<0.000000e+00> : vector<8x1536xf32>
    %36 = tpu.matmul %33, %35, %cst_16 {dimension_numbers = #tpu.dot_dimension_numbers<[1], [0], [0], [1], [0, 0, 1, 1], [], []>} : vector<8x128xbf16>, vector<128x1536xbf16>, vector<8x1536xf32> -> vector<8x1536xf32>
    %37 = vector.extract_strided_slice %36 {offsets = [0, 0], sizes = [8, 512], strides = [1, 1]} : vector<8x1536xf32> to vector<8x512xf32>
    %38 = vector.shape_cast %37 : vector<8x512xf32> to vector<1x8x512xf32>
    %39 = vector.extract_strided_slice %36 {offsets = [0, 512], sizes = [8, 512], strides = [1, 1]} : vector<8x1536xf32> to vector<8x512xf32>
    %40 = vector.shape_cast %39 : vector<8x512xf32> to vector<1x8x512xf32>
    %41 = vector.extract_strided_slice %36 {offsets = [0, 1024], sizes = [8, 512], strides = [1, 1]} : vector<8x1536xf32> to vector<8x512xf32>
    %42 = vector.shape_cast %41 : vector<8x512xf32> to vector<1x8x512xf32>
    %43 = vector.extract_strided_slice %38 {offsets = [0, 0, 0], sizes = [1, 8, 128], strides = [1, 1, 1]} : vector<1x8x512xf32> to vector<1x8x128xf32>
    %44 = arith.truncf %43 : vector<1x8x128xf32> to vector<1x8x128xbf16>
    %45 = vector.extract_strided_slice %40 {offsets = [0, 0, 0], sizes = [1, 8, 128], strides = [1, 1, 1]} : vector<1x8x512xf32> to vector<1x8x128xf32>
    %46 = arith.truncf %45 : vector<1x8x128xf32> to vector<1x8x128xbf16>
    %47 = vector.extract_strided_slice %42 {offsets = [0, 0, 0], sizes = [1, 8, 128], strides = [1, 1, 1]} : vector<1x8x512xf32> to vector<1x8x128xf32>
    %48 = arith.truncf %47 : vector<1x8x128xf32> to vector<1x8x128xbf16>
    "tpu.trace_start"() <{level = 10 : i32, message = "bqd,bkd->bqk"}> : () -> ()
    %cst_17 = arith.constant dense<0.000000e+00> : vector<1x8x8xf32>
    %49 = tpu.matmul %44, %46, %cst_17 {dimension_numbers = #tpu.dot_dimension_numbers<[2], [2], [1], [1], [0, 0, 0, 1, 1, 1], [0], [0]>} : vector<1x8x128xbf16>, vector<1x8x128xbf16>, vector<1x8x8xf32> -> vector<1x8x8xf32>
    "tpu.trace_stop"() : () -> ()
    %50 = arith.addf %49, %6 : vector<1x8x8xf32>
    %cst_18 = arith.constant dense<0xFF800000> : vector<1x8xf32>
    %51 = vector.multi_reduction <maximumf>, %50, %cst_18 [2] : vector<1x8x8xf32> to vector<1x8xf32>
    %52 = vector.shape_cast %51 : vector<1x8xf32> to vector<1x8x1xf32>
    %53 = vector.broadcast %52 : vector<1x8x1xf32> to vector<1x8x8xf32>
    %54 = arith.subf %50, %53 : vector<1x8x8xf32>
    %55 = math.exp %54 : vector<1x8x8xf32>
    %cst_19 = arith.constant dense<0.000000e+00> : vector<1x8xf32>
    %56 = vector.multi_reduction <add>, %55, %cst_19 [2] : vector<1x8x8xf32> to vector<1x8xf32>
    %57 = vector.shape_cast %56 : vector<1x8xf32> to vector<1x8x1xf32>
    %58 = vector.broadcast %57 : vector<1x8x1xf32> to vector<1x8x8xf32>
    %59 = arith.divf %55, %58 : vector<1x8x8xf32>
    %60 = arith.truncf %59 : vector<1x8x8xf32> to vector<1x8x8xbf16>
    "tpu.trace_start"() <{level = 10 : i32, message = "bqk,bkd->bqd"}> : () -> ()
    %cst_20 = arith.constant dense<0.000000e+00> : vector<1x8x128xf32>
    %61 = tpu.matmul %60, %48, %cst_20 {dimension_numbers = #tpu.dot_dimension_numbers<[2], [1], [1], [2], [0, 0, 0, 1, 1, 2], [0], [0]>} : vector<1x8x8xbf16>, vector<1x8x128xbf16>, vector<1x8x128xf32> -> vector<1x8x128xf32>
    "tpu.trace_stop"() : () -> ()
    %62 = vector.shape_cast %61 : vector<1x8x128xf32> to vector<8x128xf32>
    %63 = vector.extract_strided_slice %38 {offsets = [0, 0, 128], sizes = [1, 8, 128], strides = [1, 1, 1]} : vector<1x8x512xf32> to vector<1x8x128xf32>
    %64 = arith.truncf %63 : vector<1x8x128xf32> to vector<1x8x128xbf16>
    %65 = vector.extract_strided_slice %40 {offsets = [0, 0, 128], sizes = [1, 8, 128], strides = [1, 1, 1]} : vector<1x8x512xf32> to vector<1x8x128xf32>
    %66 = arith.truncf %65 : vector<1x8x128xf32> to vector<1x8x128xbf16>
    %67 = vector.extract_strided_slice %42 {offsets = [0, 0, 128], sizes = [1, 8, 128], strides = [1, 1, 1]} : vector<1x8x512xf32> to vector<1x8x128xf32>
    %68 = arith.truncf %67 : vector<1x8x128xf32> to vector<1x8x128xbf16>
    "tpu.trace_start"() <{level = 10 : i32, message = "bqd,bkd->bqk"}> : () -> ()
    %cst_21 = arith.constant dense<0.000000e+00> : vector<1x8x8xf32>
    %69 = tpu.matmul %64, %66, %cst_21 {dimension_numbers = #tpu.dot_dimension_numbers<[2], [2], [1], [1], [0, 0, 0, 1, 1, 1], [0], [0]>} : vector<1x8x128xbf16>, vector<1x8x128xbf16>, vector<1x8x8xf32> -> vector<1x8x8xf32>
    "tpu.trace_stop"() : () -> ()
    %70 = arith.addf %69, %6 : vector<1x8x8xf32>
    %cst_22 = arith.constant dense<0xFF800000> : vector<1x8xf32>
    %71 = vector.multi_reduction <maximumf>, %70, %cst_22 [2] : vector<1x8x8xf32> to vector<1x8xf32>
    %72 = vector.shape_cast %71 : vector<1x8xf32> to vector<1x8x1xf32>
    %73 = vector.broadcast %72 : vector<1x8x1xf32> to vector<1x8x8xf32>
    %74 = arith.subf %70, %73 : vector<1x8x8xf32>
    %75 = math.exp %74 : vector<1x8x8xf32>
    %cst_23 = arith.constant dense<0.000000e+00> : vector<1x8xf32>
    %76 = vector.multi_reduction <add>, %75, %cst_23 [2] : vector<1x8x8xf32> to vector<1x8xf32>
    %77 = vector.shape_cast %76 : vector<1x8xf32> to vector<1x8x1xf32>
    %78 = vector.broadcast %77 : vector<1x8x1xf32> to vector<1x8x8xf32>
    %79 = arith.divf %75, %78 : vector<1x8x8xf32>
    %80 = arith.truncf %79 : vector<1x8x8xf32> to vector<1x8x8xbf16>
    "tpu.trace_start"() <{level = 10 : i32, message = "bqk,bkd->bqd"}> : () -> ()
    %cst_24 = arith.constant dense<0.000000e+00> : vector<1x8x128xf32>
    %81 = tpu.matmul %80, %68, %cst_24 {dimension_numbers = #tpu.dot_dimension_numbers<[2], [1], [1], [2], [0, 0, 0, 1, 1, 2], [0], [0]>} : vector<1x8x8xbf16>, vector<1x8x128xbf16>, vector<1x8x128xf32> -> vector<1x8x128xf32>
    "tpu.trace_stop"() : () -> ()
    %82 = vector.shape_cast %81 : vector<1x8x128xf32> to vector<8x128xf32>
    %83 = vector.extract_strided_slice %38 {offsets = [0, 0, 256], sizes = [1, 8, 128], strides = [1, 1, 1]} : vector<1x8x512xf32> to vector<1x8x128xf32>
    %84 = arith.truncf %83 : vector<1x8x128xf32> to vector<1x8x128xbf16>
    %85 = vector.extract_strided_slice %40 {offsets = [0, 0, 256], sizes = [1, 8, 128], strides = [1, 1, 1]} : vector<1x8x512xf32> to vector<1x8x128xf32>
    %86 = arith.truncf %85 : vector<1x8x128xf32> to vector<1x8x128xbf16>
    %87 = vector.extract_strided_slice %42 {offsets = [0, 0, 256], sizes = [1, 8, 128], strides = [1, 1, 1]} : vector<1x8x512xf32> to vector<1x8x128xf32>
    %88 = arith.truncf %87 : vector<1x8x128xf32> to vector<1x8x128xbf16>
    "tpu.trace_start"() <{level = 10 : i32, message = "bqd,bkd->bqk"}> : () -> ()
    %cst_25 = arith.constant dense<0.000000e+00> : vector<1x8x8xf32>
    %89 = tpu.matmul %84, %86, %cst_25 {dimension_numbers = #tpu.dot_dimension_numbers<[2], [2], [1], [1], [0, 0, 0, 1, 1, 1], [0], [0]>} : vector<1x8x128xbf16>, vector<1x8x128xbf16>, vector<1x8x8xf32> -> vector<1x8x8xf32>
    "tpu.trace_stop"() : () -> ()
    %90 = arith.addf %89, %6 : vector<1x8x8xf32>
    %cst_26 = arith.constant dense<0xFF800000> : vector<1x8xf32>
    %91 = vector.multi_reduction <maximumf>, %90, %cst_26 [2] : vector<1x8x8xf32> to vector<1x8xf32>
    %92 = vector.shape_cast %91 : vector<1x8xf32> to vector<1x8x1xf32>
    %93 = vector.broadcast %92 : vector<1x8x1xf32> to vector<1x8x8xf32>
    %94 = arith.subf %90, %93 : vector<1x8x8xf32>
    %95 = math.exp %94 : vector<1x8x8xf32>
    %cst_27 = arith.constant dense<0.000000e+00> : vector<1x8xf32>
    %96 = vector.multi_reduction <add>, %95, %cst_27 [2] : vector<1x8x8xf32> to vector<1x8xf32>
    %97 = vector.shape_cast %96 : vector<1x8xf32> to vector<1x8x1xf32>
    %98 = vector.broadcast %97 : vector<1x8x1xf32> to vector<1x8x8xf32>
    %99 = arith.divf %95, %98 : vector<1x8x8xf32>
    %100 = arith.truncf %99 : vector<1x8x8xf32> to vector<1x8x8xbf16>
    "tpu.trace_start"() <{level = 10 : i32, message = "bqk,bkd->bqd"}> : () -> ()
    %cst_28 = arith.constant dense<0.000000e+00> : vector<1x8x128xf32>
    %101 = tpu.matmul %100, %88, %cst_28 {dimension_numbers = #tpu.dot_dimension_numbers<[2], [1], [1], [2], [0, 0, 0, 1, 1, 2], [0], [0]>} : vector<1x8x8xbf16>, vector<1x8x128xbf16>, vector<1x8x128xf32> -> vector<1x8x128xf32>
    "tpu.trace_stop"() : () -> ()
    %102 = vector.shape_cast %101 : vector<1x8x128xf32> to vector<8x128xf32>
    %103 = vector.extract_strided_slice %38 {offsets = [0, 0, 384], sizes = [1, 8, 128], strides = [1, 1, 1]} : vector<1x8x512xf32> to vector<1x8x128xf32>
    %104 = arith.truncf %103 : vector<1x8x128xf32> to vector<1x8x128xbf16>
    %105 = vector.extract_strided_slice %40 {offsets = [0, 0, 384], sizes = [1, 8, 128], strides = [1, 1, 1]} : vector<1x8x512xf32> to vector<1x8x128xf32>
    %106 = arith.truncf %105 : vector<1x8x128xf32> to vector<1x8x128xbf16>
    %107 = vector.extract_strided_slice %42 {offsets = [0, 0, 384], sizes = [1, 8, 128], strides = [1, 1, 1]} : vector<1x8x512xf32> to vector<1x8x128xf32>
    %108 = arith.truncf %107 : vector<1x8x128xf32> to vector<1x8x128xbf16>
    "tpu.trace_start"() <{level = 10 : i32, message = "bqd,bkd->bqk"}> : () -> ()
    %cst_29 = arith.constant dense<0.000000e+00> : vector<1x8x8xf32>
    %109 = tpu.matmul %104, %106, %cst_29 {dimension_numbers = #tpu.dot_dimension_numbers<[2], [2], [1], [1], [0, 0, 0, 1, 1, 1], [0], [0]>} : vector<1x8x128xbf16>, vector<1x8x128xbf16>, vector<1x8x8xf32> -> vector<1x8x8xf32>
    "tpu.trace_stop"() : () -> ()
    %110 = arith.addf %109, %6 : vector<1x8x8xf32>
    %cst_30 = arith.constant dense<0xFF800000> : vector<1x8xf32>
    %111 = vector.multi_reduction <maximumf>, %110, %cst_30 [2] : vector<1x8x8xf32> to vector<1x8xf32>
    %112 = vector.shape_cast %111 : vector<1x8xf32> to vector<1x8x1xf32>
    %113 = vector.broadcast %112 : vector<1x8x1xf32> to vector<1x8x8xf32>
    %114 = arith.subf %110, %113 : vector<1x8x8xf32>
    %115 = math.exp %114 : vector<1x8x8xf32>
    %cst_31 = arith.constant dense<0.000000e+00> : vector<1x8xf32>
    %116 = vector.multi_reduction <add>, %115, %cst_31 [2] : vector<1x8x8xf32> to vector<1x8xf32>
    %117 = vector.shape_cast %116 : vector<1x8xf32> to vector<1x8x1xf32>
    %118 = vector.broadcast %117 : vector<1x8x1xf32> to vector<1x8x8xf32>
    %119 = arith.divf %115, %118 : vector<1x8x8xf32>
    %120 = arith.truncf %119 : vector<1x8x8xf32> to vector<1x8x8xbf16>
    "tpu.trace_start"() <{level = 10 : i32, message = "bqk,bkd->bqd"}> : () -> ()
    %cst_32 = arith.constant dense<0.000000e+00> : vector<1x8x128xf32>
    %121 = tpu.matmul %120, %108, %cst_32 {dimension_numbers = #tpu.dot_dimension_numbers<[2], [1], [1], [2], [0, 0, 0, 1, 1, 2], [0], [0]>} : vector<1x8x8xbf16>, vector<1x8x128xbf16>, vector<1x8x128xf32> -> vector<1x8x128xf32>
    "tpu.trace_stop"() : () -> ()
    %122 = vector.shape_cast %121 : vector<1x8x128xf32> to vector<8x128xf32>
    %123 = tpu.concatenate %62, %82, %102, %122 in 1 : vector<8x128xf32>, vector<8x128xf32>, vector<8x128xf32>, vector<8x128xf32> -> vector<8x512xf32>
    %124 = arith.truncf %123 : vector<8x512xf32> to vector<8x512xbf16>
    %c0_33 = arith.constant 0 : index
    %c0_34 = arith.constant 0 : index
    %c0_35 = arith.constant 0 : index
    %125 = vector.load %arg5[%c0_33, %c0_34, %c0_35] : memref<2x512x128xbf16, #tpu.memory_space<vmem>>, vector<1x512x128xbf16>
    %126 = vector.shape_cast %125 : vector<1x512x128xbf16> to vector<512x128xbf16>
    %cst_36 = arith.constant dense<0.000000e+00> : vector<8x128xf32>
    %127 = tpu.matmul %124, %126, %cst_36 {dimension_numbers = #tpu.dot_dimension_numbers<[1], [0], [0], [1], [0, 0, 1, 1], [], []>} : vector<8x512xbf16>, vector<512x128xbf16>, vector<8x128xf32> -> vector<8x128xf32>
    %c0_37 = arith.constant 0 : index
    %c0_38 = arith.constant 0 : index
    %c0_39 = arith.constant 0 : index
    %128 = vector.load %arg6[%c0_37, %c0_38, %c0_39] : memref<2x1x128xf32, #tpu.memory_space<vmem>>, vector<1x1x128xf32>
    %129 = vector.shape_cast %128 : vector<1x1x128xf32> to vector<1x128xf32>
    %130 = vector.broadcast %129 : vector<1x128xf32> to vector<8x128xf32>
    %131 = arith.addf %127, %130 : vector<8x128xf32>
    %132 = arith.addf %0, %131 : vector<8x128xf32>
    %c0_40 = arith.constant 0 : index
    %c0_41 = arith.constant 0 : index
    %c0_42 = arith.constant 0 : index
    %133 = vector.load %arg7[%c0_40, %c0_41, %c0_42] : memref<2x1x128xf32, #tpu.memory_space<vmem>>, vector<1x1x128xf32>
    %134 = vector.shape_cast %133 : vector<1x1x128xf32> to vector<1x128xf32>
    %c0_43 = arith.constant 0 : index
    %c0_44 = arith.constant 0 : index
    %c0_45 = arith.constant 0 : index
    %135 = vector.load %arg8[%c0_43, %c0_44, %c0_45] : memref<2x1x128xf32, #tpu.memory_space<vmem>>, vector<1x1x128xf32>
    %136 = vector.shape_cast %135 : vector<1x1x128xf32> to vector<1x128xf32>
    %cst_46 = arith.constant dense<0.000000e+00> : vector<8xf32>
    %137 = vector.multi_reduction <add>, %132, %cst_46 [1] : vector<8x128xf32> to vector<8xf32>
    %138 = vector.shape_cast %137 : vector<8xf32> to vector<8x1xf32>
    %cst_47 = arith.constant 3.125000e-02 : f32
    %139 = vector.broadcast %cst_47 : f32 to vector<8x1xf32>
    %140 = arith.mulf %138, %139 : vector<8x1xf32>
    %141 = arith.mulf %132, %132 : vector<8x128xf32>
    %cst_48 = arith.constant dense<0.000000e+00> : vector<8xf32>
    %142 = vector.multi_reduction <add>, %141, %cst_48 [1] : vector<8x128xf32> to vector<8xf32>
    %143 = vector.shape_cast %142 : vector<8xf32> to vector<8x1xf32>
    %cst_49 = arith.constant 3.125000e-02 : f32
    %144 = vector.broadcast %cst_49 : f32 to vector<8x1xf32>
    %145 = arith.mulf %143, %144 : vector<8x1xf32>
    %146 = arith.mulf %140, %140 : vector<8x1xf32>
    %147 = arith.subf %145, %146 : vector<8x1xf32>
    %148 = vector.broadcast %140 : vector<8x1xf32> to vector<8x128xf32>
    %149 = arith.subf %132, %148 : vector<8x128xf32>
    %cst_50 = arith.constant 9.99999974E-6 : f32
    %150 = vector.broadcast %cst_50 : f32 to vector<8x1xf32>
    %151 = arith.addf %147, %150 : vector<8x1xf32>
    %152 = math.rsqrt %151 : vector<8x1xf32>
    %153 = vector.broadcast %152 : vector<8x1xf32> to vector<8x128xf32>
    %154 = arith.mulf %149, %153 : vector<8x128xf32>
    %155 = vector.broadcast %134 : vector<1x128xf32> to vector<8x128xf32>
    %156 = arith.mulf %154, %155 : vector<8x128xf32>
    %157 = vector.broadcast %136 : vector<1x128xf32> to vector<8x128xf32>
    %158 = arith.addf %156, %157 : vector<8x128xf32>
    %159 = arith.truncf %158 : vector<8x128xf32> to vector<8x128xbf16>
    %c0_51 = arith.constant 0 : index
    %c0_52 = arith.constant 0 : index
    %c0_53 = arith.constant 0 : index
    %160 = vector.load %arg9[%c0_51, %c0_52, %c0_53] : memref<2x128x128xbf16, #tpu.memory_space<vmem>>, vector<1x128x128xbf16>
    %161 = vector.shape_cast %160 : vector<1x128x128xbf16> to vector<128x128xbf16>
    %cst_54 = arith.constant dense<0.000000e+00> : vector<8x128xf32>
    %162 = tpu.matmul %159, %161, %cst_54 {dimension_numbers = #tpu.dot_dimension_numbers<[1], [0], [0], [1], [0, 0, 1, 1], [], []>} : vector<8x128xbf16>, vector<128x128xbf16>, vector<8x128xf32> -> vector<8x128xf32>
    %c0_55 = arith.constant 0 : index
    %c0_56 = arith.constant 0 : index
    %c0_57 = arith.constant 0 : index
    %163 = vector.load %arg10[%c0_55, %c0_56, %c0_57] : memref<2x1x128xf32, #tpu.memory_space<vmem>>, vector<1x1x128xf32>
    %164 = vector.shape_cast %163 : vector<1x1x128xf32> to vector<1x128xf32>
    %165 = vector.broadcast %164 : vector<1x128xf32> to vector<8x128xf32>
    %166 = arith.addf %162, %165 : vector<8x128xf32>
    %cst_58 = arith.constant 0.000000e+00 : f32
    %167 = vector.broadcast %cst_58 : f32 to vector<8x128xf32>
    %168 = arith.maximumf %166, %167 : vector<8x128xf32>
    %169 = arith.truncf %168 : vector<8x128xf32> to vector<8x128xbf16>
    %c0_59 = arith.constant 0 : index
    %c0_60 = arith.constant 0 : index
    %c0_61 = arith.constant 0 : index
    %170 = vector.load %arg11[%c0_59, %c0_60, %c0_61] : memref<2x128x128xbf16, #tpu.memory_space<vmem>>, vector<1x128x128xbf16>
    %171 = vector.shape_cast %170 : vector<1x128x128xbf16> to vector<128x128xbf16>
    %cst_62 = arith.constant dense<0.000000e+00> : vector<8x128xf32>
    %172 = tpu.matmul %169, %171, %cst_62 {dimension_numbers = #tpu.dot_dimension_numbers<[1], [0], [0], [1], [0, 0, 1, 1], [], []>} : vector<8x128xbf16>, vector<128x128xbf16>, vector<8x128xf32> -> vector<8x128xf32>
    %c0_63 = arith.constant 0 : index
    %c0_64 = arith.constant 0 : index
    %c0_65 = arith.constant 0 : index
    %173 = vector.load %arg12[%c0_63, %c0_64, %c0_65] : memref<2x1x128xf32, #tpu.memory_space<vmem>>, vector<1x1x128xf32>
    %174 = vector.shape_cast %173 : vector<1x1x128xf32> to vector<1x128xf32>
    %175 = vector.broadcast %174 : vector<1x128xf32> to vector<8x128xf32>
    %176 = arith.addf %172, %175 : vector<8x128xf32>
    %177 = arith.addf %132, %176 : vector<8x128xf32>
    %c1 = arith.constant 1 : index
    %c0_66 = arith.constant 0 : index
    %c0_67 = arith.constant 0 : index
    %178 = vector.load %arg2[%c1, %c0_66, %c0_67] : memref<2x1x128xf32, #tpu.memory_space<vmem>>, vector<1x1x128xf32>
    %179 = vector.shape_cast %178 : vector<1x1x128xf32> to vector<1x128xf32>
    %c1_68 = arith.constant 1 : index
    %c0_69 = arith.constant 0 : index
    %c0_70 = arith.constant 0 : index
    %180 = vector.load %arg3[%c1_68, %c0_69, %c0_70] : memref<2x1x128xf32, #tpu.memory_space<vmem>>, vector<1x1x128xf32>
    %181 = vector.shape_cast %180 : vector<1x1x128xf32> to vector<1x128xf32>
    %cst_71 = arith.constant dense<0.000000e+00> : vector<8xf32>
    %182 = vector.multi_reduction <add>, %177, %cst_71 [1] : vector<8x128xf32> to vector<8xf32>
    %183 = vector.shape_cast %182 : vector<8xf32> to vector<8x1xf32>
    %cst_72 = arith.constant 3.125000e-02 : f32
    %184 = vector.broadcast %cst_72 : f32 to vector<8x1xf32>
    %185 = arith.mulf %183, %184 : vector<8x1xf32>
    %186 = arith.mulf %177, %177 : vector<8x128xf32>
    %cst_73 = arith.constant dense<0.000000e+00> : vector<8xf32>
    %187 = vector.multi_reduction <add>, %186, %cst_73 [1] : vector<8x128xf32> to vector<8xf32>
    %188 = vector.shape_cast %187 : vector<8xf32> to vector<8x1xf32>
    %cst_74 = arith.constant 3.125000e-02 : f32
    %189 = vector.broadcast %cst_74 : f32 to vector<8x1xf32>
    %190 = arith.mulf %188, %189 : vector<8x1xf32>
    %191 = arith.mulf %185, %185 : vector<8x1xf32>
    %192 = arith.subf %190, %191 : vector<8x1xf32>
    %193 = vector.broadcast %185 : vector<8x1xf32> to vector<8x128xf32>
    %194 = arith.subf %177, %193 : vector<8x128xf32>
    %cst_75 = arith.constant 9.99999974E-6 : f32
    %195 = vector.broadcast %cst_75 : f32 to vector<8x1xf32>
    %196 = arith.addf %192, %195 : vector<8x1xf32>
    %197 = math.rsqrt %196 : vector<8x1xf32>
    %198 = vector.broadcast %197 : vector<8x1xf32> to vector<8x128xf32>
    %199 = arith.mulf %194, %198 : vector<8x128xf32>
    %200 = vector.broadcast %179 : vector<1x128xf32> to vector<8x128xf32>
    %201 = arith.mulf %199, %200 : vector<8x128xf32>
    %202 = vector.broadcast %181 : vector<1x128xf32> to vector<8x128xf32>
    %203 = arith.addf %201, %202 : vector<8x128xf32>
    %204 = arith.truncf %203 : vector<8x128xf32> to vector<8x128xbf16>
    %c1_76 = arith.constant 1 : index
    %c0_77 = arith.constant 0 : index
    %c0_78 = arith.constant 0 : index
    %205 = vector.load %arg4[%c1_76, %c0_77, %c0_78] : memref<2x128x1536xbf16, #tpu.memory_space<vmem>>, vector<1x128x1536xbf16>
    %206 = vector.shape_cast %205 : vector<1x128x1536xbf16> to vector<128x1536xbf16>
    %cst_79 = arith.constant dense<0.000000e+00> : vector<8x1536xf32>
    %207 = tpu.matmul %204, %206, %cst_79 {dimension_numbers = #tpu.dot_dimension_numbers<[1], [0], [0], [1], [0, 0, 1, 1], [], []>} : vector<8x128xbf16>, vector<128x1536xbf16>, vector<8x1536xf32> -> vector<8x1536xf32>
    %208 = vector.extract_strided_slice %207 {offsets = [0, 0], sizes = [8, 512], strides = [1, 1]} : vector<8x1536xf32> to vector<8x512xf32>
    %209 = vector.shape_cast %208 : vector<8x512xf32> to vector<1x8x512xf32>
    %210 = vector.extract_strided_slice %207 {offsets = [0, 512], sizes = [8, 512], strides = [1, 1]} : vector<8x1536xf32> to vector<8x512xf32>
    %211 = vector.shape_cast %210 : vector<8x512xf32> to vector<1x8x512xf32>
    %212 = vector.extract_strided_slice %207 {offsets = [0, 1024], sizes = [8, 512], strides = [1, 1]} : vector<8x1536xf32> to vector<8x512xf32>
    %213 = vector.shape_cast %212 : vector<8x512xf32> to vector<1x8x512xf32>
    %214 = vector.extract_strided_slice %209 {offsets = [0, 0, 0], sizes = [1, 8, 128], strides = [1, 1, 1]} : vector<1x8x512xf32> to vector<1x8x128xf32>
    %215 = arith.truncf %214 : vector<1x8x128xf32> to vector<1x8x128xbf16>
    %216 = vector.extract_strided_slice %211 {offsets = [0, 0, 0], sizes = [1, 8, 128], strides = [1, 1, 1]} : vector<1x8x512xf32> to vector<1x8x128xf32>
    %217 = arith.truncf %216 : vector<1x8x128xf32> to vector<1x8x128xbf16>
    %218 = vector.extract_strided_slice %213 {offsets = [0, 0, 0], sizes = [1, 8, 128], strides = [1, 1, 1]} : vector<1x8x512xf32> to vector<1x8x128xf32>
    %219 = arith.truncf %218 : vector<1x8x128xf32> to vector<1x8x128xbf16>
    "tpu.trace_start"() <{level = 10 : i32, message = "bqd,bkd->bqk"}> : () -> ()
    %cst_80 = arith.constant dense<0.000000e+00> : vector<1x8x8xf32>
    %220 = tpu.matmul %215, %217, %cst_80 {dimension_numbers = #tpu.dot_dimension_numbers<[2], [2], [1], [1], [0, 0, 0, 1, 1, 1], [0], [0]>} : vector<1x8x128xbf16>, vector<1x8x128xbf16>, vector<1x8x8xf32> -> vector<1x8x8xf32>
    "tpu.trace_stop"() : () -> ()
    %221 = arith.addf %220, %6 : vector<1x8x8xf32>
    %cst_81 = arith.constant dense<0xFF800000> : vector<1x8xf32>
    %222 = vector.multi_reduction <maximumf>, %221, %cst_81 [2] : vector<1x8x8xf32> to vector<1x8xf32>
    %223 = vector.shape_cast %222 : vector<1x8xf32> to vector<1x8x1xf32>
    %224 = vector.broadcast %223 : vector<1x8x1xf32> to vector<1x8x8xf32>
    %225 = arith.subf %221, %224 : vector<1x8x8xf32>
    %226 = math.exp %225 : vector<1x8x8xf32>
    %cst_82 = arith.constant dense<0.000000e+00> : vector<1x8xf32>
    %227 = vector.multi_reduction <add>, %226, %cst_82 [2] : vector<1x8x8xf32> to vector<1x8xf32>
    %228 = vector.shape_cast %227 : vector<1x8xf32> to vector<1x8x1xf32>
    %229 = vector.broadcast %228 : vector<1x8x1xf32> to vector<1x8x8xf32>
    %230 = arith.divf %226, %229 : vector<1x8x8xf32>
    %231 = arith.truncf %230 : vector<1x8x8xf32> to vector<1x8x8xbf16>
    "tpu.trace_start"() <{level = 10 : i32, message = "bqk,bkd->bqd"}> : () -> ()
    %cst_83 = arith.constant dense<0.000000e+00> : vector<1x8x128xf32>
    %232 = tpu.matmul %231, %219, %cst_83 {dimension_numbers = #tpu.dot_dimension_numbers<[2], [1], [1], [2], [0, 0, 0, 1, 1, 2], [0], [0]>} : vector<1x8x8xbf16>, vector<1x8x128xbf16>, vector<1x8x128xf32> -> vector<1x8x128xf32>
    "tpu.trace_stop"() : () -> ()
    %233 = vector.shape_cast %232 : vector<1x8x128xf32> to vector<8x128xf32>
    %234 = vector.extract_strided_slice %209 {offsets = [0, 0, 128], sizes = [1, 8, 128], strides = [1, 1, 1]} : vector<1x8x512xf32> to vector<1x8x128xf32>
    %235 = arith.truncf %234 : vector<1x8x128xf32> to vector<1x8x128xbf16>
    %236 = vector.extract_strided_slice %211 {offsets = [0, 0, 128], sizes = [1, 8, 128], strides = [1, 1, 1]} : vector<1x8x512xf32> to vector<1x8x128xf32>
    %237 = arith.truncf %236 : vector<1x8x128xf32> to vector<1x8x128xbf16>
    %238 = vector.extract_strided_slice %213 {offsets = [0, 0, 128], sizes = [1, 8, 128], strides = [1, 1, 1]} : vector<1x8x512xf32> to vector<1x8x128xf32>
    %239 = arith.truncf %238 : vector<1x8x128xf32> to vector<1x8x128xbf16>
    "tpu.trace_start"() <{level = 10 : i32, message = "bqd,bkd->bqk"}> : () -> ()
    %cst_84 = arith.constant dense<0.000000e+00> : vector<1x8x8xf32>
    %240 = tpu.matmul %235, %237, %cst_84 {dimension_numbers = #tpu.dot_dimension_numbers<[2], [2], [1], [1], [0, 0, 0, 1, 1, 1], [0], [0]>} : vector<1x8x128xbf16>, vector<1x8x128xbf16>, vector<1x8x8xf32> -> vector<1x8x8xf32>
    "tpu.trace_stop"() : () -> ()
    %241 = arith.addf %240, %6 : vector<1x8x8xf32>
    %cst_85 = arith.constant dense<0xFF800000> : vector<1x8xf32>
    %242 = vector.multi_reduction <maximumf>, %241, %cst_85 [2] : vector<1x8x8xf32> to vector<1x8xf32>
    %243 = vector.shape_cast %242 : vector<1x8xf32> to vector<1x8x1xf32>
    %244 = vector.broadcast %243 : vector<1x8x1xf32> to vector<1x8x8xf32>
    %245 = arith.subf %241, %244 : vector<1x8x8xf32>
    %246 = math.exp %245 : vector<1x8x8xf32>
    %cst_86 = arith.constant dense<0.000000e+00> : vector<1x8xf32>
    %247 = vector.multi_reduction <add>, %246, %cst_86 [2] : vector<1x8x8xf32> to vector<1x8xf32>
    %248 = vector.shape_cast %247 : vector<1x8xf32> to vector<1x8x1xf32>
    %249 = vector.broadcast %248 : vector<1x8x1xf32> to vector<1x8x8xf32>
    %250 = arith.divf %246, %249 : vector<1x8x8xf32>
    %251 = arith.truncf %250 : vector<1x8x8xf32> to vector<1x8x8xbf16>
    "tpu.trace_start"() <{level = 10 : i32, message = "bqk,bkd->bqd"}> : () -> ()
    %cst_87 = arith.constant dense<0.000000e+00> : vector<1x8x128xf32>
    %252 = tpu.matmul %251, %239, %cst_87 {dimension_numbers = #tpu.dot_dimension_numbers<[2], [1], [1], [2], [0, 0, 0, 1, 1, 2], [0], [0]>} : vector<1x8x8xbf16>, vector<1x8x128xbf16>, vector<1x8x128xf32> -> vector<1x8x128xf32>
    "tpu.trace_stop"() : () -> ()
    %253 = vector.shape_cast %252 : vector<1x8x128xf32> to vector<8x128xf32>
    %254 = vector.extract_strided_slice %209 {offsets = [0, 0, 256], sizes = [1, 8, 128], strides = [1, 1, 1]} : vector<1x8x512xf32> to vector<1x8x128xf32>
    %255 = arith.truncf %254 : vector<1x8x128xf32> to vector<1x8x128xbf16>
    %256 = vector.extract_strided_slice %211 {offsets = [0, 0, 256], sizes = [1, 8, 128], strides = [1, 1, 1]} : vector<1x8x512xf32> to vector<1x8x128xf32>
    %257 = arith.truncf %256 : vector<1x8x128xf32> to vector<1x8x128xbf16>
    %258 = vector.extract_strided_slice %213 {offsets = [0, 0, 256], sizes = [1, 8, 128], strides = [1, 1, 1]} : vector<1x8x512xf32> to vector<1x8x128xf32>
    %259 = arith.truncf %258 : vector<1x8x128xf32> to vector<1x8x128xbf16>
    "tpu.trace_start"() <{level = 10 : i32, message = "bqd,bkd->bqk"}> : () -> ()
    %cst_88 = arith.constant dense<0.000000e+00> : vector<1x8x8xf32>
    %260 = tpu.matmul %255, %257, %cst_88 {dimension_numbers = #tpu.dot_dimension_numbers<[2], [2], [1], [1], [0, 0, 0, 1, 1, 1], [0], [0]>} : vector<1x8x128xbf16>, vector<1x8x128xbf16>, vector<1x8x8xf32> -> vector<1x8x8xf32>
    "tpu.trace_stop"() : () -> ()
    %261 = arith.addf %260, %6 : vector<1x8x8xf32>
    %cst_89 = arith.constant dense<0xFF800000> : vector<1x8xf32>
    %262 = vector.multi_reduction <maximumf>, %261, %cst_89 [2] : vector<1x8x8xf32> to vector<1x8xf32>
    %263 = vector.shape_cast %262 : vector<1x8xf32> to vector<1x8x1xf32>
    %264 = vector.broadcast %263 : vector<1x8x1xf32> to vector<1x8x8xf32>
    %265 = arith.subf %261, %264 : vector<1x8x8xf32>
    %266 = math.exp %265 : vector<1x8x8xf32>
    %cst_90 = arith.constant dense<0.000000e+00> : vector<1x8xf32>
    %267 = vector.multi_reduction <add>, %266, %cst_90 [2] : vector<1x8x8xf32> to vector<1x8xf32>
    %268 = vector.shape_cast %267 : vector<1x8xf32> to vector<1x8x1xf32>
    %269 = vector.broadcast %268 : vector<1x8x1xf32> to vector<1x8x8xf32>
    %270 = arith.divf %266, %269 : vector<1x8x8xf32>
    %271 = arith.truncf %270 : vector<1x8x8xf32> to vector<1x8x8xbf16>
    "tpu.trace_start"() <{level = 10 : i32, message = "bqk,bkd->bqd"}> : () -> ()
    %cst_91 = arith.constant dense<0.000000e+00> : vector<1x8x128xf32>
    %272 = tpu.matmul %271, %259, %cst_91 {dimension_numbers = #tpu.dot_dimension_numbers<[2], [1], [1], [2], [0, 0, 0, 1, 1, 2], [0], [0]>} : vector<1x8x8xbf16>, vector<1x8x128xbf16>, vector<1x8x128xf32> -> vector<1x8x128xf32>
    "tpu.trace_stop"() : () -> ()
    %273 = vector.shape_cast %272 : vector<1x8x128xf32> to vector<8x128xf32>
    %274 = vector.extract_strided_slice %209 {offsets = [0, 0, 384], sizes = [1, 8, 128], strides = [1, 1, 1]} : vector<1x8x512xf32> to vector<1x8x128xf32>
    %275 = arith.truncf %274 : vector<1x8x128xf32> to vector<1x8x128xbf16>
    %276 = vector.extract_strided_slice %211 {offsets = [0, 0, 384], sizes = [1, 8, 128], strides = [1, 1, 1]} : vector<1x8x512xf32> to vector<1x8x128xf32>
    %277 = arith.truncf %276 : vector<1x8x128xf32> to vector<1x8x128xbf16>
    %278 = vector.extract_strided_slice %213 {offsets = [0, 0, 384], sizes = [1, 8, 128], strides = [1, 1, 1]} : vector<1x8x512xf32> to vector<1x8x128xf32>
    %279 = arith.truncf %278 : vector<1x8x128xf32> to vector<1x8x128xbf16>
    "tpu.trace_start"() <{level = 10 : i32, message = "bqd,bkd->bqk"}> : () -> ()
    %cst_92 = arith.constant dense<0.000000e+00> : vector<1x8x8xf32>
    %280 = tpu.matmul %275, %277, %cst_92 {dimension_numbers = #tpu.dot_dimension_numbers<[2], [2], [1], [1], [0, 0, 0, 1, 1, 1], [0], [0]>} : vector<1x8x128xbf16>, vector<1x8x128xbf16>, vector<1x8x8xf32> -> vector<1x8x8xf32>
    "tpu.trace_stop"() : () -> ()
    %281 = arith.addf %280, %6 : vector<1x8x8xf32>
    %cst_93 = arith.constant dense<0xFF800000> : vector<1x8xf32>
    %282 = vector.multi_reduction <maximumf>, %281, %cst_93 [2] : vector<1x8x8xf32> to vector<1x8xf32>
    %283 = vector.shape_cast %282 : vector<1x8xf32> to vector<1x8x1xf32>
    %284 = vector.broadcast %283 : vector<1x8x1xf32> to vector<1x8x8xf32>
    %285 = arith.subf %281, %284 : vector<1x8x8xf32>
    %286 = math.exp %285 : vector<1x8x8xf32>
    %cst_94 = arith.constant dense<0.000000e+00> : vector<1x8xf32>
    %287 = vector.multi_reduction <add>, %286, %cst_94 [2] : vector<1x8x8xf32> to vector<1x8xf32>
    %288 = vector.shape_cast %287 : vector<1x8xf32> to vector<1x8x1xf32>
    %289 = vector.broadcast %288 : vector<1x8x1xf32> to vector<1x8x8xf32>
    %290 = arith.divf %286, %289 : vector<1x8x8xf32>
    %291 = arith.truncf %290 : vector<1x8x8xf32> to vector<1x8x8xbf16>
    "tpu.trace_start"() <{level = 10 : i32, message = "bqk,bkd->bqd"}> : () -> ()
    %cst_95 = arith.constant dense<0.000000e+00> : vector<1x8x128xf32>
    %292 = tpu.matmul %291, %279, %cst_95 {dimension_numbers = #tpu.dot_dimension_numbers<[2], [1], [1], [2], [0, 0, 0, 1, 1, 2], [0], [0]>} : vector<1x8x8xbf16>, vector<1x8x128xbf16>, vector<1x8x128xf32> -> vector<1x8x128xf32>
    "tpu.trace_stop"() : () -> ()
    %293 = vector.shape_cast %292 : vector<1x8x128xf32> to vector<8x128xf32>
    %294 = tpu.concatenate %233, %253, %273, %293 in 1 : vector<8x128xf32>, vector<8x128xf32>, vector<8x128xf32>, vector<8x128xf32> -> vector<8x512xf32>
    %295 = arith.truncf %294 : vector<8x512xf32> to vector<8x512xbf16>
    %c1_96 = arith.constant 1 : index
    %c0_97 = arith.constant 0 : index
    %c0_98 = arith.constant 0 : index
    %296 = vector.load %arg5[%c1_96, %c0_97, %c0_98] : memref<2x512x128xbf16, #tpu.memory_space<vmem>>, vector<1x512x128xbf16>
    %297 = vector.shape_cast %296 : vector<1x512x128xbf16> to vector<512x128xbf16>
    %cst_99 = arith.constant dense<0.000000e+00> : vector<8x128xf32>
    %298 = tpu.matmul %295, %297, %cst_99 {dimension_numbers = #tpu.dot_dimension_numbers<[1], [0], [0], [1], [0, 0, 1, 1], [], []>} : vector<8x512xbf16>, vector<512x128xbf16>, vector<8x128xf32> -> vector<8x128xf32>
    %c1_100 = arith.constant 1 : index
    %c0_101 = arith.constant 0 : index
    %c0_102 = arith.constant 0 : index
    %299 = vector.load %arg6[%c1_100, %c0_101, %c0_102] : memref<2x1x128xf32, #tpu.memory_space<vmem>>, vector<1x1x128xf32>
    %300 = vector.shape_cast %299 : vector<1x1x128xf32> to vector<1x128xf32>
    %301 = vector.broadcast %300 : vector<1x128xf32> to vector<8x128xf32>
    %302 = arith.addf %298, %301 : vector<8x128xf32>
    %303 = arith.addf %177, %302 : vector<8x128xf32>
    %c1_103 = arith.constant 1 : index
    %c0_104 = arith.constant 0 : index
    %c0_105 = arith.constant 0 : index
    %304 = vector.load %arg7[%c1_103, %c0_104, %c0_105] : memref<2x1x128xf32, #tpu.memory_space<vmem>>, vector<1x1x128xf32>
    %305 = vector.shape_cast %304 : vector<1x1x128xf32> to vector<1x128xf32>
    %c1_106 = arith.constant 1 : index
    %c0_107 = arith.constant 0 : index
    %c0_108 = arith.constant 0 : index
    %306 = vector.load %arg8[%c1_106, %c0_107, %c0_108] : memref<2x1x128xf32, #tpu.memory_space<vmem>>, vector<1x1x128xf32>
    %307 = vector.shape_cast %306 : vector<1x1x128xf32> to vector<1x128xf32>
    %cst_109 = arith.constant dense<0.000000e+00> : vector<8xf32>
    %308 = vector.multi_reduction <add>, %303, %cst_109 [1] : vector<8x128xf32> to vector<8xf32>
    %309 = vector.shape_cast %308 : vector<8xf32> to vector<8x1xf32>
    %cst_110 = arith.constant 3.125000e-02 : f32
    %310 = vector.broadcast %cst_110 : f32 to vector<8x1xf32>
    %311 = arith.mulf %309, %310 : vector<8x1xf32>
    %312 = arith.mulf %303, %303 : vector<8x128xf32>
    %cst_111 = arith.constant dense<0.000000e+00> : vector<8xf32>
    %313 = vector.multi_reduction <add>, %312, %cst_111 [1] : vector<8x128xf32> to vector<8xf32>
    %314 = vector.shape_cast %313 : vector<8xf32> to vector<8x1xf32>
    %cst_112 = arith.constant 3.125000e-02 : f32
    %315 = vector.broadcast %cst_112 : f32 to vector<8x1xf32>
    %316 = arith.mulf %314, %315 : vector<8x1xf32>
    %317 = arith.mulf %311, %311 : vector<8x1xf32>
    %318 = arith.subf %316, %317 : vector<8x1xf32>
    %319 = vector.broadcast %311 : vector<8x1xf32> to vector<8x128xf32>
    %320 = arith.subf %303, %319 : vector<8x128xf32>
    %cst_113 = arith.constant 9.99999974E-6 : f32
    %321 = vector.broadcast %cst_113 : f32 to vector<8x1xf32>
    %322 = arith.addf %318, %321 : vector<8x1xf32>
    %323 = math.rsqrt %322 : vector<8x1xf32>
    %324 = vector.broadcast %323 : vector<8x1xf32> to vector<8x128xf32>
    %325 = arith.mulf %320, %324 : vector<8x128xf32>
    %326 = vector.broadcast %305 : vector<1x128xf32> to vector<8x128xf32>
    %327 = arith.mulf %325, %326 : vector<8x128xf32>
    %328 = vector.broadcast %307 : vector<1x128xf32> to vector<8x128xf32>
    %329 = arith.addf %327, %328 : vector<8x128xf32>
    %330 = arith.truncf %329 : vector<8x128xf32> to vector<8x128xbf16>
    %c1_114 = arith.constant 1 : index
    %c0_115 = arith.constant 0 : index
    %c0_116 = arith.constant 0 : index
    %331 = vector.load %arg9[%c1_114, %c0_115, %c0_116] : memref<2x128x128xbf16, #tpu.memory_space<vmem>>, vector<1x128x128xbf16>
    %332 = vector.shape_cast %331 : vector<1x128x128xbf16> to vector<128x128xbf16>
    %cst_117 = arith.constant dense<0.000000e+00> : vector<8x128xf32>
    %333 = tpu.matmul %330, %332, %cst_117 {dimension_numbers = #tpu.dot_dimension_numbers<[1], [0], [0], [1], [0, 0, 1, 1], [], []>} : vector<8x128xbf16>, vector<128x128xbf16>, vector<8x128xf32> -> vector<8x128xf32>
    %c1_118 = arith.constant 1 : index
    %c0_119 = arith.constant 0 : index
    %c0_120 = arith.constant 0 : index
    %334 = vector.load %arg10[%c1_118, %c0_119, %c0_120] : memref<2x1x128xf32, #tpu.memory_space<vmem>>, vector<1x1x128xf32>
    %335 = vector.shape_cast %334 : vector<1x1x128xf32> to vector<1x128xf32>
    %336 = vector.broadcast %335 : vector<1x128xf32> to vector<8x128xf32>
    %337 = arith.addf %333, %336 : vector<8x128xf32>
    %cst_121 = arith.constant 0.000000e+00 : f32
    %338 = vector.broadcast %cst_121 : f32 to vector<8x128xf32>
    %339 = arith.maximumf %337, %338 : vector<8x128xf32>
    %340 = arith.truncf %339 : vector<8x128xf32> to vector<8x128xbf16>
    %c1_122 = arith.constant 1 : index
    %c0_123 = arith.constant 0 : index
    %c0_124 = arith.constant 0 : index
    %341 = vector.load %arg11[%c1_122, %c0_123, %c0_124] : memref<2x128x128xbf16, #tpu.memory_space<vmem>>, vector<1x128x128xbf16>
    %342 = vector.shape_cast %341 : vector<1x128x128xbf16> to vector<128x128xbf16>
    %cst_125 = arith.constant dense<0.000000e+00> : vector<8x128xf32>
    %343 = tpu.matmul %340, %342, %cst_125 {dimension_numbers = #tpu.dot_dimension_numbers<[1], [0], [0], [1], [0, 0, 1, 1], [], []>} : vector<8x128xbf16>, vector<128x128xbf16>, vector<8x128xf32> -> vector<8x128xf32>
    %c1_126 = arith.constant 1 : index
    %c0_127 = arith.constant 0 : index
    %c0_128 = arith.constant 0 : index
    %344 = vector.load %arg12[%c1_126, %c0_127, %c0_128] : memref<2x1x128xf32, #tpu.memory_space<vmem>>, vector<1x1x128xf32>
    %345 = vector.shape_cast %344 : vector<1x1x128xf32> to vector<1x128xf32>
    %346 = vector.broadcast %345 : vector<1x128xf32> to vector<8x128xf32>
    %347 = arith.addf %343, %346 : vector<8x128xf32>
    %348 = arith.addf %303, %347 : vector<8x128xf32>
    %c0_129 = arith.constant 0 : index
    %c0_130 = arith.constant 0 : index
    %349 = vector.load %arg13[%c0_129, %c0_130] : memref<8x128xf32, #tpu.memory_space<vmem>>, vector<8x128xf32>
    tpu.vector_store %arg13[%c0_129, %c0_130], %348 {strides = array<i32>} : memref<8x128xf32, #tpu.memory_space<vmem>>, vector<8x128xf32>,
    return
  }
  func.func @transform_0(%arg0: i32) -> (i32, i32) {
    %c0_i32 = arith.constant 0 : i32
    %c0_i32_0 = arith.constant 0 : i32
    return %arg0, %c0_i32 : i32, i32
  }
  func.func @transform_1(%arg0: i32) -> (i32, i32, i32) {
    %c0_i32 = arith.constant 0 : i32
    %c0_i32_0 = arith.constant 0 : i32
    %c0_i32_1 = arith.constant 0 : i32
    %c0_i32_2 = arith.constant 0 : i32
    return %c0_i32, %c0_i32_0, %c0_i32_1 : i32, i32, i32
  }
  func.func @transform_2(%arg0: i32) -> (i32, i32, i32) {
    %c0_i32 = arith.constant 0 : i32
    %c0_i32_0 = arith.constant 0 : i32
    %c0_i32_1 = arith.constant 0 : i32
    %c0_i32_2 = arith.constant 0 : i32
    return %c0_i32, %c0_i32_0, %c0_i32_1 : i32, i32, i32
  }
  func.func @transform_3(%arg0: i32) -> (i32, i32, i32) {
    %c0_i32 = arith.constant 0 : i32
    %c0_i32_0 = arith.constant 0 : i32
    %c0_i32_1 = arith.constant 0 : i32
    %c0_i32_2 = arith.constant 0 : i32
    return %c0_i32, %c0_i32_0, %c0_i32_1 : i32, i32, i32
  }
  func.func @transform_4(%arg0: i32) -> (i32, i32, i32) {
    %c0_i32 = arith.constant 0 : i32
    %c0_i32_0 = arith.constant 0 : i32
    %c0_i32_1 = arith.constant 0 : i32
    %c0_i32_2 = arith.constant 0 : i32
    return %c0_i32, %c0_i32_0, %c0_i32_1 : i32, i32, i32
  }
  func.func @transform_5(%arg0: i32) -> (i32, i32, i32) {
    %c0_i32 = arith.constant 0 : i32
    %c0_i32_0 = arith.constant 0 : i32
    %c0_i32_1 = arith.constant 0 : i32
    %c0_i32_2 = arith.constant 0 : i32
    return %c0_i32, %c0_i32_0, %c0_i32_1 : i32, i32, i32
  }
  func.func @transform_6(%arg0: i32) -> (i32, i32, i32) {
    %c0_i32 = arith.constant 0 : i32
    %c0_i32_0 = arith.constant 0 : i32
    %c0_i32_1 = arith.constant 0 : i32
    %c0_i32_2 = arith.constant 0 : i32
    return %c0_i32, %c0_i32_0, %c0_i32_1 : i32, i32, i32
  }
  func.func @transform_7(%arg0: i32) -> (i32, i32, i32) {
    %c0_i32 = arith.constant 0 : i32
    %c0_i32_0 = arith.constant 0 : i32
    %c0_i32_1 = arith.constant 0 : i32
    %c0_i32_2 = arith.constant 0 : i32
    return %c0_i32, %c0_i32_0, %c0_i32_1 : i32, i32, i32
  }
  func.func @transform_8(%arg0: i32) -> (i32, i32, i32) {
    %c0_i32 = arith.constant 0 : i32
    %c0_i32_0 = arith.constant 0 : i32
    %c0_i32_1 = arith.constant 0 : i32
    %c0_i32_2 = arith.constant 0 : i32
    return %c0_i32, %c0_i32_0, %c0_i32_1 : i32, i32, i32
  }
  func.func @transform_9(%arg0: i32) -> (i32, i32, i32) {
    %c0_i32 = arith.constant 0 : i32
    %c0_i32_0 = arith.constant 0 : i32
    %c0_i32_1 = arith.constant 0 : i32
    %c0_i32_2 = arith.constant 0 : i32
    return %c0_i32, %c0_i32_0, %c0_i32_1 : i32, i32, i32
  }
  func.func @transform_10(%arg0: i32) -> (i32, i32, i32) {
    %c0_i32 = arith.constant 0 : i32
    %c0_i32_0 = arith.constant 0 : i32
    %c0_i32_1 = arith.constant 0 : i32
    %c0_i32_2 = arith.constant 0 : i32
    return %c0_i32, %c0_i32_0, %c0_i32_1 : i32, i32, i32
  }
  func.func @transform_11(%arg0: i32) -> (i32, i32, i32) {
    %c0_i32 = arith.constant 0 : i32
    %c0_i32_0 = arith.constant 0 : i32
    %c0_i32_1 = arith.constant 0 : i32
    %c0_i32_2 = arith.constant 0 : i32
    return %c0_i32, %c0_i32_0, %c0_i32_1 : i32, i32, i32
  }
  func.func @transform_12(%arg0: i32) -> (i32, i32) {
    %c0_i32 = arith.constant 0 : i32
    %c0_i32_0 = arith.constant 0 : i32
    return %arg0, %c0_i32 : i32, i32
  }
}

</mosaic_0001>

<llo_original>
// kernel: bigram_forward.3
$region0: #{bigram_forward.3}
  #allocation0 [shape = 'u32[]', space=smem, size = 0x4, offset = 0x4, fixed_abs, tag = 'smem constant byte address 0x4 - core index']
  #allocation1 [shape = 'u32[144,128]{1,0:T(1,128)}', space=vmem, size = 0x12000, scoped, tag = 'internal scratch']
  %s0 = inlined_call_operand.vmem [shape: f32[16,128], index: 0, kind: input, shape index: {}]
  %s1 = inlined_call_operand.vmem [shape: f32[1,128], index: 1, kind: input, shape index: {}]
  %s2 = inlined_call_operand.vmem [shape: f32[1,128], index: 2, kind: input, shape index: {}]
  %s3 = inlined_call_operand.vmem [shape: bf16[128,128], index: 3, kind: input, shape index: {}]
  %s4 = inlined_call_operand.vmem [shape: f32[1,128], index: 4, kind: input, shape index: {}]
  %s5 = inlined_call_operand.vmem [shape: s32[16,1], index: 5, kind: input, shape index: {}]
  %s6 = inlined_call_operand.vmem [shape: f32[16,128], index: 6, kind: output, shape index: {0}]
  %s7 = inlined_call_operand.vmem [shape: f32[16,1], index: 7, kind: output, shape index: {1}]
  %8 = xla_tuple %s6, %s7
  %s9 = sld [smem:[#allocation0]]
  $region65: #{bigram_forward.3} parent=0
    _
  %s11 = ssub.s32 1, %s9
  %s12 = scalar_select 0, %s11, %s9
  loop: start=0, step=1, limit=4
  $region2: #{bigram_forward.3} parent=0 // loop_pre_header
    _
  $region3: #{bigram_forward.3} parent=0 // loop_header
    %s14 = sphi 0, %s18
    %p15 = scmp.ge.s32.totalorder %s14, 4
    %s24 = sphi 0, %s26
    %s27 = sphi 0, %s24
    %s28 = sphi 0, %s27
    %s44 = sphi 0, %s28
    %s48 = sphi 0, %s48
    %s50 = sphi 0, %s48
    %s51 = sphi 0, %s50
    %s65 = sphi 0, %s51
    %s69 = sphi 0, %s69
    %s71 = sphi 0, %s69
    %s72 = sphi 0, %s71
    %s86 = sphi 0, %s72
    %s90 = sphi 0, %s90
    %s92 = sphi 0, %s90
    %s93 = sphi 0, %s92
    %s107 = sphi 0, %s93
    %s111 = sphi 0, %s111
    %s113 = sphi 0, %s111
    %s114 = sphi 0, %s113
    %s128 = sphi 0, %s114
    %s134 = sphi 0, %s136
    %s137 = sphi 0, %s134
    %s138 = sphi 0, %s137
    %s154 = sphi 0, %s138
    %s160 = sphi 0, %s162
    %s163 = sphi 0, %s160
    %s164 = sphi 0, %s163
    %s180 = sphi 0, %s164
    %s186 = sphi 0, %s188
    %s189 = sphi 0, %s186
    %s190 = sphi 0, %s189
    %s206 = sphi 0, %s190
  $region4: #{bigram_forward.3} parent=0 // loop_header_branch
    %17 = sbr.rel (%p15) target = $region8
  $region5: #{bigram_forward.3} parent=0 // loop_body
    %s19 = ssub.s32 %s14, 1
    %s20 = ssub.s32 %s14, 2
    %s21 = sadd.s32 %s14, 1
    %s22 = ssub.s32 %s14, %s21
    %p23 = scmp.eq.s32.totalorder %s22, 0
    %s25 = sadd.s32 %s24, 1
    %s26 = scalar_select %p23, %s24, %s25
    %p29 = pneg %p23
    %p30 = scmp.eq.s32.totalorder %s14, 1
    %p31 = por %p29, %p30
    %p32 = scmp.ne.s32.totalorder %s24, %s27
    %p33 = scmp.eq.s32.totalorder %s14, 0
    %p34 = por %p32, %p33
    %p35 = scmp.ne.s32.totalorder %s24, %s27
    %p36 = scmp.eq.s32.totalorder %s19, 1
    %p37 = por %p35, %p36
    %p38 = scmp.ne.s32.totalorder %s27, %s28
    %p39 = scmp.eq.s32.totalorder %s19, 0
    %p40 = por %p38, %p39
    %p41 = scmp.ne.s32.totalorder %s27, %s28
    %p42 = scmp.eq.s32.totalorder %s20, 1
    %p43 = por %p41, %p42
    %p45 = scmp.ne.s32.totalorder %s28, %s44
    %p46 = scmp.eq.s32.totalorder %s20, 0
    %p47 = por %p45, %p46
    %s49 = sadd.s32 %s48, 1
    %p52 = scmp.eq.s32.totalorder %s14, 1
    %p53 = scmp.ne.s32.totalorder %s48, %s50
    %p54 = scmp.eq.s32.totalorder %s14, 0
    %p55 = por %p53, %p54
    %p56 = scmp.ne.s32.totalorder %s48, %s50
    %p57 = scmp.eq.s32.totalorder %s19, 1
    %p58 = por %p56, %p57
    %p59 = scmp.ne.s32.totalorder %s50, %s51
    %p60 = scmp.eq.s32.totalorder %s19, 0
    %p61 = por %p59, %p60
    %p62 = scmp.ne.s32.totalorder %s50, %s51
    %p63 = scmp.eq.s32.totalorder %s20, 1
    %p64 = por %p62, %p63
    %p66 = scmp.ne.s32.totalorder %s51, %s65
    %p67 = scmp.eq.s32.totalorder %s20, 0
    %p68 = por %p66, %p67
    %s70 = sadd.s32 %s69, 1
    %p73 = scmp.eq.s32.totalorder %s14, 1
    %p74 = scmp.ne.s32.totalorder %s69, %s71
    %p75 = scmp.eq.s32.totalorder %s14, 0
    %p76 = por %p74, %p75
    %p77 = scmp.ne.s32.totalorder %s69, %s71
    %p78 = scmp.eq.s32.totalorder %s19, 1
    %p79 = por %p77, %p78
    %p80 = scmp.ne.s32.totalorder %s71, %s72
    %p81 = scmp.eq.s32.totalorder %s19, 0
    %p82 = por %p80, %p81
    %p83 = scmp.ne.s32.totalorder %s71, %s72
    %p84 = scmp.eq.s32.totalorder %s20, 1
    %p85 = por %p83, %p84
    %p87 = scmp.ne.s32.totalorder %s72, %s86
    %p88 = scmp.eq.s32.totalorder %s20, 0
    %p89 = por %p87, %p88
    %s91 = sadd.s32 %s90, 1
    %p94 = scmp.eq.s32.totalorder %s14, 1
    %p95 = scmp.ne.s32.totalorder %s90, %s92
    %p96 = scmp.eq.s32.totalorder %s14, 0
    %p97 = por %p95, %p96
    %p98 = scmp.ne.s32.totalorder %s90, %s92
    %p99 = scmp.eq.s32.totalorder %s19, 1
    %p100 = por %p98, %p99
    %p101 = scmp.ne.s32.totalorder %s92, %s93
    %p102 = scmp.eq.s32.totalorder %s19, 0
    %p103 = por %p101, %p102
    %p104 = scmp.ne.s32.totalorder %s92, %s93
    %p105 = scmp.eq.s32.totalorder %s20, 1
    %p106 = por %p104, %p105
    %p108 = scmp.ne.s32.totalorder %s93, %s107
    %p109 = scmp.eq.s32.totalorder %s20, 0
    %p110 = por %p108, %p109
    %s112 = sadd.s32 %s111, 1
    %p115 = scmp.eq.s32.totalorder %s14, 1
    %p116 = scmp.ne.s32.totalorder %s111, %s113
    %p117 = scmp.eq.s32.totalorder %s14, 0
    %p118 = por %p116, %p117
    %p119 = scmp.ne.s32.totalorder %s111, %s113
    %p120 = scmp.eq.s32.totalorder %s19, 1
    %p121 = por %p119, %p120
    %p122 = scmp.ne.s32.totalorder %s113, %s114
    %p123 = scmp.eq.s32.totalorder %s19, 0
    %p124 = por %p122, %p123
    %p125 = scmp.ne.s32.totalorder %s113, %s114
    %p126 = scmp.eq.s32.totalorder %s20, 1
    %p127 = por %p125, %p126
    %p129 = scmp.ne.s32.totalorder %s114, %s128
    %p130 = scmp.eq.s32.totalorder %s20, 0
    %p131 = por %p129, %p130
    %s132 = ssub.s32 %s14, %s21
    %p133 = scmp.eq.s32.totalorder %s132, 0
    %s135 = sadd.s32 %s134, 1
    %s136 = scalar_select %p133, %s134, %s135
    %p139 = pneg %p133
    %p140 = scmp.eq.s32.totalorder %s14, 1
    %p141 = por %p139, %p140
    %p142 = scmp.ne.s32.totalorder %s134, %s137
    %p143 = scmp.eq.s32.totalorder %s14, 0
    %p144 = por %p142, %p143
    %p145 = scmp.ne.s32.totalorder %s134, %s137
    %p146 = scmp.eq.s32.totalorder %s19, 1
    %p147 = por %p145, %p146
    %p148 = scmp.ne.s32.totalorder %s137, %s138
    %p149 = scmp.eq.s32.totalorder %s19, 0
    %p150 = por %p148, %p149
    %p151 = scmp.ne.s32.totalorder %s137, %s138
    %p152 = scmp.eq.s32.totalorder %s20, 1
    %p153 = por %p151, %p152
    %p155 = scmp.ne.s32.totalorder %s138, %s154
    %p156 = scmp.eq.s32.totalorder %s20, 0
    %p157 = por %p155, %p156
    %s158 = ssub.s32 %s14, %s21
    %p159 = scmp.eq.s32.totalorder %s158, 0
    %s161 = sadd.s32 %s160, 1
    %s162 = scalar_select %p159, %s160, %s161
    %p165 = pneg %p159
    %p166 = scmp.eq.s32.totalorder %s14, 1
    %p167 = por %p165, %p166
    %p168 = scmp.ne.s32.totalorder %s160, %s163
    %p169 = scmp.eq.s32.totalorder %s14, 0
    %p170 = por %p168, %p169
    %p171 = scmp.ne.s32.totalorder %s160, %s163
    %p172 = scmp.eq.s32.totalorder %s19, 1
    %p173 = por %p171, %p172
    %p174 = scmp.ne.s32.totalorder %s163, %s164
    %p175 = scmp.eq.s32.totalorder %s19, 0
    %p176 = por %p174, %p175
    %p177 = scmp.ne.s32.totalorder %s163, %s164
    %p178 = scmp.eq.s32.totalorder %s20, 1
    %p179 = por %p177, %p178
    %p181 = scmp.ne.s32.totalorder %s164, %s180
    %p182 = scmp.eq.s32.totalorder %s20, 0
    %p183 = por %p181, %p182
    %s184 = ssub.s32 %s14, %s21
    %p185 = scmp.eq.s32.totalorder %s184, 0
    %s187 = sadd.s32 %s186, 1
    %s188 = scalar_select %p185, %s186, %s187
    %p191 = pneg %p185
    %p192 = scmp.eq.s32.totalorder %s14, 1
    %p193 = por %p191, %p192
    %p194 = scmp.ne.s32.totalorder %s186, %s189
    %p195 = scmp.eq.s32.totalorder %s14, 0
    %p196 = por %p194, %p195
    %p197 = scmp.ne.s32.totalorder %s186, %s189
    %p198 = scmp.eq.s32.totalorder %s19, 1
    %p199 = por %p197, %p198
    %p200 = scmp.ne.s32.totalorder %s189, %s190
    %p201 = scmp.eq.s32.totalorder %s19, 0
    %p202 = por %p200, %p201
    %p203 = scmp.ne.s32.totalorder %s189, %s190
    %p204 = scmp.eq.s32.totalorder %s20, 1
    %p205 = por %p203, %p204
    %p207 = scmp.ne.s32.totalorder %s190, %s206
    %p208 = scmp.eq.s32.totalorder %s20, 0
    %p209 = por %p207, %p208
    %p210 = scmp.le.s32.totalorder 1, %s14
    %p211 = scmp.lt.s32.totalorder %s14, 3
    %p212 = pnand %p210, %p211
    %p213 = pneg %p212
    // Predicated region
    $region9: #{bigram_forward.3} parent=5 // pred_check
      _
    $region10: #{bigram_forward.3} parent=5 // pred_check_branch
      %215 = sbr.rel (%p212) target = $region12
    $region11: #{bigram_forward.3} parent=5 // pred_region
      %s216 = ssub.s32 %s14, 1
      // Predicated region
      $region13: #{bigram_forward.3} parent=11 // pred_check
        %p217 = pneg %p61
      $region14: #{bigram_forward.3} parent=11 // pred_check_branch
        %219 = sbr.rel (%p217) target = $region16
      $region15: #{bigram_forward.3} parent=11 // pred_region
        _
      $region16: #{bigram_forward.3} parent=11 // pred_fallthru
        _
      // Predicated region
      $region17: #{bigram_forward.3} parent=11 // pred_check
        %p220 = pneg %p82
      $region18: #{bigram_forward.3} parent=11 // pred_check_branch
        %222 = sbr.rel (%p220) target = $region20
      $region19: #{bigram_forward.3} parent=11 // pred_region
        _
      $region20: #{bigram_forward.3} parent=11 // pred_fallthru
        _
      // Predicated region
      $region21: #{bigram_forward.3} parent=11 // pred_check
        %p223 = pneg %p103
      $region22: #{bigram_forward.3} parent=11 // pred_check_branch
        %225 = sbr.rel (%p223) target = $region24
      $region23: #{bigram_forward.3} parent=11 // pred_region
        _
      $region24: #{bigram_forward.3} parent=11 // pred_fallthru
        _
      // Predicated region
      $region25: #{bigram_forward.3} parent=11 // pred_check
        %p226 = pneg %p124
      $region26: #{bigram_forward.3} parent=11 // pred_check_branch
        %228 = sbr.rel (%p226) target = $region28
      $region27: #{bigram_forward.3} parent=11 // pred_region
        _
      $region28: #{bigram_forward.3} parent=11 // pred_fallthru
        _
    $region12: #{bigram_forward.3} parent=5 // pred_fallthru
      _
    %p229 = scmp.lt.s32.totalorder %s14, 2
    // Predicated region
    $region29: #{bigram_forward.3} parent=5 // pred_check
      %p230 = pneg %p229
    $region30: #{bigram_forward.3} parent=5 // pred_check_branch
      %232 = sbr.rel (%p230) target = $region32
    $region31: #{bigram_forward.3} parent=5 // pred_region
      // Predicated region
      $region33: #{bigram_forward.3} parent=31 // pred_check
        %p233 = pneg %p34
      $region34: #{bigram_forward.3} parent=31 // pred_check_branch
        %235 = sbr.rel (%p233) target = $region36
      $region35: #{bigram_forward.3} parent=31 // pred_region
        %p236 = scmp.lt.s32.totalorder %s14, 1
        %s237 = scalar_select %p236, %s14, 1
        %s238 = smul.addr %s237, 8
        %s239 = scalar_lea.vmem %s0, %s238
      $region36: #{bigram_forward.3} parent=31 // pred_fallthru
        _
      // Predicated region
      $region37: #{bigram_forward.3} parent=31 // pred_check
        %p240 = pneg %p144
      $region38: #{bigram_forward.3} parent=31 // pred_check_branch
        %242 = sbr.rel (%p240) target = $region40
      $region39: #{bigram_forward.3} parent=31 // pred_region
        %p243 = scmp.lt.s32.totalorder %s14, 1
        %s244 = scalar_select %p243, %s14, 1
        %s245 = smul.addr %s244, 8
        %s246 = scalar_lea.vmem %s5, %s245
      $region40: #{bigram_forward.3} parent=31 // pred_fallthru
        _
    $region32: #{bigram_forward.3} parent=5 // pred_fallthru
      _
    %p247 = scmp.le.s32.totalorder 1, %s14
    %p248 = scmp.lt.s32.totalorder %s14, 3
    %p249 = pnand %p247, %p248
    %p250 = pneg %p249
    // Predicated region
    $region41: #{bigram_forward.3} parent=5 // pred_check
      _
    $region42: #{bigram_forward.3} parent=5 // pred_check_branch
      %252 = sbr.rel (%p249) target = $region44
    $region43: #{bigram_forward.3} parent=5 // pred_region
      %s253 = ssub.s32 %s14, 1
      %p254 = scmp.lt.s32.totalorder %s19, 1
      %s255 = scalar_select %p254, %s19, 1
      %s256 = smul.addr %s255, 8
      %s257 = scalar_lea.vmem %s0, %s256
      %p258 = pneg %p40
      %p259 = pneg %p37
      %p260 = pneg %p61
      %p261 = pneg %p58
      %p262 = pneg %p82
      %p263 = pneg %p79
      %p264 = pneg %p103
      %p265 = pneg %p100
      %p266 = pneg %p124
      %p267 = pneg %p121
      %p268 = scmp.lt.s32.totalorder %s19, 1
      %s269 = scalar_select %p268, %s19, 1
      %s270 = smul.addr %s269, 8
      %s271 = scalar_lea.vmem %s5, %s270
      %p272 = pneg %p150
      %p273 = pneg %p147
      %p274 = pneg %p176
      %p275 = pneg %p173
      %p276 = scmp.lt.s32.totalorder %s19, 1
      %s277 = scalar_select %p276, %s19, 1
      %s278 = smul.addr %s277, 8
      %s279 = scalar_lea.vmem %s6, %s278
      %p280 = pneg %p202
      %p281 = pneg %p199
      %p282 = scmp.lt.s32.totalorder %s19, 1
      %s283 = scalar_select %p282, %s19, 1
      %s284 = smul.addr %s283, 8
      %s285 = scalar_lea.vmem %s7, %s284
      %p286 = scmp.lt.s32.totalorder %s19, 1
      %s287 = scalar_select %p286, %s19, 1
      %s288 = smul.addr %s287, 8
      %s289 = scalar_lea.vmem %s0, %s288
      %p290 = scmp.lt.s32.totalorder %s19, 1
      %s291 = scalar_select %p290, %s19, 1
      %s292 = smul.addr %s291, 8
      %s293 = scalar_lea.vmem %s5, %s292
      %p294 = scmp.lt.s32.totalorder %s19, 1
      %s295 = scalar_select %p294, %s19, 1
      %s296 = smul.addr %s295, 8
      %s297 = scalar_lea.vmem %s6, %s296
      %p298 = scmp.lt.s32.totalorder %s19, 1
      %s299 = scalar_select %p298, %s19, 1
      %s300 = smul.addr %s299, 8
      %s301 = scalar_lea.vmem %s7, %s300
      %v303 = vld [vmem:[%s289] sm:$0xff]
      %v304 = vld [vmem:[%s1] sm:$0x1]
      %v305 = vld [vmem:[%s2] sm:$0x1]
      %306 = vadd.xlane.f32.xlu0 %v303
      %v307 = vpop.xlane.xlu0 %306
      %v308 = vmul.f32 %v307, 0.03125
      %v309 = vmul.f32 %v303, %v303
      %310 = vadd.xlane.f32.xlu0 %v309
      %v311 = vpop.xlane.xlu0 %310
      %v312 = vmul.f32 %v311, 0.03125
      %v313 = vmul.f32 %v308, %v308
      %v314 = vsub.f32 %v312, %v313
      %v315 = vsub.f32 %v303, %v308
      %v316 = vadd.f32 %v314, 1e-05
      %v317 = vrsqrt.pop %v316
      %v318 = vmul.f32 %v315, %v317
      %v320 = vlaneseq
      %v321 = vshrl.u32 %v320, 7
      %v322 = vsub.s32 0, %v321
      %v323 = vrot.slane %v304, %v322
      %v325 = vmul.f32 %v318, %v323
      %v327 = vlaneseq
      %v328 = vshrl.u32 %v327, 7
      %v329 = vsub.s32 0, %v328
      %v330 = vrot.slane %v305, %v329
      %v332 = vadd.f32 %v325, %v330
      %v333 = vpack.c.bf16 %v332, %v332
      %v334 = vld [vmem:[%s3] sm:$0xf]
      %v335 = vld [vmem:[%s3 + $0x4] sm:$0xf]
      %v336 = vld [vmem:[%s3 + $0x8] sm:$0xf]
      %v337 = vld [vmem:[%s3 + $0xc] sm:$0xf]
      %v338 = vld [vmem:[%s3 + $0x10] sm:$0xf]
      %v339 = vld [vmem:[%s3 + $0x14] sm:$0xf]
      %v340 = vld [vmem:[%s3 + $0x18] sm:$0xf]
      %v341 = vld [vmem:[%s3 + $0x1c] sm:$0xf]
      %v342 = vld [vmem:[%s3 + $0x20] sm:$0xf]
      %v343 = vld [vmem:[%s3 + $0x24] sm:$0xf]
      %v344 = vld [vmem:[%s3 + $0x28] sm:$0xf]
      %v345 = vld [vmem:[%s3 + $0x2c] sm:$0xf]
      %v346 = vld [vmem:[%s3 + $0x30] sm:$0xf]
      %v347 = vld [vmem:[%s3 + $0x34] sm:$0xf]
      %v348 = vld [vmem:[%s3 + $0x38] sm:$0xf]
      %v349 = vld [vmem:[%s3 + $0x3c] sm:$0xf]
      %v350 = vld [vmem:[%s4] sm:$0x1]
      %v352 = vlaneseq
      %v353 = vshrl.u32 %v352, 7
      %v354 = vsub.s32 0, %v353
      %v355 = vrot.slane %v350, %v354
      %v373 = vunpack.c.l.b16 %v334
      %v374 = vunpack.c.l.b16 %v335
      %v375 = vunpack.c.l.b16 %v336
      %v376 = vunpack.c.l.b16 %v337
      %v377 = vunpack.c.l.b16 %v338
      %v378 = vunpack.c.l.b16 %v339
      %v379 = vunpack.c.l.b16 %v340
      %v380 = vunpack.c.l.b16 %v341
      %v381 = vunpack.c.l.b16 %v342
      %v382 = vunpack.c.l.b16 %v343
      %v383 = vunpack.c.l.b16 %v344
      %v384 = vunpack.c.l.b16 %v345
      %v385 = vunpack.c.l.b16 %v346
      %v386 = vunpack.c.l.b16 %v347
      %v387 = vunpack.c.l.b16 %v348
      %v388 = vunpack.c.l.b16 %v349
      %v389 = vpack.c.b16 %v374, %v373
      %v390 = vpack.c.b16 %v376, %v375
      %v391 = vpack.c.b16 %v378, %v377
      %v392 = vpack.c.b16 %v380, %v379
      %v393 = vpack.c.b16 %v382, %v381
      %v394 = vpack.c.b16 %v384, %v383
      %v395 = vpack.c.b16 %v386, %v385
      %v396 = vpack.c.b16 %v388, %v387
      %405 = vmatprep.subr.bf16.mxu0 0
      %406 = vmatpush1.bf16.msra.mxu0 %v389
      %407 = vmatprep.subr.bf16.mxu0 0
      %408 = vmatpush1.bf16.msra.mxu0 %v390
      %409 = vmatprep.subr.bf16.mxu0 0
      %410 = vmatpush1.bf16.msra.mxu0 %v391
      %411 = vmatprep.subr.bf16.mxu0 0
      %412 = vmatpush1.bf16.msra.mxu0 %v392
      %413 = vmatprep.subr.bf16.mxu0 0
      %414 = vmatpush1.bf16.msra.mxu0 %v393
      %415 = vmatprep.subr.bf16.mxu0 0
      %416 = vmatpush1.bf16.msra.mxu0 %v394
      %417 = vmatprep.subr.bf16.mxu0 0
      %418 = vmatpush1.bf16.msra.mxu0 %v395
      %419 = vmatprep.subr.bf16.mxu0 0
      %420 = vmatpush1.bf16.msra.mxu0 %v396
      %421 = vmatprep.subr.bf16.mxu0 0
      %422 = vmatpush1.bf16.msra.mxu0 0
      %423 = vmatprep.subr.bf16.mxu0 0
      %424 = vmatpush1.bf16.msra.mxu0 0
      %425 = vmatprep.subr.bf16.mxu0 0
      %426 = vmatpush1.bf16.msra.mxu0 0
      %427 = vmatprep.subr.bf16.mxu0 0
      %428 = vmatpush1.bf16.msra.mxu0 0
      %429 = vmatprep.subr.bf16.mxu0 0
      %430 = vmatpush1.bf16.msra.mxu0 0
      %431 = vmatprep.subr.bf16.mxu0 0
      %432 = vmatpush1.bf16.msra.mxu0 0
      %433 = vmatprep.subr.bf16.mxu0 0
      %434 = vmatpush1.bf16.msra.mxu0 0
      %435 = vmatprep.subr.bf16.mxu0 0
      %436 = vmatpush1.bf16.msra.mxu0 0
      %437 = vmatprep.mubr.bf16.mxu0 0
      %438 = vmatmul.mubr.bf16.gmra.mrb[0].mxu0 %v333
      %v439 = vpop.f32.mrb[0].mxu0
      %v440 = vadd.f32 %v355, %v439
      %v441 = vpop.f32.mrb[0].mxu0
      %v442 = vpop.f32.mrb[0].mxu0
      %v443 = vpop.f32.mrb[0].mxu0
      %444 = vdwg.mxu0
      %445 = vst [vmem:[%s297] sm:$0xff] %v440
      %v446 = vlaneseq
      %v447 = vand.u32 %v446, 127
      %vm448 = vcmp.lt.s32.totalorder %v447, 32
      %v449 = vsel %vm448, %v440, -1e+30
      %450 = vmax.xlane.f32.xlu0 %v449
      %v451 = vpop.xlane.xlu0 %450
      %v452 = vsub.f32 %v449, %v451
      %v453 = vmul.f32 %v452, 1.442695
      %v454 = vpow.pop %v453
      %455 = vadd.xlane.f32.xlu0 %v454
      %v456 = vpop.xlane.xlu0 %455
      %v457 = vlog2.pop %v456
      %v458 = vmul.f32 %v457, 0.6931472
      %v459 = vadd.f32 %v451, %v458
      %v460 = vld [vmem:[%s293] sm:$0xff]
      %461 = vset.pattern.permute.xlu0 0
      %462 = vperm.xlu0 %461, %v460
      %v463 = vpop.permute.xlu0 %462
      %vm464 = vcmp.eq.s32.totalorder %v447, %v463
      %v465 = vsel %vm464, %v440, 0.0
      %466 = vadd.xlane.f32.xlu0 %v465
      %v467 = vpop.xlane.xlu0 %466
      %v468 = vsub.f32 %v459, %v467
      %vm469 = vcmask 7168
      %470 = vst.msk [vmem:[%s301] sm:$0xff] %vm469, %v468
      %p471 = scmp.lt.s32.totalorder %s19, 1
      %s472 = scalar_select %p471, %s19, 1
      %s473 = smul.addr %s472, 8
      %s474 = scalar_lea.vmem %s6, %s473
      %p475 = scmp.lt.s32.totalorder %s19, 1
      %s476 = scalar_select %p475, %s19, 1
      %s477 = smul.addr %s476, 8
      %s478 = scalar_lea.vmem %s7, %s477
      // Predicated region
      $region45: #{bigram_forward.3} parent=43 // pred_check
        %p479 = pneg %p173
      $region46: #{bigram_forward.3} parent=43 // pred_check_branch
        %481 = sbr.rel (%p479) target = $region48
      $region47: #{bigram_forward.3} parent=43 // pred_region
        _
      $region48: #{bigram_forward.3} parent=43 // pred_fallthru
        _
      // Predicated region
      $region49: #{bigram_forward.3} parent=43 // pred_check
        %p482 = pneg %p199
      $region50: #{bigram_forward.3} parent=43 // pred_check_branch
        %484 = sbr.rel (%p482) target = $region52
      $region51: #{bigram_forward.3} parent=43 // pred_region
        _
      $region52: #{bigram_forward.3} parent=43 // pred_fallthru
        _
    $region44: #{bigram_forward.3} parent=5 // pred_fallthru
      _
    %p485 = scmp.le.s32.totalorder 2, %s14
    // Predicated region
    $region53: #{bigram_forward.3} parent=5 // pred_check
      %p486 = pneg %p485
    $region54: #{bigram_forward.3} parent=5 // pred_check_branch
      %488 = sbr.rel (%p486) target = $region56
    $region55: #{bigram_forward.3} parent=5 // pred_region
      %s489 = ssub.s32 %s14, 2
      // Predicated region
      $region57: #{bigram_forward.3} parent=55 // pred_check
        %p490 = pneg %p179
      $region58: #{bigram_forward.3} parent=55 // pred_check_branch
        %492 = sbr.rel (%p490) target = $region60
      $region59: #{bigram_forward.3} parent=55 // pred_region
        %p493 = scmp.lt.s32.totalorder %s20, 1
        %s494 = scalar_select %p493, %s20, 1
        %s495 = smul.addr %s494, 8
        %s496 = scalar_lea.vmem %s6, %s495
      $region60: #{bigram_forward.3} parent=55 // pred_fallthru
        _
      // Predicated region
      $region61: #{bigram_forward.3} parent=55 // pred_check
        %p497 = pneg %p205
      $region62: #{bigram_forward.3} parent=55 // pred_check_branch
        %499 = sbr.rel (%p497) target = $region64
      $region63: #{bigram_forward.3} parent=55 // pred_region
        %p500 = scmp.lt.s32.totalorder %s20, 1
        %s501 = scalar_select %p500, %s20, 1
        %s502 = smul.addr %s501, 8
        %s503 = scalar_lea.vmem %s7, %s502
      $region64: #{bigram_forward.3} parent=55 // pred_fallthru
        _
    $region56: #{bigram_forward.3} parent=5 // pred_fallthru
      _
  $region6: #{bigram_forward.3} parent=0 // loop_footer
    %s18 = sadd.s32 1, %s14
  $region7: #{bigram_forward.3} parent=0 // loop_footer_branch
    %13 = sbr.rel target = $region3
  $region8: #{bigram_forward.3} parent=0 // loop_exit
    _

// kernel: bigram_forward.2
$region0: #{bigram_forward.2}
  #allocation0 [shape = 'u32[]', space=smem, size = 0x4, offset = 0x4, fixed_abs, tag = 'smem constant byte address 0x4 - core index']
  #allocation1 [shape = 'u32[144,128]{1,0:T(1,128)}', space=vmem, size = 0x12000, scoped, tag = 'internal scratch']
  %s0 = inlined_call_operand.vmem [shape: f32[16,128], index: 0, kind: input, shape index: {}, may-alias: {0,12}]
  %s1 = inlined_call_operand.vmem [shape: f32[2,1,128], index: 1, kind: input, shape index: {}]
  %s2 = inlined_call_operand.vmem [shape: f32[2,1,128], index: 2, kind: input, shape index: {}]
  %s3 = inlined_call_operand.hbm [shape: bf16[2,128,1536], index: 3, kind: input, shape index: {}]
  %s4 = inlined_call_operand.hbm [shape: bf16[2,512,128], index: 4, kind: input, shape index: {}]
  %s5 = inlined_call_operand.vmem [shape: f32[2,1,128], index: 5, kind: input, shape index: {}]
  %s6 = inlined_call_operand.vmem [shape: f32[2,1,128], index: 6, kind: input, shape index: {}]
  %s7 = inlined_call_operand.vmem [shape: f32[2,1,128], index: 7, kind: input, shape index: {}]
  %s8 = inlined_call_operand.vmem [shape: bf16[2,128,128], index: 8, kind: input, shape index: {}]
  %s9 = inlined_call_operand.vmem [shape: f32[2,1,128], index: 9, kind: input, shape index: {}]
  %s10 = inlined_call_operand.hbm [shape: bf16[2,128,128], index: 10, kind: input, shape index: {}]
  %s11 = inlined_call_operand.vmem [shape: f32[2,1,128], index: 11, kind: input, shape index: {}]
  %s12 = inlined_call_operand.vmem [shape: f32[16,128], index: 12, kind: output, shape index: {}, may-alias: {0,12}]
  %s13 = sld [smem:[#allocation0]]
  $region93: #{bigram_forward.2} parent=0
    _
  %s15 = ssub.s32 1, %s13
  %s16 = scalar_select 0, %s15, %s13
  $region1: #{bigram_forward.2} parent=0
    #allocation2 [shape = 'u8[786432]{0}', space=vmem, size = 0xc0000, scoped, tag = 'input window, operand 3, single buffered']
    #allocation3 [shape = 's32[2]{0}', space=sflag, size = 0x8, scoped, tag = 'scoped memory for bigram_forward.2']
    #allocation4 [shape = 'u8[262144]{0}', space=vmem, size = 0x40000, scoped, tag = 'input window, operand 4, single buffered']
    #allocation5 [shape = 's32[1]{0}', space=sflag, size = 0x4, scoped, tag = 'scoped memory for bigram_forward.2']
    #allocation6 [shape = 'u8[65536]{0}', space=vmem, size = 0x10000, scoped, tag = 'input window, operand 10, single buffered']
    %17 = vsyncpa [#allocation3], 0
    %18 = vsyncpa [#allocation5], 0
    loop: start=0, step=1, limit=4
    $region2: #{bigram_forward.2} parent=1 // loop_pre_header
      _
    $region3: #{bigram_forward.2} parent=1 // loop_header
      %s20 = sphi 0, %s24
      %p21 = scmp.ge.s32.totalorder %s20, 4
      %s30 = sphi 0, %s32
      %s33 = sphi 0, %s30
      %s34 = sphi 0, %s33
      %s50 = sphi 0, %s34
      %s54 = sphi 0, %s54
      %s56 = sphi 0, %s54
      %s57 = sphi 0, %s56
      %s71 = sphi 0, %s57
      %s75 = sphi 0, %s75
      %s77 = sphi 0, %s75
      %s78 = sphi 0, %s77
      %s92 = sphi 0, %s78
      %s96 = sphi 0, %s96
      %s98 = sphi 0, %s96
      %s99 = sphi 0, %s98
      %s113 = sphi 0, %s99
      %s117 = sphi 0, %s117
      %s119 = sphi 0, %s117
      %s120 = sphi 0, %s119
      %s134 = sphi 0, %s120
      %s138 = sphi 0, %s138
      %s140 = sphi 0, %s138
      %s141 = sphi 0, %s140
      %s155 = sphi 0, %s141
      %s159 = sphi 0, %s159
      %s161 = sphi 0, %s159
      %s162 = sphi 0, %s161
      %s176 = sphi 0, %s162
      %s180 = sphi 0, %s180
      %s182 = sphi 0, %s180
      %s183 = sphi 0, %s182
      %s197 = sphi 0, %s183
      %s201 = sphi 0, %s201
      %s203 = sphi 0, %s201
      %s204 = sphi 0, %s203
      %s218 = sphi 0, %s204
      %s222 = sphi 0, %s222
      %s224 = sphi 0, %s222
      %s225 = sphi 0, %s224
      %s239 = sphi 0, %s225
      %s243 = sphi 0, %s243
      %s245 = sphi 0, %s243
      %s246 = sphi 0, %s245
      %s260 = sphi 0, %s246
      %s264 = sphi 0, %s264
      %s266 = sphi 0, %s264
      %s267 = sphi 0, %s266
      %s281 = sphi 0, %s267
      %s287 = sphi 0, %s289
      %s290 = sphi 0, %s287
      %s291 = sphi 0, %s290
      %s307 = sphi 0, %s291
    $region4: #{bigram_forward.2} parent=1 // loop_header_branch
      %23 = sbr.rel (%p21) target = $region8
    $region5: #{bigram_forward.2} parent=1 // loop_body
      %s25 = ssub.s32 %s20, 1
      %s26 = ssub.s32 %s20, 2
      %s27 = sadd.s32 %s20, 1
      %s28 = ssub.s32 %s20, %s27
      %p29 = scmp.eq.s32.totalorder %s28, 0
      %s31 = sadd.s32 %s30, 1
      %s32 = scalar_select %p29, %s30, %s31
      %p35 = pneg %p29
      %p36 = scmp.eq.s32.totalorder %s20, 1
      %p37 = por %p35, %p36
      %p38 = scmp.ne.s32.totalorder %s30, %s33
      %p39 = scmp.eq.s32.totalorder %s20, 0
      %p40 = por %p38, %p39
      %p41 = scmp.ne.s32.totalorder %s30, %s33
      %p42 = scmp.eq.s32.totalorder %s25, 1
      %p43 = por %p41, %p42
      %p44 = scmp.ne.s32.totalorder %s33, %s34
      %p45 = scmp.eq.s32.totalorder %s25, 0
      %p46 = por %p44, %p45
      %p47 = scmp.ne.s32.totalorder %s33, %s34
      %p48 = scmp.eq.s32.totalorder %s26, 1
      %p49 = por %p47, %p48
      %p51 = scmp.ne.s32.totalorder %s34, %s50
      %p52 = scmp.eq.s32.totalorder %s26, 0
      %p53 = por %p51, %p52
      %s55 = sadd.s32 %s54, 1
      %p58 = scmp.eq.s32.totalorder %s20, 1
      %p59 = scmp.ne.s32.totalorder %s54, %s56
      %p60 = scmp.eq.s32.totalorder %s20, 0
      %p61 = por %p59, %p60
      %p62 = scmp.ne.s32.totalorder %s54, %s56
      %p63 = scmp.eq.s32.totalorder %s25, 1
      %p64 = por %p62, %p63
      %p65 = scmp.ne.s32.totalorder %s56, %s57
      %p66 = scmp.eq.s32.totalorder %s25, 0
      %p67 = por %p65, %p66
      %p68 = scmp.ne.s32.totalorder %s56, %s57
      %p69 = scmp.eq.s32.totalorder %s26, 1
      %p70 = por %p68, %p69
      %p72 = scmp.ne.s32.totalorder %s57, %s71
      %p73 = scmp.eq.s32.totalorder %s26, 0
      %p74 = por %p72, %p73
      %s76 = sadd.s32 %s75, 1
      %p79 = scmp.eq.s32.totalorder %s20, 1
      %p80 = scmp.ne.s32.totalorder %s75, %s77
      %p81 = scmp.eq.s32.totalorder %s20, 0
      %p82 = por %p80, %p81
      %p83 = scmp.ne.s32.totalorder %s75, %s77
      %p84 = scmp.eq.s32.totalorder %s25, 1
      %p85 = por %p83, %p84
      %p86 = scmp.ne.s32.totalorder %s77, %s78
      %p87 = scmp.eq.s32.totalorder %s25, 0
      %p88 = por %p86, %p87
      %p89 = scmp.ne.s32.totalorder %s77, %s78
      %p90 = scmp.eq.s32.totalorder %s26, 1
      %p91 = por %p89, %p90
      %p93 = scmp.ne.s32.totalorder %s78, %s92
      %p94 = scmp.eq.s32.totalorder %s26, 0
      %p95 = por %p93, %p94
      %s97 = sadd.s32 %s96, 1
      %p100 = scmp.eq.s32.totalorder %s20, 1
      %p101 = scmp.ne.s32.totalorder %s96, %s98
      %p102 = scmp.eq.s32.totalorder %s20, 0
      %p103 = por %p101, %p102
      %p104 = scmp.ne.s32.totalorder %s96, %s98
      %p105 = scmp.eq.s32.totalorder %s25, 1
      %p106 = por %p104, %p105
      %p107 = scmp.ne.s32.totalorder %s98, %s99
      %p108 = scmp.eq.s32.totalorder %s25, 0
      %p109 = por %p107, %p108
      %p110 = scmp.ne.s32.totalorder %s98, %s99
      %p111 = scmp.eq.s32.totalorder %s26, 1
      %p112 = por %p110, %p111
      %p114 = scmp.ne.s32.totalorder %s99, %s113
      %p115 = scmp.eq.s32.totalorder %s26, 0
      %p116 = por %p114, %p115
      %s118 = sadd.s32 %s117, 1
      %p121 = scmp.eq.s32.totalorder %s20, 1
      %p122 = scmp.ne.s32.totalorder %s117, %s119
      %p123 = scmp.eq.s32.totalorder %s20, 0
      %p124 = por %p122, %p123
      %p125 = scmp.ne.s32.totalorder %s117, %s119
      %p126 = scmp.eq.s32.totalorder %s25, 1
      %p127 = por %p125, %p126
      %p128 = scmp.ne.s32.totalorder %s119, %s120
      %p129 = scmp.eq.s32.totalorder %s25, 0
      %p130 = por %p128, %p129
      %p131 = scmp.ne.s32.totalorder %s119, %s120
      %p132 = scmp.eq.s32.totalorder %s26, 1
      %p133 = por %p131, %p132
      %p135 = scmp.ne.s32.totalorder %s120, %s134
      %p136 = scmp.eq.s32.totalorder %s26, 0
      %p137 = por %p135, %p136
      %s139 = sadd.s32 %s138, 1
      %p142 = scmp.eq.s32.totalorder %s20, 1
      %p143 = scmp.ne.s32.totalorder %s138, %s140
      %p144 = scmp.eq.s32.totalorder %s20, 0
      %p145 = por %p143, %p144
      %p146 = scmp.ne.s32.totalorder %s138, %s140
      %p147 = scmp.eq.s32.totalorder %s25, 1
      %p148 = por %p146, %p147
      %p149 = scmp.ne.s32.totalorder %s140, %s141
      %p150 = scmp.eq.s32.totalorder %s25, 0
      %p151 = por %p149, %p150
      %p152 = scmp.ne.s32.totalorder %s140, %s141
      %p153 = scmp.eq.s32.totalorder %s26, 1
      %p154 = por %p152, %p153
      %p156 = scmp.ne.s32.totalorder %s141, %s155
      %p157 = scmp.eq.s32.totalorder %s26, 0
      %p158 = por %p156, %p157
      %s160 = sadd.s32 %s159, 1
      %p163 = scmp.eq.s32.totalorder %s20, 1
      %p164 = scmp.ne.s32.totalorder %s159, %s161
      %p165 = scmp.eq.s32.totalorder %s20, 0
      %p166 = por %p164, %p165
      %p167 = scmp.ne.s32.totalorder %s159, %s161
      %p168 = scmp.eq.s32.totalorder %s25, 1
      %p169 = por %p167, %p168
      %p170 = scmp.ne.s32.totalorder %s161, %s162
      %p171 = scmp.eq.s32.totalorder %s25, 0
      %p172 = por %p170, %p171
      %p173 = scmp.ne.s32.totalorder %s161, %s162
      %p174 = scmp.eq.s32.totalorder %s26, 1
      %p175 = por %p173, %p174
      %p177 = scmp.ne.s32.totalorder %s162, %s176
      %p178 = scmp.eq.s32.totalorder %s26, 0
      %p179 = por %p177, %p178
      %s181 = sadd.s32 %s180, 1
      %p184 = scmp.eq.s32.totalorder %s20, 1
      %p185 = scmp.ne.s32.totalorder %s180, %s182
      %p186 = scmp.eq.s32.totalorder %s20, 0
      %p187 = por %p185, %p186
      %p188 = scmp.ne.s32.totalorder %s180, %s182
      %p189 = scmp.eq.s32.totalorder %s25, 1
      %p190 = por %p188, %p189
      %p191 = scmp.ne.s32.totalorder %s182, %s183
      %p192 = scmp.eq.s32.totalorder %s25, 0
      %p193 = por %p191, %p192
      %p194 = scmp.ne.s32.totalorder %s182, %s183
      %p195 = scmp.eq.s32.totalorder %s26, 1
      %p196 = por %p194, %p195
      %p198 = scmp.ne.s32.totalorder %s183, %s197
      %p199 = scmp.eq.s32.totalorder %s26, 0
      %p200 = por %p198, %p199
      %s202 = sadd.s32 %s201, 1
      %p205 = scmp.eq.s32.totalorder %s20, 1
      %p206 = scmp.ne.s32.totalorder %s201, %s203
      %p207 = scmp.eq.s32.totalorder %s20, 0
      %p208 = por %p206, %p207
      %p209 = scmp.ne.s32.totalorder %s201, %s203
      %p210 = scmp.eq.s32.totalorder %s25, 1
      %p211 = por %p209, %p210
      %p212 = scmp.ne.s32.totalorder %s203, %s204
      %p213 = scmp.eq.s32.totalorder %s25, 0
      %p214 = por %p212, %p213
      %p215 = scmp.ne.s32.totalorder %s203, %s204
      %p216 = scmp.eq.s32.totalorder %s26, 1
      %p217 = por %p215, %p216
      %p219 = scmp.ne.s32.totalorder %s204, %s218
      %p220 = scmp.eq.s32.totalorder %s26, 0
      %p221 = por %p219, %p220
      %s223 = sadd.s32 %s222, 1
      %p226 = scmp.eq.s32.totalorder %s20, 1
      %p227 = scmp.ne.s32.totalorder %s222, %s224
      %p228 = scmp.eq.s32.totalorder %s20, 0
      %p229 = por %p227, %p228
      %p230 = scmp.ne.s32.totalorder %s222, %s224
      %p231 = scmp.eq.s32.totalorder %s25, 1
      %p232 = por %p230, %p231
      %p233 = scmp.ne.s32.totalorder %s224, %s225
      %p234 = scmp.eq.s32.totalorder %s25, 0
      %p235 = por %p233, %p234
      %p236 = scmp.ne.s32.totalorder %s224, %s225
      %p237 = scmp.eq.s32.totalorder %s26, 1
      %p238 = por %p236, %p237
      %p240 = scmp.ne.s32.totalorder %s225, %s239
      %p241 = scmp.eq.s32.totalorder %s26, 0
      %p242 = por %p240, %p241
      %s244 = sadd.s32 %s243, 1
      %p247 = scmp.eq.s32.totalorder %s20, 1
      %p248 = scmp.ne.s32.totalorder %s243, %s245
      %p249 = scmp.eq.s32.totalorder %s20, 0
      %p250 = por %p248, %p249
      %p251 = scmp.ne.s32.totalorder %s243, %s245
      %p252 = scmp.eq.s32.totalorder %s25, 1
      %p253 = por %p251, %p252
      %p254 = scmp.ne.s32.totalorder %s245, %s246
      %p255 = scmp.eq.s32.totalorder %s25, 0
      %p256 = por %p254, %p255
      %p257 = scmp.ne.s32.totalorder %s245, %s246
      %p258 = scmp.eq.s32.totalorder %s26, 1
      %p259 = por %p257, %p258
      %p261 = scmp.ne.s32.totalorder %s246, %s260
      %p262 = scmp.eq.s32.totalorder %s26, 0
      %p263 = por %p261, %p262
      %s265 = sadd.s32 %s264, 1
      %p268 = scmp.eq.s32.totalorder %s20, 1
      %p269 = scmp.ne.s32.totalorder %s264, %s266
      %p270 = scmp.eq.s32.totalorder %s20, 0
      %p271 = por %p269, %p270
      %p272 = scmp.ne.s32.totalorder %s264, %s266
      %p273 = scmp.eq.s32.totalorder %s25, 1
      %p274 = por %p272, %p273
      %p275 = scmp.ne.s32.totalorder %s266, %s267
      %p276 = scmp.eq.s32.totalorder %s25, 0
      %p277 = por %p275, %p276
      %p278 = scmp.ne.s32.totalorder %s266, %s267
      %p279 = scmp.eq.s32.totalorder %s26, 1
      %p280 = por %p278, %p279
      %p282 = scmp.ne.s32.totalorder %s267, %s281
      %p283 = scmp.eq.s32.totalorder %s26, 0
      %p284 = por %p282, %p283
      %s285 = ssub.s32 %s20, %s27
      %p286 = scmp.eq.s32.totalorder %s285, 0
      %s288 = sadd.s32 %s287, 1
      %s289 = scalar_select %p286, %s287, %s288
      %p292 = pneg %p286
      %p293 = scmp.eq.s32.totalorder %s20, 1
      %p294 = por %p292, %p293
      %p295 = scmp.ne.s32.totalorder %s287, %s290
      %p296 = scmp.eq.s32.totalorder %s20, 0
      %p297 = por %p295, %p296
      %p298 = scmp.ne.s32.totalorder %s287, %s290
      %p299 = scmp.eq.s32.totalorder %s25, 1
      %p300 = por %p298, %p299
      %p301 = scmp.ne.s32.totalorder %s290, %s291
      %p302 = scmp.eq.s32.totalorder %s25, 0
      %p303 = por %p301, %p302
      %p304 = scmp.ne.s32.totalorder %s290, %s291
      %p305 = scmp.eq.s32.totalorder %s26, 1
      %p306 = por %p304, %p305
      %p308 = scmp.ne.s32.totalorder %s291, %s307
      %p309 = scmp.eq.s32.totalorder %s26, 0
      %p310 = por %p308, %p309
      %p311 = scmp.le.s32.totalorder 1, %s20
      %p312 = scmp.lt.s32.totalorder %s20, 3
      %p313 = pnand %p311, %p312
      %p314 = pneg %p313
      // Predicated region
      $region9: #{bigram_forward.2} parent=5 // pred_check
        _
      $region10: #{bigram_forward.2} parent=5 // pred_check_branch
        %316 = sbr.rel (%p313) target = $region12
      $region11: #{bigram_forward.2} parent=5 // pred_region
        %s317 = ssub.s32 %s20, 1
        // Predicated region
        $region13: #{bigram_forward.2} parent=11 // pred_check
          %p318 = pneg %p67
        $region14: #{bigram_forward.2} parent=11 // pred_check_branch
          %320 = sbr.rel (%p318) target = $region16
        $region15: #{bigram_forward.2} parent=11 // pred_region
          _
        $region16: #{bigram_forward.2} parent=11 // pred_fallthru
          _
        // Predicated region
        $region17: #{bigram_forward.2} parent=11 // pred_check
          %p321 = pneg %p88
        $region18: #{bigram_forward.2} parent=11 // pred_check_branch
          %323 = sbr.rel (%p321) target = $region20
        $region19: #{bigram_forward.2} parent=11 // pred_region
          _
        $region20: #{bigram_forward.2} parent=11 // pred_fallthru
          _
        // Predicated region
        $region21: #{bigram_forward.2} parent=11 // pred_check
          %p324 = pneg %p109
        $region22: #{bigram_forward.2} parent=11 // pred_check_branch
          %326 = sbr.rel (%p324) target = $region24
        $region23: #{bigram_forward.2} parent=11 // pred_region
          %s328 = ssub.s32 24576, 24576
          %329 = vsyncadd [#allocation3], %s328
          %s330 = sshll.u32 [#allocation2], 4
          %s331 = int_to_ptr.vmem [resolvable:$true] %s330
          %336 = dma.hbm_to_vmem [thread:$0]  %s3, 24576, %s331, [#allocation3], 768, 768, 48
        $region24: #{bigram_forward.2} parent=11 // pred_fallthru
          _
        // Predicated region
        $region25: #{bigram_forward.2} parent=11 // pred_check
          %p337 = pneg %p130
        $region26: #{bigram_forward.2} parent=11 // pred_check_branch
          %339 = sbr.rel (%p337) target = $region28
        $region27: #{bigram_forward.2} parent=11 // pred_region
          %s341 = ssub.s32 8192, 8192
          %342 = vsyncadd [#allocation5], %s341
          %s343 = sshll.u32 [#allocation4], 4
          %s344 = int_to_ptr.vmem [resolvable:$true] %s343
          %349 = dma.hbm_to_vmem [thread:$0]  %s4, 8192, %s344, [#allocation5], 64, 64, 4
        $region28: #{bigram_forward.2} parent=11 // pred_fallthru
          _
        // Predicated region
        $region29: #{bigram_forward.2} parent=11 // pred_check
          %p350 = pneg %p151
        $region30: #{bigram_forward.2} parent=11 // pred_check_branch
          %352 = sbr.rel (%p350) target = $region32
        $region31: #{bigram_forward.2} parent=11 // pred_region
          _
        $region32: #{bigram_forward.2} parent=11 // pred_fallthru
          _
        // Predicated region
        $region33: #{bigram_forward.2} parent=11 // pred_check
          %p353 = pneg %p172
        $region34: #{bigram_forward.2} parent=11 // pred_check_branch
          %355 = sbr.rel (%p353) target = $region36
        $region35: #{bigram_forward.2} parent=11 // pred_region
          _
        $region36: #{bigram_forward.2} parent=11 // pred_fallthru
          _
        // Predicated region
        $region37: #{bigram_forward.2} parent=11 // pred_check
          %p356 = pneg %p193
        $region38: #{bigram_forward.2} parent=11 // pred_check_branch
          %358 = sbr.rel (%p356) target = $region40
        $region39: #{bigram_forward.2} parent=11 // pred_region
          _
        $region40: #{bigram_forward.2} parent=11 // pred_fallthru
          _
        // Predicated region
        $region41: #{bigram_forward.2} parent=11 // pred_check
          %p359 = pneg %p214
        $region42: #{bigram_forward.2} parent=11 // pred_check_branch
          %361 = sbr.rel (%p359) target = $region44
        $region43: #{bigram_forward.2} parent=11 // pred_region
          _
        $region44: #{bigram_forward.2} parent=11 // pred_fallthru
          _
        // Predicated region
        $region45: #{bigram_forward.2} parent=11 // pred_check
          %p362 = pneg %p235
        $region46: #{bigram_forward.2} parent=11 // pred_check_branch
          %364 = sbr.rel (%p362) target = $region48
        $region47: #{bigram_forward.2} parent=11 // pred_region
          _
        $region48: #{bigram_forward.2} parent=11 // pred_fallthru
          _
        // Predicated region
        $region49: #{bigram_forward.2} parent=11 // pred_check
          %p365 = pneg %p256
        $region50: #{bigram_forward.2} parent=11 // pred_check_branch
          %367 = sbr.rel (%p365) target = $region52
        $region51: #{bigram_forward.2} parent=11 // pred_region
          %s369 = ssub.s32 2048, 2048
          %370 = vsyncadd [#allocation5], %s369
          %s371 = sshll.u32 [#allocation6], 4
          %s372 = int_to_ptr.vmem [resolvable:$true] %s371
          %377 = dma.hbm_to_vmem [thread:$0]  %s10, 2048, %s372, [#allocation5], 64, 64, 4
        $region52: #{bigram_forward.2} parent=11 // pred_fallthru
          _
        // Predicated region
        $region53: #{bigram_forward.2} parent=11 // pred_check
          %p378 = pneg %p277
        $region54: #{bigram_forward.2} parent=11 // pred_check_branch
          %380 = sbr.rel (%p378) target = $region56
        $region55: #{bigram_forward.2} parent=11 // pred_region
          _
        $region56: #{bigram_forward.2} parent=11 // pred_fallthru
          _
      $region12: #{bigram_forward.2} parent=5 // pred_fallthru
        _
      %p381 = scmp.lt.s32.totalorder %s20, 2
      // Predicated region
      $region57: #{bigram_forward.2} parent=5 // pred_check
        %p382 = pneg %p381
      $region58: #{bigram_forward.2} parent=5 // pred_check_branch
        %384 = sbr.rel (%p382) target = $region60
      $region59: #{bigram_forward.2} parent=5 // pred_region
        // Predicated region
        $region61: #{bigram_forward.2} parent=59 // pred_check
          %p385 = pneg %p40
        $region62: #{bigram_forward.2} parent=59 // pred_check_branch
          %387 = sbr.rel (%p385) target = $region64
        $region63: #{bigram_forward.2} parent=59 // pred_region
          %p388 = scmp.lt.s32.totalorder %s20, 1
          %s389 = scalar_select %p388, %s20, 1
          %s390 = smul.addr %s389, 8
          %s391 = scalar_lea.vmem %s0, %s390
        $region64: #{bigram_forward.2} parent=59 // pred_fallthru
          _
      $region60: #{bigram_forward.2} parent=5 // pred_fallthru
        _
      %p392 = scmp.le.s32.totalorder 1, %s20
      %p393 = scmp.lt.s32.totalorder %s20, 3
      %p394 = pnand %p392, %p393
      %p395 = pneg %p394
      // Predicated region
      $region65: #{bigram_forward.2} parent=5 // pred_check
        _
      $region66: #{bigram_forward.2} parent=5 // pred_check_branch
        %397 = sbr.rel (%p394) target = $region68
      $region67: #{bigram_forward.2} parent=5 // pred_region
        %s398 = ssub.s32 %s20, 1
        // Predicated region
        $region69: #{bigram_forward.2} parent=67 // pred_check
          %p399 = pneg %p109
        $region70: #{bigram_forward.2} parent=67 // pred_check_branch
          %401 = sbr.rel (%p399) target = $region72
        $region71: #{bigram_forward.2} parent=67 // pred_region
          %402 = dma.done [#allocation3], 24576
        $region72: #{bigram_forward.2} parent=67 // pred_fallthru
          _
        // Predicated region
        $region73: #{bigram_forward.2} parent=67 // pred_check
          %p403 = pneg %p130
        $region74: #{bigram_forward.2} parent=67 // pred_check_branch
          %405 = sbr.rel (%p403) target = $region76
        $region75: #{bigram_forward.2} parent=67 // pred_region
          %406 = dma.done [#allocation5], 8192
        $region76: #{bigram_forward.2} parent=67 // pred_fallthru
          _
        // Predicated region
        $region77: #{bigram_forward.2} parent=67 // pred_check
          %p407 = pneg %p256
        $region78: #{bigram_forward.2} parent=67 // pred_check_branch
          %409 = sbr.rel (%p407) target = $region80
        $region79: #{bigram_forward.2} parent=67 // pred_region
          %410 = dma.done [#allocation5], 2048
        $region80: #{bigram_forward.2} parent=67 // pred_fallthru
          _
        %p411 = scmp.lt.s32.totalorder %s25, 1
        %s412 = scalar_select %p411, %s25, 1
        %s413 = smul.addr %s412, 8
        %s414 = scalar_lea.vmem %s0, %s413
        %p415 = pneg %p46
        %p416 = pneg %p43
        %p417 = pneg %p67
        %p418 = pneg %p64
        %p419 = pneg %p88
        %p420 = pneg %p85
        %p421 = pneg %p109
        %p422 = pneg %p106
        %p423 = pneg %p130
        %p424 = pneg %p127
        %p425 = pneg %p151
        %p426 = pneg %p148
        %p427 = pneg %p172
        %p428 = pneg %p169
        %p429 = pneg %p193
        %p430 = pneg %p190
        %p431 = pneg %p214
        %p432 = pneg %p211
        %p433 = pneg %p235
        %p434 = pneg %p232
        %p435 = pneg %p256
        %p436 = pneg %p253
        %p437 = pneg %p277
        %p438 = pneg %p274
        %p439 = pneg %p303
        %p440 = pneg %p300
        %p441 = scmp.lt.s32.totalorder %s25, 1
        %s442 = scalar_select %p441, %s25, 1
        %s443 = smul.addr %s442, 8
        %s444 = scalar_lea.vmem %s12, %s443
        %p445 = scmp.lt.s32.totalorder %s25, 1
        %s446 = scalar_select %p445, %s25, 1
        %s447 = smul.addr %s446, 8
        %s448 = scalar_lea.vmem %s0, %s447
        %p449 = scmp.lt.s32.totalorder %s25, 1
        %s450 = scalar_select %p449, %s25, 1
        %s451 = smul.addr %s450, 8
        %s452 = scalar_lea.vmem %s12, %s451
        %v454 = vld [vmem:[%s448] sm:$0xff]
        %v455 = vlaneseq
        %v456 = vshrl.u32 %v455, 7
        %v457 = vlaneseq
        %v458 = vand.u32 %v457, 127
        %vm459 = vcmp.le.s32.totalorder %v458, %v456
        %v460 = vsel %vm459, 0.0, -1e+30
        %v461 = vld [vmem:[%s1] sm:$0x1]
        %v462 = vld [vmem:[%s2] sm:$0x1]
        %463 = vadd.xlane.f32.xlu0 %v454
        %v464 = vpop.xlane.xlu0 %463
        %v465 = vmul.f32 %v464, 0.03125
        %v466 = vmul.f32 %v454, %v454
        %467 = vadd.xlane.f32.xlu0 %v466
        %v468 = vpop.xlane.xlu0 %467
        %v469 = vmul.f32 %v468, 0.03125
        %v470 = vmul.f32 %v465, %v465
        %v471 = vsub.f32 %v469, %v470
        %v472 = vsub.f32 %v454, %v465
        %v473 = vadd.f32 %v471, 1e-05
        %v474 = vrsqrt.pop %v473
        %v475 = vmul.f32 %v472, %v474
        %v477 = vlaneseq
        %v478 = vshrl.u32 %v477, 7
        %v479 = vsub.s32 0, %v478
        %v480 = vrot.slane %v461, %v479
        %v482 = vmul.f32 %v475, %v480
        %v484 = vlaneseq
        %v485 = vshrl.u32 %v484, 7
        %v486 = vsub.s32 0, %v485
        %v487 = vrot.slane %v462, %v486
        %v489 = vadd.f32 %v482, %v487
        %v490 = vpack.c.bf16 %v489, %v489
        %v491 = vld [vmem:[#allocation2] sm:$0xff]
        %v492 = vld [vmem:[#allocation2 + $0x8] sm:$0xff]
        %v493 = vld [vmem:[#allocation2 + $0x10] sm:$0xff]
        %v494 = vld [vmem:[#allocation2 + $0x18] sm:$0xff]
        %v495 = vld [vmem:[#allocation2 + $0x20] sm:$0xff]
        %v496 = vld [vmem:[#allocation2 + $0x28] sm:$0xff]
        %v497 = vld [vmem:[#allocation2 + $0x30] sm:$0xff]
        %v498 = vld [vmem:[#allocation2 + $0x38] sm:$0xff]
        %v499 = vld [vmem:[#allocation2 + $0x40] sm:$0xff]
        %v500 = vld [vmem:[#allocation2 + $0x48] sm:$0xff]
        %v501 = vld [vmem:[#allocation2 + $0x50] sm:$0xff]
        %v502 = vld [vmem:[#allocation2 + $0x58] sm:$0xff]
        %v503 = vld [vmem:[#allocation2 + $0x60] sm:$0xff]
        %v504 = vld [vmem:[#allocation2 + $0x68] sm:$0xff]
        %v505 = vld [vmem:[#allocation2 + $0x70] sm:$0xff]
        %v506 = vld [vmem:[#allocation2 + $0x78] sm:$0xff]
        %v507 = vld [vmem:[#allocation2 + $0x80] sm:$0xff]
        %v508 = vld [vmem:[#allocation2 + $0x88] sm:$0xff]
        %v509 = vld [vmem:[#allocation2 + $0x90] sm:$0xff]
        %v510 = vld [vmem:[#allocation2 + $0x98] sm:$0xff]
        %v511 = vld [vmem:[#allocation2 + $0xa0] sm:$0xff]
        %v512 = vld [vmem:[#allocation2 + $0xa8] sm:$0xff]
        %v513 = vld [vmem:[#allocation2 + $0xb0] sm:$0xff]
        %v514 = vld [vmem:[#allocation2 + $0xb8] sm:$0xff]
        %v515 = vld [vmem:[#allocation2 + $0xc0] sm:$0xff]
        %v516 = vld [vmem:[#allocation2 + $0xc8] sm:$0xff]
        %v517 = vld [vmem:[#allocation2 + $0xd0] sm:$0xff]
        %v518 = vld [vmem:[#allocation2 + $0xd8] sm:$0xff]
        %v519 = vld [vmem:[#allocation2 + $0xe0] sm:$0xff]
        %v520 = vld [vmem:[#allocation2 + $0xe8] sm:$0xff]
        %v521 = vld [vmem:[#allocation2 + $0xf0] sm:$0xff]
        %v522 = vld [vmem:[#allocation2 + $0xf8] sm:$0xff]
        %v523 = vld [vmem:[#allocation2 + $0x100] sm:$0xff]
        %v524 = vld [vmem:[#allocation2 + $0x108] sm:$0xff]
        %v525 = vld [vmem:[#allocation2 + $0x110] sm:$0xff]
        %v526 = vld [vmem:[#allocation2 + $0x118] sm:$0xff]
        %v527 = vld [vmem:[#allocation2 + $0x120] sm:$0xff]
        %v528 = vld [vmem:[#allocation2 + $0x128] sm:$0xff]
        %v529 = vld [vmem:[#allocation2 + $0x130] sm:$0xff]
        %v530 = vld [vmem:[#allocation2 + $0x138] sm:$0xff]
        %v531 = vld [vmem:[#allocation2 + $0x140] sm:$0xff]
        %v532 = vld [vmem:[#allocation2 + $0x148] sm:$0xff]
        %v533 = vld [vmem:[#allocation2 + $0x150] sm:$0xff]
        %v534 = vld [vmem:[#allocation2 + $0x158] sm:$0xff]
        %v535 = vld [vmem:[#allocation2 + $0x160] sm:$0xff]
        %v536 = vld [vmem:[#allocation2 + $0x168] sm:$0xff]
        %v537 = vld [vmem:[#allocation2 + $0x170] sm:$0xff]
        %v538 = vld [vmem:[#allocation2 + $0x178] sm:$0xff]
        %v539 = vld [vmem:[#allocation2 + $0x180] sm:$0xff]
        %v540 = vld [vmem:[#allocation2 + $0x188] sm:$0xff]
        %v541 = vld [vmem:[#allocation2 + $0x190] sm:$0xff]
        %v542 = vld [vmem:[#allocation2 + $0x198] sm:$0xff]
        %v543 = vld [vmem:[#allocation2 + $0x1a0] sm:$0xff]
        %v544 = vld [vmem:[#allocation2 + $0x1a8] sm:$0xff]
        %v545 = vld [vmem:[#allocation2 + $0x1b0] sm:$0xff]
        %v546 = vld [vmem:[#allocation2 + $0x1b8] sm:$0xff]
        %v547 = vld [vmem:[#allocation2 + $0x1c0] sm:$0xff]
        %v548 = vld [vmem:[#allocation2 + $0x1c8] sm:$0xff]
        %v549 = vld [vmem:[#allocation2 + $0x1d0] sm:$0xff]
        %v550 = vld [vmem:[#allocation2 + $0x1d8] sm:$0xff]
        %v551 = vld [vmem:[#allocation2 + $0x1e0] sm:$0xff]
        %v552 = vld [vmem:[#allocation2 + $0x1e8] sm:$0xff]
        %v553 = vld [vmem:[#allocation2 + $0x1f0] sm:$0xff]
        %v554 = vld [vmem:[#allocation2 + $0x1f8] sm:$0xff]
        %v555 = vld [vmem:[#allocation2 + $0x200] sm:$0xff]
        %v556 = vld [vmem:[#allocation2 + $0x208] sm:$0xff]
        %v557 = vld [vmem:[#allocation2 + $0x210] sm:$0xff]
        %v558 = vld [vmem:[#allocation2 + $0x218] sm:$0xff]
        %v559 = vld [vmem:[#allocation2 + $0x220] sm:$0xff]
        %v560 = vld [vmem:[#allocation2 + $0x228] sm:$0xff]
        %v561 = vld [vmem:[#allocation2 + $0x230] sm:$0xff]
        %v562 = vld [vmem:[#allocation2 + $0x238] sm:$0xff]
        %v563 = vld [vmem:[#allocation2 + $0x240] sm:$0xff]
        %v564 = vld [vmem:[#allocation2 + $0x248] sm:$0xff]
        %v565 = vld [vmem:[#allocation2 + $0x250] sm:$0xff]
        %v566 = vld [vmem:[#allocation2 + $0x258] sm:$0xff]
        %v567 = vld [vmem:[#allocation2 + $0x260] sm:$0xff]
        %v568 = vld [vmem:[#allocation2 + $0x268] sm:$0xff]
        %v569 = vld [vmem:[#allocation2 + $0x270] sm:$0xff]
        %v570 = vld [vmem:[#allocation2 + $0x278] sm:$0xff]
        %v571 = vld [vmem:[#allocation2 + $0x280] sm:$0xff]
        %v572 = vld [vmem:[#allocation2 + $0x288] sm:$0xff]
        %v573 = vld [vmem:[#allocation2 + $0x290] sm:$0xff]
        %v574 = vld [vmem:[#allocation2 + $0x298] sm:$0xff]
        %v575 = vld [vmem:[#allocation2 + $0x2a0] sm:$0xff]
        %v576 = vld [vmem:[#allocation2 + $0x2a8] sm:$0xff]
        %v577 = vld [vmem:[#allocation2 + $0x2b0] sm:$0xff]
        %v578 = vld [vmem:[#allocation2 + $0x2b8] sm:$0xff]
        %v579 = vld [vmem:[#allocation2 + $0x2c0] sm:$0xff]
        %v580 = vld [vmem:[#allocation2 + $0x2c8] sm:$0xff]
        %v581 = vld [vmem:[#allocation2 + $0x2d0] sm:$0xff]
        %v582 = vld [vmem:[#allocation2 + $0x2d8] sm:$0xff]
        %v583 = vld [vmem:[#allocation2 + $0x2e0] sm:$0xff]
        %v584 = vld [vmem:[#allocation2 + $0x2e8] sm:$0xff]
        %v585 = vld [vmem:[#allocation2 + $0x2f0] sm:$0xff]
        %v586 = vld [vmem:[#allocation2 + $0x2f8] sm:$0xff]
        %v683 = vunpack.c.l.b16 %v491
        %v684 = vunpack.c.h.b16 %v491
        %v685 = vunpack.c.l.b16 %v492
        %v686 = vunpack.c.h.b16 %v492
        %v687 = vunpack.c.l.b16 %v493
        %v688 = vunpack.c.h.b16 %v493
        %v689 = vunpack.c.l.b16 %v494
        %v690 = vunpack.c.h.b16 %v494
        %v691 = vunpack.c.l.b16 %v495
        %v692 = vunpack.c.h.b16 %v495
        %v693 = vunpack.c.l.b16 %v496
        %v694 = vunpack.c.h.b16 %v496
        %v695 = vunpack.c.l.b16 %v497
        %v696 = vunpack.c.h.b16 %v497
        %v697 = vunpack.c.l.b16 %v498
        %v698 = vunpack.c.h.b16 %v498
        %v699 = vunpack.c.l.b16 %v499
        %v700 = vunpack.c.h.b16 %v499
        %v701 = vunpack.c.l.b16 %v500
        %v702 = vunpack.c.h.b16 %v500
        %v703 = vunpack.c.l.b16 %v501
        %v704 = vunpack.c.h.b16 %v501
        %v705 = vunpack.c.l.b16 %v502
        %v706 = vunpack.c.h.b16 %v502
        %v707 = vunpack.c.l.b16 %v503
        %v708 = vunpack.c.h.b16 %v503
        %v709 = vunpack.c.l.b16 %v504
        %v710 = vunpack.c.h.b16 %v504
        %v711 = vunpack.c.l.b16 %v505
        %v712 = vunpack.c.h.b16 %v505
        %v713 = vunpack.c.l.b16 %v506
        %v714 = vunpack.c.h.b16 %v506
        %v715 = vunpack.c.l.b16 %v507
        %v716 = vunpack.c.h.b16 %v507
        %v717 = vunpack.c.l.b16 %v508
        %v718 = vunpack.c.h.b16 %v508
        %v719 = vunpack.c.l.b16 %v509
        %v720 = vunpack.c.h.b16 %v509
        %v721 = vunpack.c.l.b16 %v510
        %v722 = vunpack.c.h.b16 %v510
        %v723 = vunpack.c.l.b16 %v511
        %v724 = vunpack.c.h.b16 %v511
        %v725 = vunpack.c.l.b16 %v512
        %v726 = vunpack.c.h.b16 %v512
        %v727 = vunpack.c.l.b16 %v513
        %v728 = vunpack.c.h.b16 %v513
        %v729 = vunpack.c.l.b16 %v514
        %v730 = vunpack.c.h.b16 %v514
        %v731 = vunpack.c.l.b16 %v515
        %v732 = vunpack.c.h.b16 %v515
        %v733 = vunpack.c.l.b16 %v516
        %v734 = vunpack.c.h.b16 %v516
        %v735 = vunpack.c.l.b16 %v517
        %v736 = vunpack.c.h.b16 %v517
        %v737 = vunpack.c.l.b16 %v518
        %v738 = vunpack.c.h.b16 %v518
        %v739 = vunpack.c.l.b16 %v519
        %v740 = vunpack.c.h.b16 %v519
        %v741 = vunpack.c.l.b16 %v520
        %v742 = vunpack.c.h.b16 %v520
        %v743 = vunpack.c.l.b16 %v521
        %v744 = vunpack.c.h.b16 %v521
        %v745 = vunpack.c.l.b16 %v522
        %v746 = vunpack.c.h.b16 %v522
        %v747 = vunpack.c.l.b16 %v523
        %v748 = vunpack.c.h.b16 %v523
        %v749 = vunpack.c.l.b16 %v524
        %v750 = vunpack.c.h.b16 %v524
        %v751 = vunpack.c.l.b16 %v525
        %v752 = vunpack.c.h.b16 %v525
        %v753 = vunpack.c.l.b16 %v526
        %v754 = vunpack.c.h.b16 %v526
        %v755 = vunpack.c.l.b16 %v527
        %v756 = vunpack.c.h.b16 %v527
        %v757 = vunpack.c.l.b16 %v528
        %v758 = vunpack.c.h.b16 %v528
        %v759 = vunpack.c.l.b16 %v529
        %v760 = vunpack.c.h.b16 %v529
        %v761 = vunpack.c.l.b16 %v530
        %v762 = vunpack.c.h.b16 %v530
        %v763 = vunpack.c.l.b16 %v531
        %v764 = vunpack.c.h.b16 %v531
        %v765 = vunpack.c.l.b16 %v532
        %v766 = vunpack.c.h.b16 %v532
        %v767 = vunpack.c.l.b16 %v533
        %v768 = vunpack.c.h.b16 %v533
        %v769 = vunpack.c.l.b16 %v534
        %v770 = vunpack.c.h.b16 %v534
        %v771 = vunpack.c.l.b16 %v535
        %v772 = vunpack.c.h.b16 %v535
        %v773 = vunpack.c.l.b16 %v536
        %v774 = vunpack.c.h.b16 %v536
        %v775 = vunpack.c.l.b16 %v537
        %v776 = vunpack.c.h.b16 %v537
        %v777 = vunpack.c.l.b16 %v538
        %v778 = vunpack.c.h.b16 %v538
        %v779 = vunpack.c.l.b16 %v539
        %v780 = vunpack.c.h.b16 %v539
        %v781 = vunpack.c.l.b16 %v540
        %v782 = vunpack.c.h.b16 %v540
        %v783 = vunpack.c.l.b16 %v541
        %v784 = vunpack.c.h.b16 %v541
        %v785 = vunpack.c.l.b16 %v542
        %v786 = vunpack.c.h.b16 %v542
        %v787 = vunpack.c.l.b16 %v543
        %v788 = vunpack.c.h.b16 %v543
        %v789 = vunpack.c.l.b16 %v544
        %v790 = vunpack.c.h.b16 %v544
        %v791 = vunpack.c.l.b16 %v545
        %v792 = vunpack.c.h.b16 %v545
        %v793 = vunpack.c.l.b16 %v546
        %v794 = vunpack.c.h.b16 %v546
        %v795 = vunpack.c.l.b16 %v547
        %v796 = vunpack.c.h.b16 %v547
        %v797 = vunpack.c.l.b16 %v548
        %v798 = vunpack.c.h.b16 %v548
        %v799 = vunpack.c.l.b16 %v549
        %v800 = vunpack.c.h.b16 %v549
        %v801 = vunpack.c.l.b16 %v550
        %v802 = vunpack.c.h.b16 %v550
        %v803 = vunpack.c.l.b16 %v551
        %v804 = vunpack.c.h.b16 %v551
        %v805 = vunpack.c.l.b16 %v552
        %v806 = vunpack.c.h.b16 %v552
        %v807 = vunpack.c.l.b16 %v553
        %v808 = vunpack.c.h.b16 %v553
        %v809 = vunpack.c.l.b16 %v554
        %v810 = vunpack.c.h.b16 %v554
        %v811 = vunpack.c.l.b16 %v555
        %v812 = vunpack.c.h.b16 %v555
        %v813 = vunpack.c.l.b16 %v556
        %v814 = vunpack.c.h.b16 %v556
        %v815 = vunpack.c.l.b16 %v557
        %v816 = vunpack.c.h.b16 %v557
        %v817 = vunpack.c.l.b16 %v558
        %v818 = vunpack.c.h.b16 %v558
        %v819 = vunpack.c.l.b16 %v559
        %v820 = vunpack.c.h.b16 %v559
        %v821 = vunpack.c.l.b16 %v560
        %v822 = vunpack.c.h.b16 %v560
        %v823 = vunpack.c.l.b16 %v561
        %v824 = vunpack.c.h.b16 %v561
        %v825 = vunpack.c.l.b16 %v562
        %v826 = vunpack.c.h.b16 %v562
        %v827 = vunpack.c.l.b16 %v563
        %v828 = vunpack.c.h.b16 %v563
        %v829 = vunpack.c.l.b16 %v564
        %v830 = vunpack.c.h.b16 %v564
        %v831 = vunpack.c.l.b16 %v565
        %v832 = vunpack.c.h.b16 %v565
        %v833 = vunpack.c.l.b16 %v566
        %v834 = vunpack.c.h.b16 %v566
        %v835 = vunpack.c.l.b16 %v567
        %v836 = vunpack.c.h.b16 %v567
        %v837 = vunpack.c.l.b16 %v568
        %v838 = vunpack.c.h.b16 %v568
        %v839 = vunpack.c.l.b16 %v569
        %v840 = vunpack.c.h.b16 %v569
        %v841 = vunpack.c.l.b16 %v570
        %v842 = vunpack.c.h.b16 %v570
        %v843 = vunpack.c.l.b16 %v571
        %v844 = vunpack.c.h.b16 %v571
        %v845 = vunpack.c.l.b16 %v572
        %v846 = vunpack.c.h.b16 %v572
        %v847 = vunpack.c.l.b16 %v573
        %v848 = vunpack.c.h.b16 %v573
        %v849 = vunpack.c.l.b16 %v574
        %v850 = vunpack.c.h.b16 %v574
        %v851 = vunpack.c.l.b16 %v575
        %v852 = vunpack.c.h.b16 %v575
        %v853 = vunpack.c.l.b16 %v576
        %v854 = vunpack.c.h.b16 %v576
        %v855 = vunpack.c.l.b16 %v577
        %v856 = vunpack.c.h.b16 %v577
        %v857 = vunpack.c.l.b16 %v578
        %v858 = vunpack.c.h.b16 %v578
        %v859 = vunpack.c.l.b16 %v579
        %v860 = vunpack.c.h.b16 %v579
        %v861 = vunpack.c.l.b16 %v580
        %v862 = vunpack.c.h.b16 %v580
        %v863 = vunpack.c.l.b16 %v581
        %v864 = vunpack.c.h.b16 %v581
        %v865 = vunpack.c.l.b16 %v582
        %v866 = vunpack.c.h.b16 %v582
        %v867 = vunpack.c.l.b16 %v583
        %v868 = vunpack.c.h.b16 %v583
        %v869 = vunpack.c.l.b16 %v584
        %v870 = vunpack.c.h.b16 %v584
        %v871 = vunpack.c.l.b16 %v585
        %v872 = vunpack.c.h.b16 %v585
        %v873 = vunpack.c.l.b16 %v586
        %v874 = vunpack.c.h.b16 %v586
        %v875 = vpack.c.b16 %v695, %v683
        %v876 = vpack.c.b16 %v696, %v684
        %v877 = vpack.c.b16 %v697, %v685
        %v878 = vpack.c.b16 %v698, %v686
        %v879 = vpack.c.b16 %v699, %v687
        %v880 = vpack.c.b16 %v700, %v688
        %v881 = vpack.c.b16 %v701, %v689
        %v882 = vpack.c.b16 %v702, %v690
        %v883 = vpack.c.b16 %v703, %v691
        %v884 = vpack.c.b16 %v704, %v692
        %v885 = vpack.c.b16 %v705, %v693
        %v886 = vpack.c.b16 %v706, %v694
        %v887 = vpack.c.b16 %v719, %v707
        %v888 = vpack.c.b16 %v720, %v708
        %v889 = vpack.c.b16 %v721, %v709
        %v890 = vpack.c.b16 %v722, %v710
        %v891 = vpack.c.b16 %v723, %v711
        %v892 = vpack.c.b16 %v724, %v712
        %v893 = vpack.c.b16 %v725, %v713
        %v894 = vpack.c.b16 %v726, %v714
        %v895 = vpack.c.b16 %v727, %v715
        %v896 = vpack.c.b16 %v728, %v716
        %v897 = vpack.c.b16 %v729, %v717
        %v898 = vpack.c.b16 %v730, %v718
        %v899 = vpack.c.b16 %v743, %v731
        %v900 = vpack.c.b16 %v744, %v732
        %v901 = vpack.c.b16 %v745, %v733
        %v902 = vpack.c.b16 %v746, %v734
        %v903 = vpack.c.b16 %v747, %v735
        %v904 = vpack.c.b16 %v748, %v736
        %v905 = vpack.c.b16 %v749, %v737
        %v906 = vpack.c.b16 %v750, %v738
        %v907 = vpack.c.b16 %v751, %v739
        %v908 = vpack.c.b16 %v752, %v740
        %v909 = vpack.c.b16 %v753, %v741
        %v910 = vpack.c.b16 %v754, %v742
        %v911 = vpack.c.b16 %v767, %v755
        %v912 = vpack.c.b16 %v768, %v756
        %v913 = vpack.c.b16 %v769, %v757
        %v914 = vpack.c.b16 %v770, %v758
        %v915 = vpack.c.b16 %v771, %v759
        %v916 = vpack.c.b16 %v772, %v760
        %v917 = vpack.c.b16 %v773, %v761
        %v918 = vpack.c.b16 %v774, %v762
        %v919 = vpack.c.b16 %v775, %v763
        %v920 = vpack.c.b16 %v776, %v764
        %v921 = vpack.c.b16 %v777, %v765
        %v922 = vpack.c.b16 %v778, %v766
        %v923 = vpack.c.b16 %v791, %v779
        %v924 = vpack.c.b16 %v792, %v780
        %v925 = vpack.c.b16 %v793, %v781
        %v926 = vpack.c.b16 %v794, %v782
        %v927 = vpack.c.b16 %v795, %v783
        %v928 = vpack.c.b16 %v796, %v784
        %v929 = vpack.c.b16 %v797, %v785
        %v930 = vpack.c.b16 %v798, %v786
        %v931 = vpack.c.b16 %v799, %v787
        %v932 = vpack.c.b16 %v800, %v788
        %v933 = vpack.c.b16 %v801, %v789
        %v934 = vpack.c.b16 %v802, %v790
        %v935 = vpack.c.b16 %v815, %v803
        %v936 = vpack.c.b16 %v816, %v804
        %v937 = vpack.c.b16 %v817, %v805
        %v938 = vpack.c.b16 %v818, %v806
        %v939 = vpack.c.b16 %v819, %v807
        %v940 = vpack.c.b16 %v820, %v808
        %v941 = vpack.c.b16 %v821, %v809
        %v942 = vpack.c.b16 %v822, %v810
        %v943 = vpack.c.b16 %v823, %v811
        %v944 = vpack.c.b16 %v824, %v812
        %v945 = vpack.c.b16 %v825, %v813
        %v946 = vpack.c.b16 %v826, %v814
        %v947 = vpack.c.b16 %v839, %v827
        %v948 = vpack.c.b16 %v840, %v828
        %v949 = vpack.c.b16 %v841, %v829
        %v950 = vpack.c.b16 %v842, %v830
        %v951 = vpack.c.b16 %v843, %v831
        %v952 = vpack.c.b16 %v844, %v832
        %v953 = vpack.c.b16 %v845, %v833
        %v954 = vpack.c.b16 %v846, %v834
        %v955 = vpack.c.b16 %v847, %v835
        %v956 = vpack.c.b16 %v848, %v836
        %v957 = vpack.c.b16 %v849, %v837
        %v958 = vpack.c.b16 %v850, %v838
        %v959 = vpack.c.b16 %v863, %v851
        %v960 = vpack.c.b16 %v864, %v852
        %v961 = vpack.c.b16 %v865, %v853
        %v962 = vpack.c.b16 %v866, %v854
        %v963 = vpack.c.b16 %v867, %v855
        %v964 = vpack.c.b16 %v868, %v856
        %v965 = vpack.c.b16 %v869, %v857
        %v966 = vpack.c.b16 %v870, %v858
        %v967 = vpack.c.b16 %v871, %v859
        %v968 = vpack.c.b16 %v872, %v860
        %v969 = vpack.c.b16 %v873, %v861
        %v970 = vpack.c.b16 %v874, %v862
        %1067 = vmatprep.subr.bf16.mxu0 %v876
        %1068 = vmatpush1.bf16.msra.mxu0 %v875
        %1069 = vmatprep.subr.bf16.mxu0 %v888
        %1070 = vmatpush1.bf16.msra.mxu0 %v887
        %1071 = vmatprep.subr.bf16.mxu0 %v900
        %1072 = vmatpush1.bf16.msra.mxu0 %v899
        %1073 = vmatprep.subr.bf16.mxu0 %v912
        %1074 = vmatpush1.bf16.msra.mxu0 %v911
        %1075 = vmatprep.subr.bf16.mxu0 %v924
        %1076 = vmatpush1.bf16.msra.mxu0 %v923
        %1077 = vmatprep.subr.bf16.mxu0 %v936
        %1078 = vmatpush1.bf16.msra.mxu0 %v935
        %1079 = vmatprep.subr.bf16.mxu0 %v948
        %1080 = vmatpush1.bf16.msra.mxu0 %v947
        %1081 = vmatprep.subr.bf16.mxu0 %v960
        %1082 = vmatpush1.bf16.msra.mxu0 %v959
        %1083 = vmatprep.subr.bf16.mxu0 0
        %1084 = vmatpush1.bf16.msra.mxu0 0
        %1085 = vmatprep.subr.bf16.mxu0 0
        %1086 = vmatpush1.bf16.msra.mxu0 0
        %1087 = vmatprep.subr.bf16.mxu0 0
        %1088 = vmatpush1.bf16.msra.mxu0 0
        %1089 = vmatprep.subr.bf16.mxu0 0
        %1090 = vmatpush1.bf16.msra.mxu0 0
        %1091 = vmatprep.subr.bf16.mxu0 0
        %1092 = vmatpush1.bf16.msra.mxu0 0
        %1093 = vmatprep.subr.bf16.mxu0 0
        %1094 = vmatpush1.bf16.msra.mxu0 0
        %1095 = vmatprep.subr.bf16.mxu0 0
        %1096 = vmatpush1.bf16.msra.mxu0 0
        %1097 = vmatprep.subr.bf16.mxu0 0
        %1098 = vmatpush1.bf16.msra.mxu0 0
        %1099 = vmatprep.mubr.bf16.mxu0 0
        %1100 = vmatmul.mubr.bf16.gmra.mrb[0].mxu0 %v490
        %v1101 = vpop.f32.mrb[0].mxu0
        %v1102 = vadd.f32 0.0, %v1101
        %v1103 = vpop.f32.mrb[0].mxu0
        %v1104 = vadd.f32 0.0, %v1103
        %v1105 = vpop.f32.mrb[0].mxu0
        %v1106 = vpop.f32.mrb[0].mxu0
        %1107 = vdwg.mxu0
        %1108 = vmatprep.subr.bf16.mxu0 %v878
        %1109 = vmatpush1.bf16.msra.mxu0 %v877
        %1110 = vmatprep.subr.bf16.mxu0 %v890
        %1111 = vmatpush1.bf16.msra.mxu0 %v889
        %1112 = vmatprep.subr.bf16.mxu0 %v902
        %1113 = vmatpush1.bf16.msra.mxu0 %v901
        %1114 = vmatprep.subr.bf16.mxu0 %v914
        %1115 = vmatpush1.bf16.msra.mxu0 %v913
        %1116 = vmatprep.subr.bf16.mxu0 %v926
        %1117 = vmatpush1.bf16.msra.mxu0 %v925
        %1118 = vmatprep.subr.bf16.mxu0 %v938
        %1119 = vmatpush1.bf16.msra.mxu0 %v937
        %1120 = vmatprep.subr.bf16.mxu0 %v950
        %1121 = vmatpush1.bf16.msra.mxu0 %v949
        %1122 = vmatprep.subr.bf16.mxu0 %v962
        %1123 = vmatpush1.bf16.msra.mxu0 %v961
        %1124 = vmatprep.subr.bf16.mxu0 0
        %1125 = vmatpush1.bf16.msra.mxu0 0
        %1126 = vmatprep.subr.bf16.mxu0 0
        %1127 = vmatpush1.bf16.msra.mxu0 0
        %1128 = vmatprep.subr.bf16.mxu0 0
        %1129 = vmatpush1.bf16.msra.mxu0 0
        %1130 = vmatprep.subr.bf16.mxu0 0
        %1131 = vmatpush1.bf16.msra.mxu0 0
        %1132 = vmatprep.subr.bf16.mxu0 0
        %1133 = vmatpush1.bf16.msra.mxu0 0
        %1134 = vmatprep.subr.bf16.mxu0 0
        %1135 = vmatpush1.bf16.msra.mxu0 0
        %1136 = vmatprep.subr.bf16.mxu0 0
        %1137 = vmatpush1.bf16.msra.mxu0 0
        %1138 = vmatprep.subr.bf16.mxu0 0
        %1139 = vmatpush1.bf16.msra.mxu0 0
        %1140 = vmatprep.mubr.bf16.mxu0 0
        %1141 = vmatmul.mubr.bf16.gmra.mrb[0].mxu0 %v490
        %v1142 = vpop.f32.mrb[0].mxu0
        %v1143 = vadd.f32 0.0, %v1142
        %v1144 = vpop.f32.mrb[0].mxu0
        %v1145 = vadd.f32 0.0, %v1144
        %v1146 = vpop.f32.mrb[0].mxu0
        %v1147 = vpop.f32.mrb[0].mxu0
        %1148 = vdwg.mxu0
        %1149 = vmatprep.subr.bf16.mxu0 %v880
        %1150 = vmatpush1.bf16.msra.mxu0 %v879
        %1151 = vmatprep.subr.bf16.mxu0 %v892
        %1152 = vmatpush1.bf16.msra.mxu0 %v891
        %1153 = vmatprep.subr.bf16.mxu0 %v904
        %1154 = vmatpush1.bf16.msra.mxu0 %v903
        %1155 = vmatprep.subr.bf16.mxu0 %v916
        %1156 = vmatpush1.bf16.msra.mxu0 %v915
        %1157 = vmatprep.subr.bf16.mxu0 %v928
        %1158 = vmatpush1.bf16.msra.mxu0 %v927
        %1159 = vmatprep.subr.bf16.mxu0 %v940
        %1160 = vmatpush1.bf16.msra.mxu0 %v939
        %1161 = vmatprep.subr.bf16.mxu0 %v952
        %1162 = vmatpush1.bf16.msra.mxu0 %v951
        %1163 = vmatprep.subr.bf16.mxu0 %v964
        %1164 = vmatpush1.bf16.msra.mxu0 %v963
        %1165 = vmatprep.subr.bf16.mxu0 0
        %1166 = vmatpush1.bf16.msra.mxu0 0
        %1167 = vmatprep.subr.bf16.mxu0 0
        %1168 = vmatpush1.bf16.msra.mxu0 0
        %1169 = vmatprep.subr.bf16.mxu0 0
        %1170 = vmatpush1.bf16.msra.mxu0 0
        %1171 = vmatprep.subr.bf16.mxu0 0
        %1172 = vmatpush1.bf16.msra.mxu0 0
        %1173 = vmatprep.subr.bf16.mxu0 0
        %1174 = vmatpush1.bf16.msra.mxu0 0
        %1175 = vmatprep.subr.bf16.mxu0 0
        %1176 = vmatpush1.bf16.msra.mxu0 0
        %1177 = vmatprep.subr.bf16.mxu0 0
        %1178 = vmatpush1.bf16.msra.mxu0 0
        %1179 = vmatprep.subr.bf16.mxu0 0
        %1180 = vmatpush1.bf16.msra.mxu0 0
        %1181 = vmatprep.mubr.bf16.mxu0 0
        %1182 = vmatmul.mubr.bf16.gmra.mrb[0].mxu0 %v490
        %v1183 = vpop.f32.mrb[0].mxu0
        %v1184 = vadd.f32 0.0, %v1183
        %v1185 = vpop.f32.mrb[0].mxu0
        %v1186 = vadd.f32 0.0, %v1185
        %v1187 = vpop.f32.mrb[0].mxu0
        %v1188 = vpop.f32.mrb[0].mxu0
        %1189 = vdwg.mxu0
        %1190 = vmatprep.subr.bf16.mxu0 %v882
        %1191 = vmatpush1.bf16.msra.mxu0 %v881
        %1192 = vmatprep.subr.bf16.mxu0 %v894
        %1193 = vmatpush1.bf16.msra.mxu0 %v893
        %1194 = vmatprep.subr.bf16.mxu0 %v906
        %1195 = vmatpush1.bf16.msra.mxu0 %v905
        %1196 = vmatprep.subr.bf16.mxu0 %v918
        %1197 = vmatpush1.bf16.msra.mxu0 %v917
        %1198 = vmatprep.subr.bf16.mxu0 %v930
        %1199 = vmatpush1.bf16.msra.mxu0 %v929
        %1200 = vmatprep.subr.bf16.mxu0 %v942
        %1201 = vmatpush1.bf16.msra.mxu0 %v941
        %1202 = vmatprep.subr.bf16.mxu0 %v954
        %1203 = vmatpush1.bf16.msra.mxu0 %v953
        %1204 = vmatprep.subr.bf16.mxu0 %v966
        %1205 = vmatpush1.bf16.msra.mxu0 %v965
        %1206 = vmatprep.subr.bf16.mxu0 0
        %1207 = vmatpush1.bf16.msra.mxu0 0
        %1208 = vmatprep.subr.bf16.mxu0 0
        %1209 = vmatpush1.bf16.msra.mxu0 0
        %1210 = vmatprep.subr.bf16.mxu0 0
        %1211 = vmatpush1.bf16.msra.mxu0 0
        %1212 = vmatprep.subr.bf16.mxu0 0
        %1213 = vmatpush1.bf16.msra.mxu0 0
        %1214 = vmatprep.subr.bf16.mxu0 0
        %1215 = vmatpush1.bf16.msra.mxu0 0
        %1216 = vmatprep.subr.bf16.mxu0 0
        %1217 = vmatpush1.bf16.msra.mxu0 0
        %1218 = vmatprep.subr.bf16.mxu0 0
        %1219 = vmatpush1.bf16.msra.mxu0 0
        %1220 = vmatprep.subr.bf16.mxu0 0
        %1221 = vmatpush1.bf16.msra.mxu0 0
        %1222 = vmatprep.mubr.bf16.mxu0 0
        %1223 = vmatmul.mubr.bf16.gmra.mrb[0].mxu0 %v490
        %v1224 = vpop.f32.mrb[0].mxu0
        %v1225 = vadd.f32 0.0, %v1224
        %v1226 = vpop.f32.mrb[0].mxu0
        %v1227 = vadd.f32 0.0, %v1226
        %v1228 = vpop.f32.mrb[0].mxu0
        %v1229 = vpop.f32.mrb[0].mxu0
        %1230 = vdwg.mxu0
        %1231 = vmatprep.subr.bf16.mxu0 %v884
        %1232 = vmatpush1.bf16.msra.mxu0 %v883
        %1233 = vmatprep.subr.bf16.mxu0 %v896
        %1234 = vmatpush1.bf16.msra.mxu0 %v895
        %1235 = vmatprep.subr.bf16.mxu0 %v908
        %1236 = vmatpush1.bf16.msra.mxu0 %v907
        %1237 = vmatprep.subr.bf16.mxu0 %v920
        %1238 = vmatpush1.bf16.msra.mxu0 %v919
        %1239 = vmatprep.subr.bf16.mxu0 %v932
        %1240 = vmatpush1.bf16.msra.mxu0 %v931
        %1241 = vmatprep.subr.bf16.mxu0 %v944
        %1242 = vmatpush1.bf16.msra.mxu0 %v943
        %1243 = vmatprep.subr.bf16.mxu0 %v956
        %1244 = vmatpush1.bf16.msra.mxu0 %v955
        %1245 = vmatprep.subr.bf16.mxu0 %v968
        %1246 = vmatpush1.bf16.msra.mxu0 %v967
        %1247 = vmatprep.subr.bf16.mxu0 0
        %1248 = vmatpush1.bf16.msra.mxu0 0
        %1249 = vmatprep.subr.bf16.mxu0 0
        %1250 = vmatpush1.bf16.msra.mxu0 0
        %1251 = vmatprep.subr.bf16.mxu0 0
        %1252 = vmatpush1.bf16.msra.mxu0 0
        %1253 = vmatprep.subr.bf16.mxu0 0
        %1254 = vmatpush1.bf16.msra.mxu0 0
        %1255 = vmatprep.subr.bf16.mxu0 0
        %1256 = vmatpush1.bf16.msra.mxu0 0
        %1257 = vmatprep.subr.bf16.mxu0 0
        %1258 = vmatpush1.bf16.msra.mxu0 0
        %1259 = vmatprep.subr.bf16.mxu0 0
        %1260 = vmatpush1.bf16.msra.mxu0 0
        %1261 = vmatprep.subr.bf16.mxu0 0
        %1262 = vmatpush1.bf16.msra.mxu0 0
        %1263 = vmatprep.mubr.bf16.mxu0 0
        %1264 = vmatmul.mubr.bf16.gmra.mrb[0].mxu0 %v490
        %v1265 = vpop.f32.mrb[0].mxu0
        %v1266 = vadd.f32 0.0, %v1265
        %v1267 = vpop.f32.mrb[0].mxu0
        %v1268 = vadd.f32 0.0, %v1267
        %v1269 = vpop.f32.mrb[0].mxu0
        %v1270 = vpop.f32.mrb[0].mxu0
        %1271 = vdwg.mxu0
        %1272 = vmatprep.subr.bf16.mxu0 %v886
        %1273 = vmatpush1.bf16.msra.mxu0 %v885
        %1274 = vmatprep.subr.bf16.mxu0 %v898
        %1275 = vmatpush1.bf16.msra.mxu0 %v897
        %1276 = vmatprep.subr.bf16.mxu0 %v910
        %1277 = vmatpush1.bf16.msra.mxu0 %v909
        %1278 = vmatprep.subr.bf16.mxu0 %v922
        %1279 = vmatpush1.bf16.msra.mxu0 %v921
        %1280 = vmatprep.subr.bf16.mxu0 %v934
        %1281 = vmatpush1.bf16.msra.mxu0 %v933
        %1282 = vmatprep.subr.bf16.mxu0 %v946
        %1283 = vmatpush1.bf16.msra.mxu0 %v945
        %1284 = vmatprep.subr.bf16.mxu0 %v958
        %1285 = vmatpush1.bf16.msra.mxu0 %v957
        %1286 = vmatprep.subr.bf16.mxu0 %v970
        %1287 = vmatpush1.bf16.msra.mxu0 %v969
        %1288 = vmatprep.subr.bf16.mxu0 0
        %1289 = vmatpush1.bf16.msra.mxu0 0
        %1290 = vmatprep.subr.bf16.mxu0 0
        %1291 = vmatpush1.bf16.msra.mxu0 0
        %1292 = vmatprep.subr.bf16.mxu0 0
        %1293 = vmatpush1.bf16.msra.mxu0 0
        %1294 = vmatprep.subr.bf16.mxu0 0
        %1295 = vmatpush1.bf16.msra.mxu0 0
        %1296 = vmatprep.subr.bf16.mxu0 0
        %1297 = vmatpush1.bf16.msra.mxu0 0
        %1298 = vmatprep.subr.bf16.mxu0 0
        %1299 = vmatpush1.bf16.msra.mxu0 0
        %1300 = vmatprep.subr.bf16.mxu0 0
        %1301 = vmatpush1.bf16.msra.mxu0 0
        %1302 = vmatprep.subr.bf16.mxu0 0
        %1303 = vmatpush1.bf16.msra.mxu0 0
        %1304 = vmatprep.mubr.bf16.mxu0 0
        %1305 = vmatmul.mubr.bf16.gmra.mrb[0].mxu0 %v490
        %v1306 = vpop.f32.mrb[0].mxu0
        %v1307 = vadd.f32 0.0, %v1306
        %v1308 = vpop.f32.mrb[0].mxu0
        %v1309 = vadd.f32 0.0, %v1308
        %v1310 = vpop.f32.mrb[0].mxu0
        %v1311 = vpop.f32.mrb[0].mxu0
        %1312 = vdwg.mxu0
        %v1313 = vpack.c.bf16 %v1102, %v1102
        %v1314 = vpack.c.bf16 %v1184, %v1184
        %v1315 = vpack.c.bf16 %v1266, %v1266
        %1316 = vmatprep.subr.bf16.mxu0 0
        %1317 = vmatpush1.bf16.xpose.msra.mxu0 %v1314
        %1318 = vmatprep.subr.bf16.mxu0 0
        %1319 = vmatpush1.bf16.xpose.msra.mxu0 0
        %1320 = vmatprep.subr.bf16.mxu0 0
        %1321 = vmatpush1.bf16.xpose.msra.mxu0 0
        %1322 = vmatprep.subr.bf16.mxu0 0
        %1323 = vmatpush1.bf16.xpose.msra.mxu0 0
        %1324 = vmatprep.subr.bf16.mxu0 0
        %1325 = vmatpush1.bf16.xpose.msra.mxu0 0
        %1326 = vmatprep.subr.bf16.mxu0 0
        %1327 = vmatpush1.bf16.xpose.msra.mxu0 0
        %1328 = vmatprep.subr.bf16.mxu0 0
        %1329 = vmatpush1.bf16.xpose.msra.mxu0 0
        %1330 = vmatprep.subr.bf16.mxu0 0
        %1331 = vmatpush1.bf16.xpose.msra.mxu0 0
        %1332 = vmatprep.subr.bf16.mxu0 0
        %1333 = vmatpush1.bf16.xpose.msra.mxu0 0
        %1334 = vmatprep.subr.bf16.mxu0 0
        %1335 = vmatpush1.bf16.xpose.msra.mxu0 0
        %1336 = vmatprep.subr.bf16.mxu0 0
        %1337 = vmatpush1.bf16.xpose.msra.mxu0 0
        %1338 = vmatprep.subr.bf16.mxu0 0
        %1339 = vmatpush1.bf16.xpose.msra.mxu0 0
        %1340 = vmatprep.subr.bf16.mxu0 0
        %1341 = vmatpush1.bf16.xpose.msra.mxu0 0
        %1342 = vmatprep.subr.bf16.mxu0 0
        %1343 = vmatpush1.bf16.xpose.msra.mxu0 0
        %1344 = vmatprep.subr.bf16.mxu0 0
        %1345 = vmatpush1.bf16.xpose.msra.mxu0 0
        %1346 = vmatprep.subr.bf16.mxu0 0
        %1347 = vmatpush1.bf16.xpose.msra.mxu0 0
        %1348 = vmatprep.mubr.bf16.mxu0 0
        %1349 = vmatmul.mubr.bf16.gmra.mrb[0].mxu0 %v1313
        %v1350 = vpop.f32.mrb[0].mxu0
        %v1351 = vadd.f32 %v460, %v1350
        %v1352 = vpop.f32.mrb[0].mxu0
        %v1353 = vpop.f32.mrb[0].mxu0
        %v1354 = vpop.f32.mrb[0].mxu0
        %1355 = vdwg.mxu0
        %vm1356 = vcmask 64512
        %v1357 = vsel %vm1356, %v1351, -inf
        %1358 = vmax.xlane.f32.xlu0 %v1357
        %v1359 = vpop.xlane.xlu0 %1358
        %v1360 = vsub.f32 %v1351, %v1359
        %v1361 = vmul.f32 %v1360, 1.442695
        %v1362 = vpow.pop %v1361
        %v1363 = vsel %vm1356, %v1362, 0.0
        %1364 = vadd.xlane.f32.xlu0 %v1363
        %v1365 = vpop.xlane.xlu0 %1364
        %v1366 = vrcp.pop %v1365
        %v1367 = vmul.f32 %v1362, %v1366
        %v1368 = vpack.c.bf16 %v1367, %v1367
        %v1370 = vsel %vm1356, %v1368, 0
        %vm1372 = vcmask 1043456
        %v1374 = vsel %vm1372, %v1315, 0
        %1376 = vmatprep.subr.bf16.mxu0 0
        %1377 = vmatpush1.bf16.msra.mxu0 %v1374
        %1378 = vmatprep.subr.bf16.mxu0 0
        %1379 = vmatpush1.bf16.msra.mxu0 0
        %1380 = vmatprep.subr.bf16.mxu0 0
        %1381 = vmatpush1.bf16.msra.mxu0 0
        %1382 = vmatprep.subr.bf16.mxu0 0
        %1383 = vmatpush1.bf16.msra.mxu0 0
        %1384 = vmatprep.subr.bf16.mxu0 0
        %1385 = vmatpush1.bf16.msra.mxu0 0
        %1386 = vmatprep.subr.bf16.mxu0 0
        %1387 = vmatpush1.bf16.msra.mxu0 0
        %1388 = vmatprep.subr.bf16.mxu0 0
        %1389 = vmatpush1.bf16.msra.mxu0 0
        %1390 = vmatprep.subr.bf16.mxu0 0
        %1391 = vmatpush1.bf16.msra.mxu0 0
        %1392 = vmatprep.subr.bf16.mxu0 0
        %1393 = vmatpush1.bf16.msra.mxu0 0
        %1394 = vmatprep.subr.bf16.mxu0 0
        %1395 = vmatpush1.bf16.msra.mxu0 0
        %1396 = vmatprep.subr.bf16.mxu0 0
        %1397 = vmatpush1.bf16.msra.mxu0 0
        %1398 = vmatprep.subr.bf16.mxu0 0
        %1399 = vmatpush1.bf16.msra.mxu0 0
        %1400 = vmatprep.subr.bf16.mxu0 0
        %1401 = vmatpush1.bf16.msra.mxu0 0
        %1402 = vmatprep.subr.bf16.mxu0 0
        %1403 = vmatpush1.bf16.msra.mxu0 0
        %1404 = vmatprep.subr.bf16.mxu0 0
        %1405 = vmatpush1.bf16.msra.mxu0 0
        %1406 = vmatprep.subr.bf16.mxu0 0
        %1407 = vmatpush1.bf16.msra.mxu0 0
        %1408 = vmatprep.mubr.bf16.mxu0 0
        %1409 = vmatmul.mubr.bf16.gmra.mrb[0].mxu0 %v1370
        %v1410 = vpop.f32.mrb[0].mxu0
        %v1411 = vadd.f32 0.0, %v1410
        %v1412 = vpop.f32.mrb[0].mxu0
        %v1413 = vpop.f32.mrb[0].mxu0
        %v1414 = vpop.f32.mrb[0].mxu0
        %1415 = vdwg.mxu0
        %v1416 = vpack.c.bf16 %v1104, %v1104
        %v1417 = vpack.c.bf16 %v1186, %v1186
        %v1418 = vpack.c.bf16 %v1268, %v1268
        %1419 = vmatprep.subr.bf16.mxu0 0
        %1420 = vmatpush1.bf16.xpose.msra.mxu0 %v1417
        %1421 = vmatprep.subr.bf16.mxu0 0
        %1422 = vmatpush1.bf16.xpose.msra.mxu0 0
        %1423 = vmatprep.subr.bf16.mxu0 0
        %1424 = vmatpush1.bf16.xpose.msra.mxu0 0
        %1425 = vmatprep.subr.bf16.mxu0 0
        %1426 = vmatpush1.bf16.xpose.msra.mxu0 0
        %1427 = vmatprep.subr.bf16.mxu0 0
        %1428 = vmatpush1.bf16.xpose.msra.mxu0 0
        %1429 = vmatprep.subr.bf16.mxu0 0
        %1430 = vmatpush1.bf16.xpose.msra.mxu0 0
        %1431 = vmatprep.subr.bf16.mxu0 0
        %1432 = vmatpush1.bf16.xpose.msra.mxu0 0
        %1433 = vmatprep.subr.bf16.mxu0 0
        %1434 = vmatpush1.bf16.xpose.msra.mxu0 0
        %1435 = vmatprep.subr.bf16.mxu0 0
        %1436 = vmatpush1.bf16.xpose.msra.mxu0 0
        %1437 = vmatprep.subr.bf16.mxu0 0
        %1438 = vmatpush1.bf16.xpose.msra.mxu0 0
        %1439 = vmatprep.subr.bf16.mxu0 0
        %1440 = vmatpush1.bf16.xpose.msra.mxu0 0
        %1441 = vmatprep.subr.bf16.mxu0 0
        %1442 = vmatpush1.bf16.xpose.msra.mxu0 0
        %1443 = vmatprep.subr.bf16.mxu0 0
        %1444 = vmatpush1.bf16.xpose.msra.mxu0 0
        %1445 = vmatprep.subr.bf16.mxu0 0
        %1446 = vmatpush1.bf16.xpose.msra.mxu0 0
        %1447 = vmatprep.subr.bf16.mxu0 0
        %1448 = vmatpush1.bf16.xpose.msra.mxu0 0
        %1449 = vmatprep.subr.bf16.mxu0 0
        %1450 = vmatpush1.bf16.xpose.msra.mxu0 0
        %1451 = vmatprep.mubr.bf16.mxu0 0
        %1452 = vmatmul.mubr.bf16.gmra.mrb[0].mxu0 %v1416
        %v1453 = vpop.f32.mrb[0].mxu0
        %v1454 = vadd.f32 %v460, %v1453
        %v1455 = vpop.f32.mrb[0].mxu0
        %v1456 = vpop.f32.mrb[0].mxu0
        %v1457 = vpop.f32.mrb[0].mxu0
        %1458 = vdwg.mxu0
        %v1459 = vsel %vm1356, %v1454, -inf
        %1460 = vmax.xlane.f32.xlu0 %v1459
        %v1461 = vpop.xlane.xlu0 %1460
        %v1462 = vsub.f32 %v1454, %v1461
        %v1463 = vmul.f32 %v1462, 1.442695
        %v1464 = vpow.pop %v1463
        %v1465 = vsel %vm1356, %v1464, 0.0
        %1466 = vadd.xlane.f32.xlu0 %v1465
        %v1467 = vpop.xlane.xlu0 %1466
        %v1468 = vrcp.pop %v1467
        %v1469 = vmul.f32 %v1464, %v1468
        %v1470 = vpack.c.bf16 %v1469, %v1469
        %v1472 = vsel %vm1356, %v1470, 0
        %v1475 = vsel %vm1372, %v1418, 0
        %1477 = vmatprep.subr.bf16.mxu0 0
        %1478 = vmatpush1.bf16.msra.mxu0 %v1475
        %1479 = vmatprep.subr.bf16.mxu0 0
        %1480 = vmatpush1.bf16.msra.mxu0 0
        %1481 = vmatprep.subr.bf16.mxu0 0
        %1482 = vmatpush1.bf16.msra.mxu0 0
        %1483 = vmatprep.subr.bf16.mxu0 0
        %1484 = vmatpush1.bf16.msra.mxu0 0
        %1485 = vmatprep.subr.bf16.mxu0 0
        %1486 = vmatpush1.bf16.msra.mxu0 0
        %1487 = vmatprep.subr.bf16.mxu0 0
        %1488 = vmatpush1.bf16.msra.mxu0 0
        %1489 = vmatprep.subr.bf16.mxu0 0
        %1490 = vmatpush1.bf16.msra.mxu0 0
        %1491 = vmatprep.subr.bf16.mxu0 0
        %1492 = vmatpush1.bf16.msra.mxu0 0
        %1493 = vmatprep.subr.bf16.mxu0 0
        %1494 = vmatpush1.bf16.msra.mxu0 0
        %1495 = vmatprep.subr.bf16.mxu0 0
        %1496 = vmatpush1.bf16.msra.mxu0 0
        %1497 = vmatprep.subr.bf16.mxu0 0
        %1498 = vmatpush1.bf16.msra.mxu0 0
        %1499 = vmatprep.subr.bf16.mxu0 0
        %1500 = vmatpush1.bf16.msra.mxu0 0
        %1501 = vmatprep.subr.bf16.mxu0 0
        %1502 = vmatpush1.bf16.msra.mxu0 0
        %1503 = vmatprep.subr.bf16.mxu0 0
        %1504 = vmatpush1.bf16.msra.mxu0 0
        %1505 = vmatprep.subr.bf16.mxu0 0
        %1506 = vmatpush1.bf16.msra.mxu0 0
        %1507 = vmatprep.subr.bf16.mxu0 0
        %1508 = vmatpush1.bf16.msra.mxu0 0
        %1509 = vmatprep.mubr.bf16.mxu0 0
        %1510 = vmatmul.mubr.bf16.gmra.mrb[0].mxu0 %v1472
        %v1511 = vpop.f32.mrb[0].mxu0
        %v1512 = vadd.f32 0.0, %v1511
        %v1513 = vpop.f32.mrb[0].mxu0
        %v1514 = vpop.f32.mrb[0].mxu0
        %v1515 = vpop.f32.mrb[0].mxu0
        %1516 = vdwg.mxu0
        %v1517 = vpack.c.bf16 %v1143, %v1143
        %v1518 = vpack.c.bf16 %v1225, %v1225
        %v1519 = vpack.c.bf16 %v1307, %v1307
        %1520 = vmatprep.subr.bf16.mxu0 0
        %1521 = vmatpush1.bf16.xpose.msra.mxu0 %v1518
        %1522 = vmatprep.subr.bf16.mxu0 0
        %1523 = vmatpush1.bf16.xpose.msra.mxu0 0
        %1524 = vmatprep.subr.bf16.mxu0 0
        %1525 = vmatpush1.bf16.xpose.msra.mxu0 0
        %1526 = vmatprep.subr.bf16.mxu0 0
        %1527 = vmatpush1.bf16.xpose.msra.mxu0 0
        %1528 = vmatprep.subr.bf16.mxu0 0
        %1529 = vmatpush1.bf16.xpose.msra.mxu0 0
        %1530 = vmatprep.subr.bf16.mxu0 0
        %1531 = vmatpush1.bf16.xpose.msra.mxu0 0
        %1532 = vmatprep.subr.bf16.mxu0 0
        %1533 = vmatpush1.bf16.xpose.msra.mxu0 0
        %1534 = vmatprep.subr.bf16.mxu0 0
        %1535 = vmatpush1.bf16.xpose.msra.mxu0 0
        %1536 = vmatprep.subr.bf16.mxu0 0
        %1537 = vmatpush1.bf16.xpose.msra.mxu0 0
        %1538 = vmatprep.subr.bf16.mxu0 0
        %1539 = vmatpush1.bf16.xpose.msra.mxu0 0
        %1540 = vmatprep.subr.bf16.mxu0 0
        %1541 = vmatpush1.bf16.xpose.msra.mxu0 0
        %1542 = vmatprep.subr.bf16.mxu0 0
        %1543 = vmatpush1.bf16.xpose.msra.mxu0 0
        %1544 = vmatprep.subr.bf16.mxu0 0
        %1545 = vmatpush1.bf16.xpose.msra.mxu0 0
        %1546 = vmatprep.subr.bf16.mxu0 0
        %1547 = vmatpush1.bf16.xpose.msra.mxu0 0
        %1548 = vmatprep.subr.bf16.mxu0 0
        %1549 = vmatpush1.bf16.xpose.msra.mxu0 0
        %1550 = vmatprep.subr.bf16.mxu0 0
        %1551 = vmatpush1.bf16.xpose.msra.mxu0 0
        %1552 = vmatprep.mubr.bf16.mxu0 0
        %1553 = vmatmul.mubr.bf16.gmra.mrb[0].mxu0 %v1517
        %v1554 = vpop.f32.mrb[0].mxu0
        %v1555 = vadd.f32 %v460, %v1554
        %v1556 = vpop.f32.mrb[0].mxu0
        %v1557 = vpop.f32.mrb[0].mxu0
        %v1558 = vpop.f32.mrb[0].mxu0
        %1559 = vdwg.mxu0
        %v1560 = vsel %vm1356, %v1555, -inf
        %1561 = vmax.xlane.f32.xlu0 %v1560
        %v1562 = vpop.xlane.xlu0 %1561
        %v1563 = vsub.f32 %v1555, %v1562
        %v1564 = vmul.f32 %v1563, 1.442695
        %v1565 = vpow.pop %v1564
        %v1566 = vsel %vm1356, %v1565, 0.0
        %1567 = vadd.xlane.f32.xlu0 %v1566
        %v1568 = vpop.xlane.xlu0 %1567
        %v1569 = vrcp.pop %v1568
        %v1570 = vmul.f32 %v1565, %v1569
        %v1571 = vpack.c.bf16 %v1570, %v1570
        %v1573 = vsel %vm1356, %v1571, 0
        %v1576 = vsel %vm1372, %v1519, 0
        %1578 = vmatprep.subr.bf16.mxu0 0
        %1579 = vmatpush1.bf16.msra.mxu0 %v1576
        %1580 = vmatprep.subr.bf16.mxu0 0
        %1581 = vmatpush1.bf16.msra.mxu0 0
        %1582 = vmatprep.subr.bf16.mxu0 0
        %1583 = vmatpush1.bf16.msra.mxu0 0
        %1584 = vmatprep.subr.bf16.mxu0 0
        %1585 = vmatpush1.bf16.msra.mxu0 0
        %1586 = vmatprep.subr.bf16.mxu0 0
        %1587 = vmatpush1.bf16.msra.mxu0 0
        %1588 = vmatprep.subr.bf16.mxu0 0
        %1589 = vmatpush1.bf16.msra.mxu0 0
        %1590 = vmatprep.subr.bf16.mxu0 0
        %1591 = vmatpush1.bf16.msra.mxu0 0
        %1592 = vmatprep.subr.bf16.mxu0 0
        %1593 = vmatpush1.bf16.msra.mxu0 0
        %1594 = vmatprep.subr.bf16.mxu0 0
        %1595 = vmatpush1.bf16.msra.mxu0 0
        %1596 = vmatprep.subr.bf16.mxu0 0
        %1597 = vmatpush1.bf16.msra.mxu0 0
        %1598 = vmatprep.subr.bf16.mxu0 0
        %1599 = vmatpush1.bf16.msra.mxu0 0
        %1600 = vmatprep.subr.bf16.mxu0 0
        %1601 = vmatpush1.bf16.msra.mxu0 0
        %1602 = vmatprep.subr.bf16.mxu0 0
        %1603 = vmatpush1.bf16.msra.mxu0 0
        %1604 = vmatprep.subr.bf16.mxu0 0
        %1605 = vmatpush1.bf16.msra.mxu0 0
        %1606 = vmatprep.subr.bf16.mxu0 0
        %1607 = vmatpush1.bf16.msra.mxu0 0
        %1608 = vmatprep.subr.bf16.mxu0 0
        %1609 = vmatpush1.bf16.msra.mxu0 0
        %1610 = vmatprep.mubr.bf16.mxu0 0
        %1611 = vmatmul.mubr.bf16.gmra.mrb[0].mxu0 %v1573
        %v1612 = vpop.f32.mrb[0].mxu0
        %v1613 = vadd.f32 0.0, %v1612
        %v1614 = vpop.f32.mrb[0].mxu0
        %v1615 = vpop.f32.mrb[0].mxu0
        %v1616 = vpop.f32.mrb[0].mxu0
        %1617 = vdwg.mxu0
        %v1618 = vpack.c.bf16 %v1145, %v1145
        %v1619 = vpack.c.bf16 %v1227, %v1227
        %v1620 = vpack.c.bf16 %v1309, %v1309
        %1621 = vmatprep.subr.bf16.mxu0 0
        %1622 = vmatpush1.bf16.xpose.msra.mxu0 %v1619
        %1623 = vmatprep.subr.bf16.mxu0 0
        %1624 = vmatpush1.bf16.xpose.msra.mxu0 0
        %1625 = vmatprep.subr.bf16.mxu0 0
        %1626 = vmatpush1.bf16.xpose.msra.mxu0 0
        %1627 = vmatprep.subr.bf16.mxu0 0
        %1628 = vmatpush1.bf16.xpose.msra.mxu0 0
        %1629 = vmatprep.subr.bf16.mxu0 0
        %1630 = vmatpush1.bf16.xpose.msra.mxu0 0
        %1631 = vmatprep.subr.bf16.mxu0 0
        %1632 = vmatpush1.bf16.xpose.msra.mxu0 0
        %1633 = vmatprep.subr.bf16.mxu0 0
        %1634 = vmatpush1.bf16.xpose.msra.mxu0 0
        %1635 = vmatprep.subr.bf16.mxu0 0
        %1636 = vmatpush1.bf16.xpose.msra.mxu0 0
        %1637 = vmatprep.subr.bf16.mxu0 0
        %1638 = vmatpush1.bf16.xpose.msra.mxu0 0
        %1639 = vmatprep.subr.bf16.mxu0 0
        %1640 = vmatpush1.bf16.xpose.msra.mxu0 0
        %1641 = vmatprep.subr.bf16.mxu0 0
        %1642 = vmatpush1.bf16.xpose.msra.mxu0 0
        %1643 = vmatprep.subr.bf16.mxu0 0
        %1644 = vmatpush1.bf16.xpose.msra.mxu0 0
        %1645 = vmatprep.subr.bf16.mxu0 0
        %1646 = vmatpush1.bf16.xpose.msra.mxu0 0
        %1647 = vmatprep.subr.bf16.mxu0 0
        %1648 = vmatpush1.bf16.xpose.msra.mxu0 0
        %1649 = vmatprep.subr.bf16.mxu0 0
        %1650 = vmatpush1.bf16.xpose.msra.mxu0 0
        %1651 = vmatprep.subr.bf16.mxu0 0
        %1652 = vmatpush1.bf16.xpose.msra.mxu0 0
        %1653 = vmatprep.mubr.bf16.mxu0 0
        %1654 = vmatmul.mubr.bf16.gmra.mrb[0].mxu0 %v1618
        %v1655 = vpop.f32.mrb[0].mxu0
        %v1656 = vadd.f32 %v460, %v1655
        %v1657 = vpop.f32.mrb[0].mxu0
        %v1658 = vpop.f32.mrb[0].mxu0
        %v1659 = vpop.f32.mrb[0].mxu0
        %1660 = vdwg.mxu0
        %v1661 = vsel %vm1356, %v1656, -inf
        %1662 = vmax.xlane.f32.xlu0 %v1661
        %v1663 = vpop.xlane.xlu0 %1662
        %v1664 = vsub.f32 %v1656, %v1663
        %v1665 = vmul.f32 %v1664, 1.442695
        %v1666 = vpow.pop %v1665
        %v1667 = vsel %vm1356, %v1666, 0.0
        %1668 = vadd.xlane.f32.xlu0 %v1667
        %v1669 = vpop.xlane.xlu0 %1668
        %v1670 = vrcp.pop %v1669
        %v1671 = vmul.f32 %v1666, %v1670
        %v1672 = vpack.c.bf16 %v1671, %v1671
        %v1674 = vsel %vm1356, %v1672, 0
        %v1677 = vsel %vm1372, %v1620, 0
        %1679 = vmatprep.subr.bf16.mxu0 0
        %1680 = vmatpush1.bf16.msra.mxu0 %v1677
        %1681 = vmatprep.subr.bf16.mxu0 0
        %1682 = vmatpush1.bf16.msra.mxu0 0
        %1683 = vmatprep.subr.bf16.mxu0 0
        %1684 = vmatpush1.bf16.msra.mxu0 0
        %1685 = vmatprep.subr.bf16.mxu0 0
        %1686 = vmatpush1.bf16.msra.mxu0 0
        %1687 = vmatprep.subr.bf16.mxu0 0
        %1688 = vmatpush1.bf16.msra.mxu0 0
        %1689 = vmatprep.subr.bf16.mxu0 0
        %1690 = vmatpush1.bf16.msra.mxu0 0
        %1691 = vmatprep.subr.bf16.mxu0 0
        %1692 = vmatpush1.bf16.msra.mxu0 0
        %1693 = vmatprep.subr.bf16.mxu0 0
        %1694 = vmatpush1.bf16.msra.mxu0 0
        %1695 = vmatprep.subr.bf16.mxu0 0
        %1696 = vmatpush1.bf16.msra.mxu0 0
        %1697 = vmatprep.subr.bf16.mxu0 0
        %1698 = vmatpush1.bf16.msra.mxu0 0
        %1699 = vmatprep.subr.bf16.mxu0 0
        %1700 = vmatpush1.bf16.msra.mxu0 0
        %1701 = vmatprep.subr.bf16.mxu0 0
        %1702 = vmatpush1.bf16.msra.mxu0 0
        %1703 = vmatprep.subr.bf16.mxu0 0
        %1704 = vmatpush1.bf16.msra.mxu0 0
        %1705 = vmatprep.subr.bf16.mxu0 0
        %1706 = vmatpush1.bf16.msra.mxu0 0
        %1707 = vmatprep.subr.bf16.mxu0 0
        %1708 = vmatpush1.bf16.msra.mxu0 0
        %1709 = vmatprep.subr.bf16.mxu0 0
        %1710 = vmatpush1.bf16.msra.mxu0 0
        %1711 = vmatprep.mubr.bf16.mxu0 0
        %1712 = vmatmul.mubr.bf16.gmra.mrb[0].mxu0 %v1674
        %v1713 = vpop.f32.mrb[0].mxu0
        %v1714 = vadd.f32 0.0, %v1713
        %v1715 = vpop.f32.mrb[0].mxu0
        %v1716 = vpop.f32.mrb[0].mxu0
        %v1717 = vpop.f32.mrb[0].mxu0
        %1718 = vdwg.mxu0
        %v1719 = vpack.c.bf16 %v1411, %v1411
        %v1720 = vpack.c.bf16 %v1512, %v1512
        %v1721 = vpack.c.bf16 %v1613, %v1613
        %v1722 = vpack.c.bf16 %v1714, %v1714
        %v1723 = vld [vmem:[#allocation4] sm:$0xf]
        %v1724 = vld [vmem:[#allocation4 + $0x4] sm:$0xf]
        %v1725 = vld [vmem:[#allocation4 + $0x8] sm:$0xf]
        %v1726 = vld [vmem:[#allocation4 + $0xc] sm:$0xf]
        %v1727 = vld [vmem:[#allocation4 + $0x10] sm:$0xf]
        %v1728 = vld [vmem:[#allocation4 + $0x14] sm:$0xf]
        %v1729 = vld [vmem:[#allocation4 + $0x18] sm:$0xf]
        %v1730 = vld [vmem:[#allocation4 + $0x1c] sm:$0xf]
        %v1731 = vld [vmem:[#allocation4 + $0x20] sm:$0xf]
        %v1732 = vld [vmem:[#allocation4 + $0x24] sm:$0xf]
        %v1733 = vld [vmem:[#allocation4 + $0x28] sm:$0xf]
        %v1734 = vld [vmem:[#allocation4 + $0x2c] sm:$0xf]
        %v1735 = vld [vmem:[#allocation4 + $0x30] sm:$0xf]
        %v1736 = vld [vmem:[#allocation4 + $0x34] sm:$0xf]
        %v1737 = vld [vmem:[#allocation4 + $0x38] sm:$0xf]
        %v1738 = vld [vmem:[#allocation4 + $0x3c] sm:$0xf]
        %v1739 = vld [vmem:[#allocation4 + $0x40] sm:$0xf]
        %v1740 = vld [vmem:[#allocation4 + $0x44] sm:$0xf]
        %v1741 = vld [vmem:[#allocation4 + $0x48] sm:$0xf]
        %v1742 = vld [vmem:[#allocation4 + $0x4c] sm:$0xf]
        %v1743 = vld [vmem:[#allocation4 + $0x50] sm:$0xf]
        %v1744 = vld [vmem:[#allocation4 + $0x54] sm:$0xf]
        %v1745 = vld [vmem:[#allocation4 + $0x58] sm:$0xf]
        %v1746 = vld [vmem:[#allocation4 + $0x5c] sm:$0xf]
        %v1747 = vld [vmem:[#allocation4 + $0x60] sm:$0xf]
        %v1748 = vld [vmem:[#allocation4 + $0x64] sm:$0xf]
        %v1749 = vld [vmem:[#allocation4 + $0x68] sm:$0xf]
        %v1750 = vld [vmem:[#allocation4 + $0x6c] sm:$0xf]
        %v1751 = vld [vmem:[#allocation4 + $0x70] sm:$0xf]
        %v1752 = vld [vmem:[#allocation4 + $0x74] sm:$0xf]
        %v1753 = vld [vmem:[#allocation4 + $0x78] sm:$0xf]
        %v1754 = vld [vmem:[#allocation4 + $0x7c] sm:$0xf]
        %v1755 = vld [vmem:[#allocation4 + $0x80] sm:$0xf]
        %v1756 = vld [vmem:[#allocation4 + $0x84] sm:$0xf]
        %v1757 = vld [vmem:[#allocation4 + $0x88] sm:$0xf]
        %v1758 = vld [vmem:[#allocation4 + $0x8c] sm:$0xf]
        %v1759 = vld [vmem:[#allocation4 + $0x90] sm:$0xf]
        %v1760 = vld [vmem:[#allocation4 + $0x94] sm:$0xf]
        %v1761 = vld [vmem:[#allocation4 + $0x98] sm:$0xf]
        %v1762 = vld [vmem:[#allocation4 + $0x9c] sm:$0xf]
        %v1763 = vld [vmem:[#allocation4 + $0xa0] sm:$0xf]
        %v1764 = vld [vmem:[#allocation4 + $0xa4] sm:$0xf]
        %v1765 = vld [vmem:[#allocation4 + $0xa8] sm:$0xf]
        %v1766 = vld [vmem:[#allocation4 + $0xac] sm:$0xf]
        %v1767 = vld [vmem:[#allocation4 + $0xb0] sm:$0xf]
        %v1768 = vld [vmem:[#allocation4 + $0xb4] sm:$0xf]
        %v1769 = vld [vmem:[#allocation4 + $0xb8] sm:$0xf]
        %v1770 = vld [vmem:[#allocation4 + $0xbc] sm:$0xf]
        %v1771 = vld [vmem:[#allocation4 + $0xc0] sm:$0xf]
        %v1772 = vld [vmem:[#allocation4 + $0xc4] sm:$0xf]
        %v1773 = vld [vmem:[#allocation4 + $0xc8] sm:$0xf]
        %v1774 = vld [vmem:[#allocation4 + $0xcc] sm:$0xf]
        %v1775 = vld [vmem:[#allocation4 + $0xd0] sm:$0xf]
        %v1776 = vld [vmem:[#allocation4 + $0xd4] sm:$0xf]
        %v1777 = vld [vmem:[#allocation4 + $0xd8] sm:$0xf]
        %v1778 = vld [vmem:[#allocation4 + $0xdc] sm:$0xf]
        %v1779 = vld [vmem:[#allocation4 + $0xe0] sm:$0xf]
        %v1780 = vld [vmem:[#allocation4 + $0xe4] sm:$0xf]
        %v1781 = vld [vmem:[#allocation4 + $0xe8] sm:$0xf]
        %v1782 = vld [vmem:[#allocation4 + $0xec] sm:$0xf]
        %v1783 = vld [vmem:[#allocation4 + $0xf0] sm:$0xf]
        %v1784 = vld [vmem:[#allocation4 + $0xf4] sm:$0xf]
        %v1785 = vld [vmem:[#allocation4 + $0xf8] sm:$0xf]
        %v1786 = vld [vmem:[#allocation4 + $0xfc] sm:$0xf]
        %v1787 = vld [vmem:[%s5] sm:$0x1]
        %v1789 = vlaneseq
        %v1790 = vshrl.u32 %v1789, 7
        %v1791 = vsub.s32 0, %v1790
        %v1792 = vrot.slane %v1787, %v1791
        %v1858 = vunpack.c.l.b16 %v1723
        %v1859 = vunpack.c.l.b16 %v1724
        %v1860 = vunpack.c.l.b16 %v1725
        %v1861 = vunpack.c.l.b16 %v1726
        %v1862 = vunpack.c.l.b16 %v1727
        %v1863 = vunpack.c.l.b16 %v1728
        %v1864 = vunpack.c.l.b16 %v1729
        %v1865 = vunpack.c.l.b16 %v1730
        %v1866 = vunpack.c.l.b16 %v1731
        %v1867 = vunpack.c.l.b16 %v1732
        %v1868 = vunpack.c.l.b16 %v1733
        %v1869 = vunpack.c.l.b16 %v1734
        %v1870 = vunpack.c.l.b16 %v1735
        %v1871 = vunpack.c.l.b16 %v1736
        %v1872 = vunpack.c.l.b16 %v1737
        %v1873 = vunpack.c.l.b16 %v1738
        %v1874 = vunpack.c.l.b16 %v1739
        %v1875 = vunpack.c.l.b16 %v1740
        %v1876 = vunpack.c.l.b16 %v1741
        %v1877 = vunpack.c.l.b16 %v1742
        %v1878 = vunpack.c.l.b16 %v1743
        %v1879 = vunpack.c.l.b16 %v1744
        %v1880 = vunpack.c.l.b16 %v1745
        %v1881 = vunpack.c.l.b16 %v1746
        %v1882 = vunpack.c.l.b16 %v1747
        %v1883 = vunpack.c.l.b16 %v1748
        %v1884 = vunpack.c.l.b16 %v1749
        %v1885 = vunpack.c.l.b16 %v1750
        %v1886 = vunpack.c.l.b16 %v1751
        %v1887 = vunpack.c.l.b16 %v1752
        %v1888 = vunpack.c.l.b16 %v1753
        %v1889 = vunpack.c.l.b16 %v1754
        %v1890 = vunpack.c.l.b16 %v1755
        %v1891 = vunpack.c.l.b16 %v1756
        %v1892 = vunpack.c.l.b16 %v1757
        %v1893 = vunpack.c.l.b16 %v1758
        %v1894 = vunpack.c.l.b16 %v1759
        %v1895 = vunpack.c.l.b16 %v1760
        %v1896 = vunpack.c.l.b16 %v1761
        %v1897 = vunpack.c.l.b16 %v1762
        %v1898 = vunpack.c.l.b16 %v1763
        %v1899 = vunpack.c.l.b16 %v1764
        %v1900 = vunpack.c.l.b16 %v1765
        %v1901 = vunpack.c.l.b16 %v1766
        %v1902 = vunpack.c.l.b16 %v1767
        %v1903 = vunpack.c.l.b16 %v1768
        %v1904 = vunpack.c.l.b16 %v1769
        %v1905 = vunpack.c.l.b16 %v1770
        %v1906 = vunpack.c.l.b16 %v1771
        %v1907 = vunpack.c.l.b16 %v1772
        %v1908 = vunpack.c.l.b16 %v1773
        %v1909 = vunpack.c.l.b16 %v1774
        %v1910 = vunpack.c.l.b16 %v1775
        %v1911 = vunpack.c.l.b16 %v1776
        %v1912 = vunpack.c.l.b16 %v1777
        %v1913 = vunpack.c.l.b16 %v1778
        %v1914 = vunpack.c.l.b16 %v1779
        %v1915 = vunpack.c.l.b16 %v1780
        %v1916 = vunpack.c.l.b16 %v1781
        %v1917 = vunpack.c.l.b16 %v1782
        %v1918 = vunpack.c.l.b16 %v1783
        %v1919 = vunpack.c.l.b16 %v1784
        %v1920 = vunpack.c.l.b16 %v1785
        %v1921 = vunpack.c.l.b16 %v1786
        %v1922 = vpack.c.b16 %v1859, %v1858
        %v1923 = vpack.c.b16 %v1861, %v1860
        %v1924 = vpack.c.b16 %v1863, %v1862
        %v1925 = vpack.c.b16 %v1865, %v1864
        %v1926 = vpack.c.b16 %v1867, %v1866
        %v1927 = vpack.c.b16 %v1869, %v1868
        %v1928 = vpack.c.b16 %v1871, %v1870
        %v1929 = vpack.c.b16 %v1873, %v1872
        %v1930 = vpack.c.b16 %v1875, %v1874
        %v1931 = vpack.c.b16 %v1877, %v1876
        %v1932 = vpack.c.b16 %v1879, %v1878
        %v1933 = vpack.c.b16 %v1881, %v1880
        %v1934 = vpack.c.b16 %v1883, %v1882
        %v1935 = vpack.c.b16 %v1885, %v1884
        %v1936 = vpack.c.b16 %v1887, %v1886
        %v1937 = vpack.c.b16 %v1889, %v1888
        %v1938 = vpack.c.b16 %v1891, %v1890
        %v1939 = vpack.c.b16 %v1893, %v1892
        %v1940 = vpack.c.b16 %v1895, %v1894
        %v1941 = vpack.c.b16 %v1897, %v1896
        %v1942 = vpack.c.b16 %v1899, %v1898
        %v1943 = vpack.c.b16 %v1901, %v1900
        %v1944 = vpack.c.b16 %v1903, %v1902
        %v1945 = vpack.c.b16 %v1905, %v1904
        %v1946 = vpack.c.b16 %v1907, %v1906
        %v1947 = vpack.c.b16 %v1909, %v1908
        %v1948 = vpack.c.b16 %v1911, %v1910
        %v1949 = vpack.c.b16 %v1913, %v1912
        %v1950 = vpack.c.b16 %v1915, %v1914
        %v1951 = vpack.c.b16 %v1917, %v1916
        %v1952 = vpack.c.b16 %v1919, %v1918
        %v1953 = vpack.c.b16 %v1921, %v1920
        %1986 = vmatprep.subr.bf16.mxu0 0
        %1987 = vmatpush1.bf16.msra.mxu0 %v1922
        %1988 = vmatprep.subr.bf16.mxu0 0
        %1989 = vmatpush1.bf16.msra.mxu0 %v1923
        %1990 = vmatprep.subr.bf16.mxu0 0
        %1991 = vmatpush1.bf16.msra.mxu0 %v1924
        %1992 = vmatprep.subr.bf16.mxu0 0
        %1993 = vmatpush1.bf16.msra.mxu0 %v1925
        %1994 = vmatprep.subr.bf16.mxu0 0
        %1995 = vmatpush1.bf16.msra.mxu0 %v1926
        %1996 = vmatprep.subr.bf16.mxu0 0
        %1997 = vmatpush1.bf16.msra.mxu0 %v1927
        %1998 = vmatprep.subr.bf16.mxu0 0
        %1999 = vmatpush1.bf16.msra.mxu0 %v1928
        %2000 = vmatprep.subr.bf16.mxu0 0
        %2001 = vmatpush1.bf16.msra.mxu0 %v1929
        %2002 = vmatprep.subr.bf16.mxu0 0
        %2003 = vmatpush1.bf16.msra.mxu0 %v1930
        %2004 = vmatprep.subr.bf16.mxu0 0
        %2005 = vmatpush1.bf16.msra.mxu0 %v1931
        %2006 = vmatprep.subr.bf16.mxu0 0
        %2007 = vmatpush1.bf16.msra.mxu0 %v1932
        %2008 = vmatprep.subr.bf16.mxu0 0
        %2009 = vmatpush1.bf16.msra.mxu0 %v1933
        %2010 = vmatprep.subr.bf16.mxu0 0
        %2011 = vmatpush1.bf16.msra.mxu0 %v1934
        %2012 = vmatprep.subr.bf16.mxu0 0
        %2013 = vmatpush1.bf16.msra.mxu0 %v1935
        %2014 = vmatprep.subr.bf16.mxu0 0
        %2015 = vmatpush1.bf16.msra.mxu0 %v1936
        %2016 = vmatprep.subr.bf16.mxu0 0
        %2017 = vmatpush1.bf16.msra.mxu0 %v1937
        %2018 = vmatprep.mubr.bf16.mxu0 %v1720
        %2019 = vmatmul.mubr.bf16.gmra.mrb[0].mxu0 %v1719
        %v2020 = vpop.f32.mrb[0].mxu0
        %v2021 = vadd.f32 %v1792, %v2020
        %v2022 = vpop.f32.mrb[0].mxu0
        %v2023 = vpop.f32.mrb[0].mxu0
        %v2024 = vpop.f32.mrb[0].mxu0
        %2025 = vdwg.mxu0
        %2026 = vmatprep.subr.bf16.mxu0 0
        %2027 = vmatpush1.bf16.msra.mxu0 %v1938
        %2028 = vmatprep.subr.bf16.mxu0 0
        %2029 = vmatpush1.bf16.msra.mxu0 %v1939
        %2030 = vmatprep.subr.bf16.mxu0 0
        %2031 = vmatpush1.bf16.msra.mxu0 %v1940
        %2032 = vmatprep.subr.bf16.mxu0 0
        %2033 = vmatpush1.bf16.msra.mxu0 %v1941
        %2034 = vmatprep.subr.bf16.mxu0 0
        %2035 = vmatpush1.bf16.msra.mxu0 %v1942
        %2036 = vmatprep.subr.bf16.mxu0 0
        %2037 = vmatpush1.bf16.msra.mxu0 %v1943
        %2038 = vmatprep.subr.bf16.mxu0 0
        %2039 = vmatpush1.bf16.msra.mxu0 %v1944
        %2040 = vmatprep.subr.bf16.mxu0 0
        %2041 = vmatpush1.bf16.msra.mxu0 %v1945
        %2042 = vmatprep.subr.bf16.mxu0 0
        %2043 = vmatpush1.bf16.msra.mxu0 %v1946
        %2044 = vmatprep.subr.bf16.mxu0 0
        %2045 = vmatpush1.bf16.msra.mxu0 %v1947
        %2046 = vmatprep.subr.bf16.mxu0 0
        %2047 = vmatpush1.bf16.msra.mxu0 %v1948
        %2048 = vmatprep.subr.bf16.mxu0 0
        %2049 = vmatpush1.bf16.msra.mxu0 %v1949
        %2050 = vmatprep.subr.bf16.mxu0 0
        %2051 = vmatpush1.bf16.msra.mxu0 %v1950
        %2052 = vmatprep.subr.bf16.mxu0 0
        %2053 = vmatpush1.bf16.msra.mxu0 %v1951
        %2054 = vmatprep.subr.bf16.mxu0 0
        %2055 = vmatpush1.bf16.msra.mxu0 %v1952
        %2056 = vmatprep.subr.bf16.mxu0 0
        %2057 = vmatpush1.bf16.msra.mxu0 %v1953
        %2058 = vmatprep.mubr.bf16.mxu0 %v1722
        %2059 = vmatmul.mubr.bf16.gmra.mrb[0].mxu0 %v1721
        %v2060 = vpop.f32.mrb[0].mxu0
        %v2061 = vadd.f32 %v2021, %v2060
        %v2062 = vpop.f32.mrb[0].mxu0
        %v2063 = vpop.f32.mrb[0].mxu0
        %v2064 = vpop.f32.mrb[0].mxu0
        %2065 = vdwg.mxu0
        %v2066 = vadd.f32 %v454, %v2061
        %v2067 = vld [vmem:[%s6] sm:$0x1]
        %v2068 = vld [vmem:[%s7] sm:$0x1]
        %2069 = vadd.xlane.f32.xlu0 %v2066
        %v2070 = vpop.xlane.xlu0 %2069
        %v2071 = vmul.f32 %v2070, 0.03125
        %v2072 = vmul.f32 %v2066, %v2066
        %2073 = vadd.xlane.f32.xlu0 %v2072
        %v2074 = vpop.xlane.xlu0 %2073
        %v2075 = vmul.f32 %v2074, 0.03125
        %v2076 = vmul.f32 %v2071, %v2071
        %v2077 = vsub.f32 %v2075, %v2076
        %v2078 = vsub.f32 %v2066, %v2071
        %v2079 = vadd.f32 %v2077, 1e-05
        %v2080 = vrsqrt.pop %v2079
        %v2081 = vmul.f32 %v2078, %v2080
        %v2083 = vlaneseq
        %v2084 = vshrl.u32 %v2083, 7
        %v2085 = vsub.s32 0, %v2084
        %v2086 = vrot.slane %v2067, %v2085
        %v2088 = vmul.f32 %v2081, %v2086
        %v2090 = vlaneseq
        %v2091 = vshrl.u32 %v2090, 7
        %v2092 = vsub.s32 0, %v2091
        %v2093 = vrot.slane %v2068, %v2092
        %v2095 = vadd.f32 %v2088, %v2093
        %v2096 = vpack.c.bf16 %v2095, %v2095
        %v2097 = vld [vmem:[%s8] sm:$0xf]
        %v2098 = vld [vmem:[%s8 + $0x4] sm:$0xf]
        %v2099 = vld [vmem:[%s8 + $0x8] sm:$0xf]
        %v2100 = vld [vmem:[%s8 + $0xc] sm:$0xf]
        %v2101 = vld [vmem:[%s8 + $0x10] sm:$0xf]
        %v2102 = vld [vmem:[%s8 + $0x14] sm:$0xf]
        %v2103 = vld [vmem:[%s8 + $0x18] sm:$0xf]
        %v2104 = vld [vmem:[%s8 + $0x1c] sm:$0xf]
        %v2105 = vld [vmem:[%s8 + $0x20] sm:$0xf]
        %v2106 = vld [vmem:[%s8 + $0x24] sm:$0xf]
        %v2107 = vld [vmem:[%s8 + $0x28] sm:$0xf]
        %v2108 = vld [vmem:[%s8 + $0x2c] sm:$0xf]
        %v2109 = vld [vmem:[%s8 + $0x30] sm:$0xf]
        %v2110 = vld [vmem:[%s8 + $0x34] sm:$0xf]
        %v2111 = vld [vmem:[%s8 + $0x38] sm:$0xf]
        %v2112 = vld [vmem:[%s8 + $0x3c] sm:$0xf]
        %v2113 = vld [vmem:[%s9] sm:$0x1]
        %v2115 = vlaneseq
        %v2116 = vshrl.u32 %v2115, 7
        %v2117 = vsub.s32 0, %v2116
        %v2118 = vrot.slane %v2113, %v2117
        %v2136 = vunpack.c.l.b16 %v2097
        %v2137 = vunpack.c.l.b16 %v2098
        %v2138 = vunpack.c.l.b16 %v2099
        %v2139 = vunpack.c.l.b16 %v2100
        %v2140 = vunpack.c.l.b16 %v2101
        %v2141 = vunpack.c.l.b16 %v2102
        %v2142 = vunpack.c.l.b16 %v2103
        %v2143 = vunpack.c.l.b16 %v2104
        %v2144 = vunpack.c.l.b16 %v2105
        %v2145 = vunpack.c.l.b16 %v2106
        %v2146 = vunpack.c.l.b16 %v2107
        %v2147 = vunpack.c.l.b16 %v2108
        %v2148 = vunpack.c.l.b16 %v2109
        %v2149 = vunpack.c.l.b16 %v2110
        %v2150 = vunpack.c.l.b16 %v2111
        %v2151 = vunpack.c.l.b16 %v2112
        %v2152 = vpack.c.b16 %v2137, %v2136
        %v2153 = vpack.c.b16 %v2139, %v2138
        %v2154 = vpack.c.b16 %v2141, %v2140
        %v2155 = vpack.c.b16 %v2143, %v2142
        %v2156 = vpack.c.b16 %v2145, %v2144
        %v2157 = vpack.c.b16 %v2147, %v2146
        %v2158 = vpack.c.b16 %v2149, %v2148
        %v2159 = vpack.c.b16 %v2151, %v2150
        %2168 = vmatprep.subr.bf16.mxu0 0
        %2169 = vmatpush1.bf16.msra.mxu0 %v2152
        %2170 = vmatprep.subr.bf16.mxu0 0
        %2171 = vmatpush1.bf16.msra.mxu0 %v2153
        %2172 = vmatprep.subr.bf16.mxu0 0
        %2173 = vmatpush1.bf16.msra.mxu0 %v2154
        %2174 = vmatprep.subr.bf16.mxu0 0
        %2175 = vmatpush1.bf16.msra.mxu0 %v2155
        %2176 = vmatprep.subr.bf16.mxu0 0
        %2177 = vmatpush1.bf16.msra.mxu0 %v2156
        %2178 = vmatprep.subr.bf16.mxu0 0
        %2179 = vmatpush1.bf16.msra.mxu0 %v2157
        %2180 = vmatprep.subr.bf16.mxu0 0
        %2181 = vmatpush1.bf16.msra.mxu0 %v2158
        %2182 = vmatprep.subr.bf16.mxu0 0
        %2183 = vmatpush1.bf16.msra.mxu0 %v2159
        %2184 = vmatprep.subr.bf16.mxu0 0
        %2185 = vmatpush1.bf16.msra.mxu0 0
        %2186 = vmatprep.subr.bf16.mxu0 0
        %2187 = vmatpush1.bf16.msra.mxu0 0
        %2188 = vmatprep.subr.bf16.mxu0 0
        %2189 = vmatpush1.bf16.msra.mxu0 0
        %2190 = vmatprep.subr.bf16.mxu0 0
        %2191 = vmatpush1.bf16.msra.mxu0 0
        %2192 = vmatprep.subr.bf16.mxu0 0
        %2193 = vmatpush1.bf16.msra.mxu0 0
        %2194 = vmatprep.subr.bf16.mxu0 0
        %2195 = vmatpush1.bf16.msra.mxu0 0
        %2196 = vmatprep.subr.bf16.mxu0 0
        %2197 = vmatpush1.bf16.msra.mxu0 0
        %2198 = vmatprep.subr.bf16.mxu0 0
        %2199 = vmatpush1.bf16.msra.mxu0 0
        %2200 = vmatprep.mubr.bf16.mxu0 0
        %2201 = vmatmul.mubr.bf16.gmra.mrb[0].mxu0 %v2096
        %v2202 = vpop.f32.mrb[0].mxu0
        %v2203 = vadd.f32 %v2118, %v2202
        %v2204 = vpop.f32.mrb[0].mxu0
        %v2205 = vpop.f32.mrb[0].mxu0
        %v2206 = vpop.f32.mrb[0].mxu0
        %2207 = vdwg.mxu0
        %v2208 = vmax.f32 %v2203, 0.0
        %v2209 = vpack.c.bf16 %v2208, %v2208
        %v2210 = vld [vmem:[#allocation6] sm:$0xf]
        %v2211 = vld [vmem:[#allocation6 + $0x4] sm:$0xf]
        %v2212 = vld [vmem:[#allocation6 + $0x8] sm:$0xf]
        %v2213 = vld [vmem:[#allocation6 + $0xc] sm:$0xf]
        %v2214 = vld [vmem:[#allocation6 + $0x10] sm:$0xf]
        %v2215 = vld [vmem:[#allocation6 + $0x14] sm:$0xf]
        %v2216 = vld [vmem:[#allocation6 + $0x18] sm:$0xf]
        %v2217 = vld [vmem:[#allocation6 + $0x1c] sm:$0xf]
        %v2218 = vld [vmem:[#allocation6 + $0x20] sm:$0xf]
        %v2219 = vld [vmem:[#allocation6 + $0x24] sm:$0xf]
        %v2220 = vld [vmem:[#allocation6 + $0x28] sm:$0xf]
        %v2221 = vld [vmem:[#allocation6 + $0x2c] sm:$0xf]
        %v2222 = vld [vmem:[#allocation6 + $0x30] sm:$0xf]
        %v2223 = vld [vmem:[#allocation6 + $0x34] sm:$0xf]
        %v2224 = vld [vmem:[#allocation6 + $0x38] sm:$0xf]
        %v2225 = vld [vmem:[#allocation6 + $0x3c] sm:$0xf]
        %v2226 = vld [vmem:[%s11] sm:$0x1]
        %v2228 = vlaneseq
        %v2229 = vshrl.u32 %v2228, 7
        %v2230 = vsub.s32 0, %v2229
        %v2231 = vrot.slane %v2226, %v2230
        %v2249 = vunpack.c.l.b16 %v2210
        %v2250 = vunpack.c.l.b16 %v2211
        %v2251 = vunpack.c.l.b16 %v2212
        %v2252 = vunpack.c.l.b16 %v2213
        %v2253 = vunpack.c.l.b16 %v2214
        %v2254 = vunpack.c.l.b16 %v2215
        %v2255 = vunpack.c.l.b16 %v2216
        %v2256 = vunpack.c.l.b16 %v2217
        %v2257 = vunpack.c.l.b16 %v2218
        %v2258 = vunpack.c.l.b16 %v2219
        %v2259 = vunpack.c.l.b16 %v2220
        %v2260 = vunpack.c.l.b16 %v2221
        %v2261 = vunpack.c.l.b16 %v2222
        %v2262 = vunpack.c.l.b16 %v2223
        %v2263 = vunpack.c.l.b16 %v2224
        %v2264 = vunpack.c.l.b16 %v2225
        %v2265 = vpack.c.b16 %v2250, %v2249
        %v2266 = vpack.c.b16 %v2252, %v2251
        %v2267 = vpack.c.b16 %v2254, %v2253
        %v2268 = vpack.c.b16 %v2256, %v2255
        %v2269 = vpack.c.b16 %v2258, %v2257
        %v2270 = vpack.c.b16 %v2260, %v2259
        %v2271 = vpack.c.b16 %v2262, %v2261
        %v2272 = vpack.c.b16 %v2264, %v2263
        %2281 = vmatprep.subr.bf16.mxu0 0
        %2282 = vmatpush1.bf16.msra.mxu0 %v2265
        %2283 = vmatprep.subr.bf16.mxu0 0
        %2284 = vmatpush1.bf16.msra.mxu0 %v2266
        %2285 = vmatprep.subr.bf16.mxu0 0
        %2286 = vmatpush1.bf16.msra.mxu0 %v2267
        %2287 = vmatprep.subr.bf16.mxu0 0
        %2288 = vmatpush1.bf16.msra.mxu0 %v2268
        %2289 = vmatprep.subr.bf16.mxu0 0
        %2290 = vmatpush1.bf16.msra.mxu0 %v2269
        %2291 = vmatprep.subr.bf16.mxu0 0
        %2292 = vmatpush1.bf16.msra.mxu0 %v2270
        %2293 = vmatprep.subr.bf16.mxu0 0
        %2294 = vmatpush1.bf16.msra.mxu0 %v2271
        %2295 = vmatprep.subr.bf16.mxu0 0
        %2296 = vmatpush1.bf16.msra.mxu0 %v2272
        %2297 = vmatprep.subr.bf16.mxu0 0
        %2298 = vmatpush1.bf16.msra.mxu0 0
        %2299 = vmatprep.subr.bf16.mxu0 0
        %2300 = vmatpush1.bf16.msra.mxu0 0
        %2301 = vmatprep.subr.bf16.mxu0 0
        %2302 = vmatpush1.bf16.msra.mxu0 0
        %2303 = vmatprep.subr.bf16.mxu0 0
        %2304 = vmatpush1.bf16.msra.mxu0 0
        %2305 = vmatprep.subr.bf16.mxu0 0
        %2306 = vmatpush1.bf16.msra.mxu0 0
        %2307 = vmatprep.subr.bf16.mxu0 0
        %2308 = vmatpush1.bf16.msra.mxu0 0
        %2309 = vmatprep.subr.bf16.mxu0 0
        %2310 = vmatpush1.bf16.msra.mxu0 0
        %2311 = vmatprep.subr.bf16.mxu0 0
        %2312 = vmatpush1.bf16.msra.mxu0 0
        %2313 = vmatprep.mubr.bf16.mxu0 0
        %2314 = vmatmul.mubr.bf16.gmra.mrb[0].mxu0 %v2209
        %v2315 = vpop.f32.mrb[0].mxu0
        %v2316 = vadd.f32 %v2231, %v2315
        %v2317 = vpop.f32.mrb[0].mxu0
        %v2318 = vpop.f32.mrb[0].mxu0
        %v2319 = vpop.f32.mrb[0].mxu0
        %2320 = vdwg.mxu0
        %v2321 = vadd.f32 %v2066, %v2316
        %s2322 = scalar_lea.vmem %s1, 1
        %v2323 = vld [vmem:[%s2322] sm:$0x1]
        %s2324 = scalar_lea.vmem %s2, 1
        %v2325 = vld [vmem:[%s2324] sm:$0x1]
        %2326 = vadd.xlane.f32.xlu0 %v2321
        %v2327 = vpop.xlane.xlu0 %2326
        %v2328 = vmul.f32 %v2327, 0.03125
        %v2329 = vmul.f32 %v2321, %v2321
        %2330 = vadd.xlane.f32.xlu0 %v2329
        %v2331 = vpop.xlane.xlu0 %2330
        %v2332 = vmul.f32 %v2331, 0.03125
        %v2333 = vmul.f32 %v2328, %v2328
        %v2334 = vsub.f32 %v2332, %v2333
        %v2335 = vsub.f32 %v2321, %v2328
        %v2336 = vadd.f32 %v2334, 1e-05
        %v2337 = vrsqrt.pop %v2336
        %v2338 = vmul.f32 %v2335, %v2337
        %v2340 = vlaneseq
        %v2341 = vshrl.u32 %v2340, 7
        %v2342 = vsub.s32 0, %v2341
        %v2343 = vrot.slane %v2323, %v2342
        %v2345 = vmul.f32 %v2338, %v2343
        %v2347 = vlaneseq
        %v2348 = vshrl.u32 %v2347, 7
        %v2349 = vsub.s32 0, %v2348
        %v2350 = vrot.slane %v2325, %v2349
        %v2352 = vadd.f32 %v2345, %v2350
        %v2353 = vpack.c.bf16 %v2352, %v2352
        %s2354 = scalar_lea.vmem [#allocation2], 768
        %v2355 = vld [vmem:[%s2354] sm:$0xff]
        %v2356 = vld [vmem:[%s2354 + $0x8] sm:$0xff]
        %v2357 = vld [vmem:[%s2354 + $0x10] sm:$0xff]
        %v2358 = vld [vmem:[%s2354 + $0x18] sm:$0xff]
        %v2359 = vld [vmem:[%s2354 + $0x20] sm:$0xff]
        %v2360 = vld [vmem:[%s2354 + $0x28] sm:$0xff]
        %v2361 = vld [vmem:[%s2354 + $0x30] sm:$0xff]
        %v2362 = vld [vmem:[%s2354 + $0x38] sm:$0xff]
        %v2363 = vld [vmem:[%s2354 + $0x40] sm:$0xff]
        %v2364 = vld [vmem:[%s2354 + $0x48] sm:$0xff]
        %v2365 = vld [vmem:[%s2354 + $0x50] sm:$0xff]
        %v2366 = vld [vmem:[%s2354 + $0x58] sm:$0xff]
        %v2367 = vld [vmem:[%s2354 + $0x60] sm:$0xff]
        %v2368 = vld [vmem:[%s2354 + $0x68] sm:$0xff]
        %v2369 = vld [vmem:[%s2354 + $0x70] sm:$0xff]
        %v2370 = vld [vmem:[%s2354 + $0x78] sm:$0xff]
        %v2371 = vld [vmem:[%s2354 + $0x80] sm:$0xff]
        %v2372 = vld [vmem:[%s2354 + $0x88] sm:$0xff]
        %v2373 = vld [vmem:[%s2354 + $0x90] sm:$0xff]
        %v2374 = vld [vmem:[%s2354 + $0x98] sm:$0xff]
        %v2375 = vld [vmem:[%s2354 + $0xa0] sm:$0xff]
        %v2376 = vld [vmem:[%s2354 + $0xa8] sm:$0xff]
        %v2377 = vld [vmem:[%s2354 + $0xb0] sm:$0xff]
        %v2378 = vld [vmem:[%s2354 + $0xb8] sm:$0xff]
        %v2379 = vld [vmem:[%s2354 + $0xc0] sm:$0xff]
        %v2380 = vld [vmem:[%s2354 + $0xc8] sm:$0xff]
        %v2381 = vld [vmem:[%s2354 + $0xd0] sm:$0xff]
        %v2382 = vld [vmem:[%s2354 + $0xd8] sm:$0xff]
        %v2383 = vld [vmem:[%s2354 + $0xe0] sm:$0xff]
        %v2384 = vld [vmem:[%s2354 + $0xe8] sm:$0xff]
        %v2385 = vld [vmem:[%s2354 + $0xf0] sm:$0xff]
        %v2386 = vld [vmem:[%s2354 + $0xf8] sm:$0xff]
        %v2387 = vld [vmem:[%s2354 + $0x100] sm:$0xff]
        %v2388 = vld [vmem:[%s2354 + $0x108] sm:$0xff]
        %v2389 = vld [vmem:[%s2354 + $0x110] sm:$0xff]
        %v2390 = vld [vmem:[%s2354 + $0x118] sm:$0xff]
        %v2391 = vld [vmem:[%s2354 + $0x120] sm:$0xff]
        %v2392 = vld [vmem:[%s2354 + $0x128] sm:$0xff]
        %v2393 = vld [vmem:[%s2354 + $0x130] sm:$0xff]
        %v2394 = vld [vmem:[%s2354 + $0x138] sm:$0xff]
        %v2395 = vld [vmem:[%s2354 + $0x140] sm:$0xff]
        %v2396 = vld [vmem:[%s2354 + $0x148] sm:$0xff]
        %v2397 = vld [vmem:[%s2354 + $0x150] sm:$0xff]
        %v2398 = vld [vmem:[%s2354 + $0x158] sm:$0xff]
        %v2399 = vld [vmem:[%s2354 + $0x160] sm:$0xff]
        %v2400 = vld [vmem:[%s2354 + $0x168] sm:$0xff]
        %v2401 = vld [vmem:[%s2354 + $0x170] sm:$0xff]
        %v2402 = vld [vmem:[%s2354 + $0x178] sm:$0xff]
        %v2403 = vld [vmem:[%s2354 + $0x180] sm:$0xff]
        %v2404 = vld [vmem:[%s2354 + $0x188] sm:$0xff]
        %v2405 = vld [vmem:[%s2354 + $0x190] sm:$0xff]
        %v2406 = vld [vmem:[%s2354 + $0x198] sm:$0xff]
        %v2407 = vld [vmem:[%s2354 + $0x1a0] sm:$0xff]
        %v2408 = vld [vmem:[%s2354 + $0x1a8] sm:$0xff]
        %v2409 = vld [vmem:[%s2354 + $0x1b0] sm:$0xff]
        %v2410 = vld [vmem:[%s2354 + $0x1b8] sm:$0xff]
        %v2411 = vld [vmem:[%s2354 + $0x1c0] sm:$0xff]
        %v2412 = vld [vmem:[%s2354 + $0x1c8] sm:$0xff]
        %v2413 = vld [vmem:[%s2354 + $0x1d0] sm:$0xff]
        %v2414 = vld [vmem:[%s2354 + $0x1d8] sm:$0xff]
        %v2415 = vld [vmem:[%s2354 + $0x1e0] sm:$0xff]
        %v2416 = vld [vmem:[%s2354 + $0x1e8] sm:$0xff]
        %v2417 = vld [vmem:[%s2354 + $0x1f0] sm:$0xff]
        %v2418 = vld [vmem:[%s2354 + $0x1f8] sm:$0xff]
        %v2419 = vld [vmem:[%s2354 + $0x200] sm:$0xff]
        %v2420 = vld [vmem:[%s2354 + $0x208] sm:$0xff]
        %v2421 = vld [vmem:[%s2354 + $0x210] sm:$0xff]
        %v2422 = vld [vmem:[%s2354 + $0x218] sm:$0xff]
        %v2423 = vld [vmem:[%s2354 + $0x220] sm:$0xff]
        %v2424 = vld [vmem:[%s2354 + $0x228] sm:$0xff]
        %v2425 = vld [vmem:[%s2354 + $0x230] sm:$0xff]
        %v2426 = vld [vmem:[%s2354 + $0x238] sm:$0xff]
        %v2427 = vld [vmem:[%s2354 + $0x240] sm:$0xff]
        %v2428 = vld [vmem:[%s2354 + $0x248] sm:$0xff]
        %v2429 = vld [vmem:[%s2354 + $0x250] sm:$0xff]
        %v2430 = vld [vmem:[%s2354 + $0x258] sm:$0xff]
        %v2431 = vld [vmem:[%s2354 + $0x260] sm:$0xff]
        %v2432 = vld [vmem:[%s2354 + $0x268] sm:$0xff]
        %v2433 = vld [vmem:[%s2354 + $0x270] sm:$0xff]
        %v2434 = vld [vmem:[%s2354 + $0x278] sm:$0xff]
        %v2435 = vld [vmem:[%s2354 + $0x280] sm:$0xff]
        %v2436 = vld [vmem:[%s2354 + $0x288] sm:$0xff]
        %v2437 = vld [vmem:[%s2354 + $0x290] sm:$0xff]
        %v2438 = vld [vmem:[%s2354 + $0x298] sm:$0xff]
        %v2439 = vld [vmem:[%s2354 + $0x2a0] sm:$0xff]
        %v2440 = vld [vmem:[%s2354 + $0x2a8] sm:$0xff]
        %v2441 = vld [vmem:[%s2354 + $0x2b0] sm:$0xff]
        %v2442 = vld [vmem:[%s2354 + $0x2b8] sm:$0xff]
        %v2443 = vld [vmem:[%s2354 + $0x2c0] sm:$0xff]
        %v2444 = vld [vmem:[%s2354 + $0x2c8] sm:$0xff]
        %v2445 = vld [vmem:[%s2354 + $0x2d0] sm:$0xff]
        %v2446 = vld [vmem:[%s2354 + $0x2d8] sm:$0xff]
        %v2447 = vld [vmem:[%s2354 + $0x2e0] sm:$0xff]
        %v2448 = vld [vmem:[%s2354 + $0x2e8] sm:$0xff]
        %v2449 = vld [vmem:[%s2354 + $0x2f0] sm:$0xff]
        %v2450 = vld [vmem:[%s2354 + $0x2f8] sm:$0xff]
        %v2547 = vunpack.c.l.b16 %v2355
        %v2548 = vunpack.c.h.b16 %v2355
        %v2549 = vunpack.c.l.b16 %v2356
        %v2550 = vunpack.c.h.b16 %v2356
        %v2551 = vunpack.c.l.b16 %v2357
        %v2552 = vunpack.c.h.b16 %v2357
        %v2553 = vunpack.c.l.b16 %v2358
        %v2554 = vunpack.c.h.b16 %v2358
        %v2555 = vunpack.c.l.b16 %v2359
        %v2556 = vunpack.c.h.b16 %v2359
        %v2557 = vunpack.c.l.b16 %v2360
        %v2558 = vunpack.c.h.b16 %v2360
        %v2559 = vunpack.c.l.b16 %v2361
        %v2560 = vunpack.c.h.b16 %v2361
        %v2561 = vunpack.c.l.b16 %v2362
        %v2562 = vunpack.c.h.b16 %v2362
        %v2563 = vunpack.c.l.b16 %v2363
        %v2564 = vunpack.c.h.b16 %v2363
        %v2565 = vunpack.c.l.b16 %v2364
        %v2566 = vunpack.c.h.b16 %v2364
        %v2567 = vunpack.c.l.b16 %v2365
        %v2568 = vunpack.c.h.b16 %v2365
        %v2569 = vunpack.c.l.b16 %v2366
        %v2570 = vunpack.c.h.b16 %v2366
        %v2571 = vunpack.c.l.b16 %v2367
        %v2572 = vunpack.c.h.b16 %v2367
        %v2573 = vunpack.c.l.b16 %v2368
        %v2574 = vunpack.c.h.b16 %v2368
        %v2575 = vunpack.c.l.b16 %v2369
        %v2576 = vunpack.c.h.b16 %v2369
        %v2577 = vunpack.c.l.b16 %v2370
        %v2578 = vunpack.c.h.b16 %v2370
        %v2579 = vunpack.c.l.b16 %v2371
        %v2580 = vunpack.c.h.b16 %v2371
        %v2581 = vunpack.c.l.b16 %v2372
        %v2582 = vunpack.c.h.b16 %v2372
        %v2583 = vunpack.c.l.b16 %v2373
        %v2584 = vunpack.c.h.b16 %v2373
        %v2585 = vunpack.c.l.b16 %v2374
        %v2586 = vunpack.c.h.b16 %v2374
        %v2587 = vunpack.c.l.b16 %v2375
        %v2588 = vunpack.c.h.b16 %v2375
        %v2589 = vunpack.c.l.b16 %v2376
        %v2590 = vunpack.c.h.b16 %v2376
        %v2591 = vunpack.c.l.b16 %v2377
        %v2592 = vunpack.c.h.b16 %v2377
        %v2593 = vunpack.c.l.b16 %v2378
        %v2594 = vunpack.c.h.b16 %v2378
        %v2595 = vunpack.c.l.b16 %v2379
        %v2596 = vunpack.c.h.b16 %v2379
        %v2597 = vunpack.c.l.b16 %v2380
        %v2598 = vunpack.c.h.b16 %v2380
        %v2599 = vunpack.c.l.b16 %v2381
        %v2600 = vunpack.c.h.b16 %v2381
        %v2601 = vunpack.c.l.b16 %v2382
        %v2602 = vunpack.c.h.b16 %v2382
        %v2603 = vunpack.c.l.b16 %v2383
        %v2604 = vunpack.c.h.b16 %v2383
        %v2605 = vunpack.c.l.b16 %v2384
        %v2606 = vunpack.c.h.b16 %v2384
        %v2607 = vunpack.c.l.b16 %v2385
        %v2608 = vunpack.c.h.b16 %v2385
        %v2609 = vunpack.c.l.b16 %v2386
        %v2610 = vunpack.c.h.b16 %v2386
        %v2611 = vunpack.c.l.b16 %v2387
        %v2612 = vunpack.c.h.b16 %v2387
        %v2613 = vunpack.c.l.b16 %v2388
        %v2614 = vunpack.c.h.b16 %v2388
        %v2615 = vunpack.c.l.b16 %v2389
        %v2616 = vunpack.c.h.b16 %v2389
        %v2617 = vunpack.c.l.b16 %v2390
        %v2618 = vunpack.c.h.b16 %v2390
        %v2619 = vunpack.c.l.b16 %v2391
        %v2620 = vunpack.c.h.b16 %v2391
        %v2621 = vunpack.c.l.b16 %v2392
        %v2622 = vunpack.c.h.b16 %v2392
        %v2623 = vunpack.c.l.b16 %v2393
        %v2624 = vunpack.c.h.b16 %v2393
        %v2625 = vunpack.c.l.b16 %v2394
        %v2626 = vunpack.c.h.b16 %v2394
        %v2627 = vunpack.c.l.b16 %v2395
        %v2628 = vunpack.c.h.b16 %v2395
        %v2629 = vunpack.c.l.b16 %v2396
        %v2630 = vunpack.c.h.b16 %v2396
        %v2631 = vunpack.c.l.b16 %v2397
        %v2632 = vunpack.c.h.b16 %v2397
        %v2633 = vunpack.c.l.b16 %v2398
        %v2634 = vunpack.c.h.b16 %v2398
        %v2635 = vunpack.c.l.b16 %v2399
        %v2636 = vunpack.c.h.b16 %v2399
        %v2637 = vunpack.c.l.b16 %v2400
        %v2638 = vunpack.c.h.b16 %v2400
        %v2639 = vunpack.c.l.b16 %v2401
        %v2640 = vunpack.c.h.b16 %v2401
        %v2641 = vunpack.c.l.b16 %v2402
        %v2642 = vunpack.c.h.b16 %v2402
        %v2643 = vunpack.c.l.b16 %v2403
        %v2644 = vunpack.c.h.b16 %v2403
        %v2645 = vunpack.c.l.b16 %v2404
        %v2646 = vunpack.c.h.b16 %v2404
        %v2647 = vunpack.c.l.b16 %v2405
        %v2648 = vunpack.c.h.b16 %v2405
        %v2649 = vunpack.c.l.b16 %v2406
        %v2650 = vunpack.c.h.b16 %v2406
        %v2651 = vunpack.c.l.b16 %v2407
        %v2652 = vunpack.c.h.b16 %v2407
        %v2653 = vunpack.c.l.b16 %v2408
        %v2654 = vunpack.c.h.b16 %v2408
        %v2655 = vunpack.c.l.b16 %v2409
        %v2656 = vunpack.c.h.b16 %v2409
        %v2657 = vunpack.c.l.b16 %v2410
        %v2658 = vunpack.c.h.b16 %v2410
        %v2659 = vunpack.c.l.b16 %v2411
        %v2660 = vunpack.c.h.b16 %v2411
        %v2661 = vunpack.c.l.b16 %v2412
        %v2662 = vunpack.c.h.b16 %v2412
        %v2663 = vunpack.c.l.b16 %v2413
        %v2664 = vunpack.c.h.b16 %v2413
        %v2665 = vunpack.c.l.b16 %v2414
        %v2666 = vunpack.c.h.b16 %v2414
        %v2667 = vunpack.c.l.b16 %v2415
        %v2668 = vunpack.c.h.b16 %v2415
        %v2669 = vunpack.c.l.b16 %v2416
        %v2670 = vunpack.c.h.b16 %v2416
        %v2671 = vunpack.c.l.b16 %v2417
        %v2672 = vunpack.c.h.b16 %v2417
        %v2673 = vunpack.c.l.b16 %v2418
        %v2674 = vunpack.c.h.b16 %v2418
        %v2675 = vunpack.c.l.b16 %v2419
        %v2676 = vunpack.c.h.b16 %v2419
        %v2677 = vunpack.c.l.b16 %v2420
        %v2678 = vunpack.c.h.b16 %v2420
        %v2679 = vunpack.c.l.b16 %v2421
        %v2680 = vunpack.c.h.b16 %v2421
        %v2681 = vunpack.c.l.b16 %v2422
        %v2682 = vunpack.c.h.b16 %v2422
        %v2683 = vunpack.c.l.b16 %v2423
        %v2684 = vunpack.c.h.b16 %v2423
        %v2685 = vunpack.c.l.b16 %v2424
        %v2686 = vunpack.c.h.b16 %v2424
        %v2687 = vunpack.c.l.b16 %v2425
        %v2688 = vunpack.c.h.b16 %v2425
        %v2689 = vunpack.c.l.b16 %v2426
        %v2690 = vunpack.c.h.b16 %v2426
        %v2691 = vunpack.c.l.b16 %v2427
        %v2692 = vunpack.c.h.b16 %v2427
        %v2693 = vunpack.c.l.b16 %v2428
        %v2694 = vunpack.c.h.b16 %v2428
        %v2695 = vunpack.c.l.b16 %v2429
        %v2696 = vunpack.c.h.b16 %v2429
        %v2697 = vunpack.c.l.b16 %v2430
        %v2698 = vunpack.c.h.b16 %v2430
        %v2699 = vunpack.c.l.b16 %v2431
        %v2700 = vunpack.c.h.b16 %v2431
        %v2701 = vunpack.c.l.b16 %v2432
        %v2702 = vunpack.c.h.b16 %v2432
        %v2703 = vunpack.c.l.b16 %v2433
        %v2704 = vunpack.c.h.b16 %v2433
        %v2705 = vunpack.c.l.b16 %v2434
        %v2706 = vunpack.c.h.b16 %v2434
        %v2707 = vunpack.c.l.b16 %v2435
        %v2708 = vunpack.c.h.b16 %v2435
        %v2709 = vunpack.c.l.b16 %v2436
        %v2710 = vunpack.c.h.b16 %v2436
        %v2711 = vunpack.c.l.b16 %v2437
        %v2712 = vunpack.c.h.b16 %v2437
        %v2713 = vunpack.c.l.b16 %v2438
        %v2714 = vunpack.c.h.b16 %v2438
        %v2715 = vunpack.c.l.b16 %v2439
        %v2716 = vunpack.c.h.b16 %v2439
        %v2717 = vunpack.c.l.b16 %v2440
        %v2718 = vunpack.c.h.b16 %v2440
        %v2719 = vunpack.c.l.b16 %v2441
        %v2720 = vunpack.c.h.b16 %v2441
        %v2721 = vunpack.c.l.b16 %v2442
        %v2722 = vunpack.c.h.b16 %v2442
        %v2723 = vunpack.c.l.b16 %v2443
        %v2724 = vunpack.c.h.b16 %v2443
        %v2725 = vunpack.c.l.b16 %v2444
        %v2726 = vunpack.c.h.b16 %v2444
        %v2727 = vunpack.c.l.b16 %v2445
        %v2728 = vunpack.c.h.b16 %v2445
        %v2729 = vunpack.c.l.b16 %v2446
        %v2730 = vunpack.c.h.b16 %v2446
        %v2731 = vunpack.c.l.b16 %v2447
        %v2732 = vunpack.c.h.b16 %v2447
        %v2733 = vunpack.c.l.b16 %v2448
        %v2734 = vunpack.c.h.b16 %v2448
        %v2735 = vunpack.c.l.b16 %v2449
        %v2736 = vunpack.c.h.b16 %v2449
        %v2737 = vunpack.c.l.b16 %v2450
        %v2738 = vunpack.c.h.b16 %v2450
        %v2739 = vpack.c.b16 %v2559, %v2547
        %v2740 = vpack.c.b16 %v2560, %v2548
        %v2741 = vpack.c.b16 %v2561, %v2549
        %v2742 = vpack.c.b16 %v2562, %v2550
        %v2743 = vpack.c.b16 %v2563, %v2551
        %v2744 = vpack.c.b16 %v2564, %v2552
        %v2745 = vpack.c.b16 %v2565, %v2553
        %v2746 = vpack.c.b16 %v2566, %v2554
        %v2747 = vpack.c.b16 %v2567, %v2555
        %v2748 = vpack.c.b16 %v2568, %v2556
        %v2749 = vpack.c.b16 %v2569, %v2557
        %v2750 = vpack.c.b16 %v2570, %v2558
        %v2751 = vpack.c.b16 %v2583, %v2571
        %v2752 = vpack.c.b16 %v2584, %v2572
        %v2753 = vpack.c.b16 %v2585, %v2573
        %v2754 = vpack.c.b16 %v2586, %v2574
        %v2755 = vpack.c.b16 %v2587, %v2575
        %v2756 = vpack.c.b16 %v2588, %v2576
        %v2757 = vpack.c.b16 %v2589, %v2577
        %v2758 = vpack.c.b16 %v2590, %v2578
        %v2759 = vpack.c.b16 %v2591, %v2579
        %v2760 = vpack.c.b16 %v2592, %v2580
        %v2761 = vpack.c.b16 %v2593, %v2581
        %v2762 = vpack.c.b16 %v2594, %v2582
        %v2763 = vpack.c.b16 %v2607, %v2595
        %v2764 = vpack.c.b16 %v2608, %v2596
        %v2765 = vpack.c.b16 %v2609, %v2597
        %v2766 = vpack.c.b16 %v2610, %v2598
        %v2767 = vpack.c.b16 %v2611, %v2599
        %v2768 = vpack.c.b16 %v2612, %v2600
        %v2769 = vpack.c.b16 %v2613, %v2601
        %v2770 = vpack.c.b16 %v2614, %v2602
        %v2771 = vpack.c.b16 %v2615, %v2603
        %v2772 = vpack.c.b16 %v2616, %v2604
        %v2773 = vpack.c.b16 %v2617, %v2605
        %v2774 = vpack.c.b16 %v2618, %v2606
        %v2775 = vpack.c.b16 %v2631, %v2619
        %v2776 = vpack.c.b16 %v2632, %v2620
        %v2777 = vpack.c.b16 %v2633, %v2621
        %v2778 = vpack.c.b16 %v2634, %v2622
        %v2779 = vpack.c.b16 %v2635, %v2623
        %v2780 = vpack.c.b16 %v2636, %v2624
        %v2781 = vpack.c.b16 %v2637, %v2625
        %v2782 = vpack.c.b16 %v2638, %v2626
        %v2783 = vpack.c.b16 %v2639, %v2627
        %v2784 = vpack.c.b16 %v2640, %v2628
        %v2785 = vpack.c.b16 %v2641, %v2629
        %v2786 = vpack.c.b16 %v2642, %v2630
        %v2787 = vpack.c.b16 %v2655, %v2643
        %v2788 = vpack.c.b16 %v2656, %v2644
        %v2789 = vpack.c.b16 %v2657, %v2645
        %v2790 = vpack.c.b16 %v2658, %v2646
        %v2791 = vpack.c.b16 %v2659, %v2647
        %v2792 = vpack.c.b16 %v2660, %v2648
        %v2793 = vpack.c.b16 %v2661, %v2649
        %v2794 = vpack.c.b16 %v2662, %v2650
        %v2795 = vpack.c.b16 %v2663, %v2651
        %v2796 = vpack.c.b16 %v2664, %v2652
        %v2797 = vpack.c.b16 %v2665, %v2653
        %v2798 = vpack.c.b16 %v2666, %v2654
        %v2799 = vpack.c.b16 %v2679, %v2667
        %v2800 = vpack.c.b16 %v2680, %v2668
        %v2801 = vpack.c.b16 %v2681, %v2669
        %v2802 = vpack.c.b16 %v2682, %v2670
        %v2803 = vpack.c.b16 %v2683, %v2671
        %v2804 = vpack.c.b16 %v2684, %v2672
        %v2805 = vpack.c.b16 %v2685, %v2673
        %v2806 = vpack.c.b16 %v2686, %v2674
        %v2807 = vpack.c.b16 %v2687, %v2675
        %v2808 = vpack.c.b16 %v2688, %v2676
        %v2809 = vpack.c.b16 %v2689, %v2677
        %v2810 = vpack.c.b16 %v2690, %v2678
        %v2811 = vpack.c.b16 %v2703, %v2691
        %v2812 = vpack.c.b16 %v2704, %v2692
        %v2813 = vpack.c.b16 %v2705, %v2693
        %v2814 = vpack.c.b16 %v2706, %v2694
        %v2815 = vpack.c.b16 %v2707, %v2695
        %v2816 = vpack.c.b16 %v2708, %v2696
        %v2817 = vpack.c.b16 %v2709, %v2697
        %v2818 = vpack.c.b16 %v2710, %v2698
        %v2819 = vpack.c.b16 %v2711, %v2699
        %v2820 = vpack.c.b16 %v2712, %v2700
        %v2821 = vpack.c.b16 %v2713, %v2701
        %v2822 = vpack.c.b16 %v2714, %v2702
        %v2823 = vpack.c.b16 %v2727, %v2715
        %v2824 = vpack.c.b16 %v2728, %v2716
        %v2825 = vpack.c.b16 %v2729, %v2717
        %v2826 = vpack.c.b16 %v2730, %v2718
        %v2827 = vpack.c.b16 %v2731, %v2719
        %v2828 = vpack.c.b16 %v2732, %v2720
        %v2829 = vpack.c.b16 %v2733, %v2721
        %v2830 = vpack.c.b16 %v2734, %v2722
        %v2831 = vpack.c.b16 %v2735, %v2723
        %v2832 = vpack.c.b16 %v2736, %v2724
        %v2833 = vpack.c.b16 %v2737, %v2725
        %v2834 = vpack.c.b16 %v2738, %v2726
        %2931 = vmatprep.subr.bf16.mxu0 %v2740
        %2932 = vmatpush1.bf16.msra.mxu0 %v2739
        %2933 = vmatprep.subr.bf16.mxu0 %v2752
        %2934 = vmatpush1.bf16.msra.mxu0 %v2751
        %2935 = vmatprep.subr.bf16.mxu0 %v2764
        %2936 = vmatpush1.bf16.msra.mxu0 %v2763
        %2937 = vmatprep.subr.bf16.mxu0 %v2776
        %2938 = vmatpush1.bf16.msra.mxu0 %v2775
        %2939 = vmatprep.subr.bf16.mxu0 %v2788
        %2940 = vmatpush1.bf16.msra.mxu0 %v2787
        %2941 = vmatprep.subr.bf16.mxu0 %v2800
        %2942 = vmatpush1.bf16.msra.mxu0 %v2799
        %2943 = vmatprep.subr.bf16.mxu0 %v2812
        %2944 = vmatpush1.bf16.msra.mxu0 %v2811
        %2945 = vmatprep.subr.bf16.mxu0 %v2824
        %2946 = vmatpush1.bf16.msra.mxu0 %v2823
        %2947 = vmatprep.subr.bf16.mxu0 0
        %2948 = vmatpush1.bf16.msra.mxu0 0
        %2949 = vmatprep.subr.bf16.mxu0 0
        %2950 = vmatpush1.bf16.msra.mxu0 0
        %2951 = vmatprep.subr.bf16.mxu0 0
        %2952 = vmatpush1.bf16.msra.mxu0 0
        %2953 = vmatprep.subr.bf16.mxu0 0
        %2954 = vmatpush1.bf16.msra.mxu0 0
        %2955 = vmatprep.subr.bf16.mxu0 0
        %2956 = vmatpush1.bf16.msra.mxu0 0
        %2957 = vmatprep.subr.bf16.mxu0 0
        %2958 = vmatpush1.bf16.msra.mxu0 0
        %2959 = vmatprep.subr.bf16.mxu0 0
        %2960 = vmatpush1.bf16.msra.mxu0 0
        %2961 = vmatprep.subr.bf16.mxu0 0
        %2962 = vmatpush1.bf16.msra.mxu0 0
        %2963 = vmatprep.mubr.bf16.mxu0 0
        %2964 = vmatmul.mubr.bf16.gmra.mrb[0].mxu0 %v2353
        %v2965 = vpop.f32.mrb[0].mxu0
        %v2966 = vadd.f32 0.0, %v2965
        %v2967 = vpop.f32.mrb[0].mxu0
        %v2968 = vadd.f32 0.0, %v2967
        %v2969 = vpop.f32.mrb[0].mxu0
        %v2970 = vpop.f32.mrb[0].mxu0
        %2971 = vdwg.mxu0
        %2972 = vmatprep.subr.bf16.mxu0 %v2742
        %2973 = vmatpush1.bf16.msra.mxu0 %v2741
        %2974 = vmatprep.subr.bf16.mxu0 %v2754
        %2975 = vmatpush1.bf16.msra.mxu0 %v2753
        %2976 = vmatprep.subr.bf16.mxu0 %v2766
        %2977 = vmatpush1.bf16.msra.mxu0 %v2765
        %2978 = vmatprep.subr.bf16.mxu0 %v2778
        %2979 = vmatpush1.bf16.msra.mxu0 %v2777
        %2980 = vmatprep.subr.bf16.mxu0 %v2790
        %2981 = vmatpush1.bf16.msra.mxu0 %v2789
        %2982 = vmatprep.subr.bf16.mxu0 %v2802
        %2983 = vmatpush1.bf16.msra.mxu0 %v2801
        %2984 = vmatprep.subr.bf16.mxu0 %v2814
        %2985 = vmatpush1.bf16.msra.mxu0 %v2813
        %2986 = vmatprep.subr.bf16.mxu0 %v2826
        %2987 = vmatpush1.bf16.msra.mxu0 %v2825
        %2988 = vmatprep.subr.bf16.mxu0 0
        %2989 = vmatpush1.bf16.msra.mxu0 0
        %2990 = vmatprep.subr.bf16.mxu0 0
        %2991 = vmatpush1.bf16.msra.mxu0 0
        %2992 = vmatprep.subr.bf16.mxu0 0
        %2993 = vmatpush1.bf16.msra.mxu0 0
        %2994 = vmatprep.subr.bf16.mxu0 0
        %2995 = vmatpush1.bf16.msra.mxu0 0
        %2996 = vmatprep.subr.bf16.mxu0 0
        %2997 = vmatpush1.bf16.msra.mxu0 0
        %2998 = vmatprep.subr.bf16.mxu0 0
        %2999 = vmatpush1.bf16.msra.mxu0 0
        %3000 = vmatprep.subr.bf16.mxu0 0
        %3001 = vmatpush1.bf16.msra.mxu0 0
        %3002 = vmatprep.subr.bf16.mxu0 0
        %3003 = vmatpush1.bf16.msra.mxu0 0
        %3004 = vmatprep.mubr.bf16.mxu0 0
        %3005 = vmatmul.mubr.bf16.gmra.mrb[0].mxu0 %v2353
        %v3006 = vpop.f32.mrb[0].mxu0
        %v3007 = vadd.f32 0.0, %v3006
        %v3008 = vpop.f32.mrb[0].mxu0
        %v3009 = vadd.f32 0.0, %v3008
        %v3010 = vpop.f32.mrb[0].mxu0
        %v3011 = vpop.f32.mrb[0].mxu0
        %3012 = vdwg.mxu0
        %3013 = vmatprep.subr.bf16.mxu0 %v2744
        %3014 = vmatpush1.bf16.msra.mxu0 %v2743
        %3015 = vmatprep.subr.bf16.mxu0 %v2756
        %3016 = vmatpush1.bf16.msra.mxu0 %v2755
        %3017 = vmatprep.subr.bf16.mxu0 %v2768
        %3018 = vmatpush1.bf16.msra.mxu0 %v2767
        %3019 = vmatprep.subr.bf16.mxu0 %v2780
        %3020 = vmatpush1.bf16.msra.mxu0 %v2779
        %3021 = vmatprep.subr.bf16.mxu0 %v2792
        %3022 = vmatpush1.bf16.msra.mxu0 %v2791
        %3023 = vmatprep.subr.bf16.mxu0 %v2804
        %3024 = vmatpush1.bf16.msra.mxu0 %v2803
        %3025 = vmatprep.subr.bf16.mxu0 %v2816
        %3026 = vmatpush1.bf16.msra.mxu0 %v2815
        %3027 = vmatprep.subr.bf16.mxu0 %v2828
        %3028 = vmatpush1.bf16.msra.mxu0 %v2827
        %3029 = vmatprep.subr.bf16.mxu0 0
        %3030 = vmatpush1.bf16.msra.mxu0 0
        %3031 = vmatprep.subr.bf16.mxu0 0
        %3032 = vmatpush1.bf16.msra.mxu0 0
        %3033 = vmatprep.subr.bf16.mxu0 0
        %3034 = vmatpush1.bf16.msra.mxu0 0
        %3035 = vmatprep.subr.bf16.mxu0 0
        %3036 = vmatpush1.bf16.msra.mxu0 0
        %3037 = vmatprep.subr.bf16.mxu0 0
        %3038 = vmatpush1.bf16.msra.mxu0 0
        %3039 = vmatprep.subr.bf16.mxu0 0
        %3040 = vmatpush1.bf16.msra.mxu0 0
        %3041 = vmatprep.subr.bf16.mxu0 0
        %3042 = vmatpush1.bf16.msra.mxu0 0
        %3043 = vmatprep.subr.bf16.mxu0 0
        %3044 = vmatpush1.bf16.msra.mxu0 0
        %3045 = vmatprep.mubr.bf16.mxu0 0
        %3046 = vmatmul.mubr.bf16.gmra.mrb[0].mxu0 %v2353
        %v3047 = vpop.f32.mrb[0].mxu0
        %v3048 = vadd.f32 0.0, %v3047
        %v3049 = vpop.f32.mrb[0].mxu0
        %v3050 = vadd.f32 0.0, %v3049
        %v3051 = vpop.f32.mrb[0].mxu0
        %v3052 = vpop.f32.mrb[0].mxu0
        %3053 = vdwg.mxu0
        %3054 = vmatprep.subr.bf16.mxu0 %v2746
        %3055 = vmatpush1.bf16.msra.mxu0 %v2745
        %3056 = vmatprep.subr.bf16.mxu0 %v2758
        %3057 = vmatpush1.bf16.msra.mxu0 %v2757
        %3058 = vmatprep.subr.bf16.mxu0 %v2770
        %3059 = vmatpush1.bf16.msra.mxu0 %v2769
        %3060 = vmatprep.subr.bf16.mxu0 %v2782
        %3061 = vmatpush1.bf16.msra.mxu0 %v2781
        %3062 = vmatprep.subr.bf16.mxu0 %v2794
        %3063 = vmatpush1.bf16.msra.mxu0 %v2793
        %3064 = vmatprep.subr.bf16.mxu0 %v2806
        %3065 = vmatpush1.bf16.msra.mxu0 %v2805
        %3066 = vmatprep.subr.bf16.mxu0 %v2818
        %3067 = vmatpush1.bf16.msra.mxu0 %v2817
        %3068 = vmatprep.subr.bf16.mxu0 %v2830
        %3069 = vmatpush1.bf16.msra.mxu0 %v2829
        %3070 = vmatprep.subr.bf16.mxu0 0
        %3071 = vmatpush1.bf16.msra.mxu0 0
        %3072 = vmatprep.subr.bf16.mxu0 0
        %3073 = vmatpush1.bf16.msra.mxu0 0
        %3074 = vmatprep.subr.bf16.mxu0 0
        %3075 = vmatpush1.bf16.msra.mxu0 0
        %3076 = vmatprep.subr.bf16.mxu0 0
        %3077 = vmatpush1.bf16.msra.mxu0 0
        %3078 = vmatprep.subr.bf16.mxu0 0
        %3079 = vmatpush1.bf16.msra.mxu0 0
        %3080 = vmatprep.subr.bf16.mxu0 0
        %3081 = vmatpush1.bf16.msra.mxu0 0
        %3082 = vmatprep.subr.bf16.mxu0 0
        %3083 = vmatpush1.bf16.msra.mxu0 0
        %3084 = vmatprep.subr.bf16.mxu0 0
        %3085 = vmatpush1.bf16.msra.mxu0 0
        %3086 = vmatprep.mubr.bf16.mxu0 0
        %3087 = vmatmul.mubr.bf16.gmra.mrb[0].mxu0 %v2353
        %v3088 = vpop.f32.mrb[0].mxu0
        %v3089 = vadd.f32 0.0, %v3088
        %v3090 = vpop.f32.mrb[0].mxu0
        %v3091 = vadd.f32 0.0, %v3090
        %v3092 = vpop.f32.mrb[0].mxu0
        %v3093 = vpop.f32.mrb[0].mxu0
        %3094 = vdwg.mxu0
        %3095 = vmatprep.subr.bf16.mxu0 %v2748
        %3096 = vmatpush1.bf16.msra.mxu0 %v2747
        %3097 = vmatprep.subr.bf16.mxu0 %v2760
        %3098 = vmatpush1.bf16.msra.mxu0 %v2759
        %3099 = vmatprep.subr.bf16.mxu0 %v2772
        %3100 = vmatpush1.bf16.msra.mxu0 %v2771
        %3101 = vmatprep.subr.bf16.mxu0 %v2784
        %3102 = vmatpush1.bf16.msra.mxu0 %v2783
        %3103 = vmatprep.subr.bf16.mxu0 %v2796
        %3104 = vmatpush1.bf16.msra.mxu0 %v2795
        %3105 = vmatprep.subr.bf16.mxu0 %v2808
        %3106 = vmatpush1.bf16.msra.mxu0 %v2807
        %3107 = vmatprep.subr.bf16.mxu0 %v2820
        %3108 = vmatpush1.bf16.msra.mxu0 %v2819
        %3109 = vmatprep.subr.bf16.mxu0 %v2832
        %3110 = vmatpush1.bf16.msra.mxu0 %v2831
        %3111 = vmatprep.subr.bf16.mxu0 0
        %3112 = vmatpush1.bf16.msra.mxu0 0
        %3113 = vmatprep.subr.bf16.mxu0 0
        %3114 = vmatpush1.bf16.msra.mxu0 0
        %3115 = vmatprep.subr.bf16.mxu0 0
        %3116 = vmatpush1.bf16.msra.mxu0 0
        %3117 = vmatprep.subr.bf16.mxu0 0
        %3118 = vmatpush1.bf16.msra.mxu0 0
        %3119 = vmatprep.subr.bf16.mxu0 0
        %3120 = vmatpush1.bf16.msra.mxu0 0
        %3121 = vmatprep.subr.bf16.mxu0 0
        %3122 = vmatpush1.bf16.msra.mxu0 0
        %3123 = vmatprep.subr.bf16.mxu0 0
        %3124 = vmatpush1.bf16.msra.mxu0 0
        %3125 = vmatprep.subr.bf16.mxu0 0
        %3126 = vmatpush1.bf16.msra.mxu0 0
        %3127 = vmatprep.mubr.bf16.mxu0 0
        %3128 = vmatmul.mubr.bf16.gmra.mrb[0].mxu0 %v2353
        %v3129 = vpop.f32.mrb[0].mxu0
        %v3130 = vadd.f32 0.0, %v3129
        %v3131 = vpop.f32.mrb[0].mxu0
        %v3132 = vadd.f32 0.0, %v3131
        %v3133 = vpop.f32.mrb[0].mxu0
        %v3134 = vpop.f32.mrb[0].mxu0
        %3135 = vdwg.mxu0
        %3136 = vmatprep.subr.bf16.mxu0 %v2750
        %3137 = vmatpush1.bf16.msra.mxu0 %v2749
        %3138 = vmatprep.subr.bf16.mxu0 %v2762
        %3139 = vmatpush1.bf16.msra.mxu0 %v2761
        %3140 = vmatprep.subr.bf16.mxu0 %v2774
        %3141 = vmatpush1.bf16.msra.mxu0 %v2773
        %3142 = vmatprep.subr.bf16.mxu0 %v2786
        %3143 = vmatpush1.bf16.msra.mxu0 %v2785
        %3144 = vmatprep.subr.bf16.mxu0 %v2798
        %3145 = vmatpush1.bf16.msra.mxu0 %v2797
        %3146 = vmatprep.subr.bf16.mxu0 %v2810
        %3147 = vmatpush1.bf16.msra.mxu0 %v2809
        %3148 = vmatprep.subr.bf16.mxu0 %v2822
        %3149 = vmatpush1.bf16.msra.mxu0 %v2821
        %3150 = vmatprep.subr.bf16.mxu0 %v2834
        %3151 = vmatpush1.bf16.msra.mxu0 %v2833
        %3152 = vmatprep.subr.bf16.mxu0 0
        %3153 = vmatpush1.bf16.msra.mxu0 0
        %3154 = vmatprep.subr.bf16.mxu0 0
        %3155 = vmatpush1.bf16.msra.mxu0 0
        %3156 = vmatprep.subr.bf16.mxu0 0
        %3157 = vmatpush1.bf16.msra.mxu0 0
        %3158 = vmatprep.subr.bf16.mxu0 0
        %3159 = vmatpush1.bf16.msra.mxu0 0
        %3160 = vmatprep.subr.bf16.mxu0 0
        %3161 = vmatpush1.bf16.msra.mxu0 0
        %3162 = vmatprep.subr.bf16.mxu0 0
        %3163 = vmatpush1.bf16.msra.mxu0 0
        %3164 = vmatprep.subr.bf16.mxu0 0
        %3165 = vmatpush1.bf16.msra.mxu0 0
        %3166 = vmatprep.subr.bf16.mxu0 0
        %3167 = vmatpush1.bf16.msra.mxu0 0
        %3168 = vmatprep.mubr.bf16.mxu0 0
        %3169 = vmatmul.mubr.bf16.gmra.mrb[0].mxu0 %v2353
        %v3170 = vpop.f32.mrb[0].mxu0
        %v3171 = vadd.f32 0.0, %v3170
        %v3172 = vpop.f32.mrb[0].mxu0
        %v3173 = vadd.f32 0.0, %v3172
        %v3174 = vpop.f32.mrb[0].mxu0
        %v3175 = vpop.f32.mrb[0].mxu0
        %3176 = vdwg.mxu0
        %v3177 = vpack.c.bf16 %v2966, %v2966
        %v3178 = vpack.c.bf16 %v3048, %v3048
        %v3179 = vpack.c.bf16 %v3130, %v3130
        %3180 = vmatprep.subr.bf16.mxu0 0
        %3181 = vmatpush1.bf16.xpose.msra.mxu0 %v3178
        %3182 = vmatprep.subr.bf16.mxu0 0
        %3183 = vmatpush1.bf16.xpose.msra.mxu0 0
        %3184 = vmatprep.subr.bf16.mxu0 0
        %3185 = vmatpush1.bf16.xpose.msra.mxu0 0
        %3186 = vmatprep.subr.bf16.mxu0 0
        %3187 = vmatpush1.bf16.xpose.msra.mxu0 0
        %3188 = vmatprep.subr.bf16.mxu0 0
        %3189 = vmatpush1.bf16.xpose.msra.mxu0 0
        %3190 = vmatprep.subr.bf16.mxu0 0
        %3191 = vmatpush1.bf16.xpose.msra.mxu0 0
        %3192 = vmatprep.subr.bf16.mxu0 0
        %3193 = vmatpush1.bf16.xpose.msra.mxu0 0
        %3194 = vmatprep.subr.bf16.mxu0 0
        %3195 = vmatpush1.bf16.xpose.msra.mxu0 0
        %3196 = vmatprep.subr.bf16.mxu0 0
        %3197 = vmatpush1.bf16.xpose.msra.mxu0 0
        %3198 = vmatprep.subr.bf16.mxu0 0
        %3199 = vmatpush1.bf16.xpose.msra.mxu0 0
        %3200 = vmatprep.subr.bf16.mxu0 0
        %3201 = vmatpush1.bf16.xpose.msra.mxu0 0
        %3202 = vmatprep.subr.bf16.mxu0 0
        %3203 = vmatpush1.bf16.xpose.msra.mxu0 0
        %3204 = vmatprep.subr.bf16.mxu0 0
        %3205 = vmatpush1.bf16.xpose.msra.mxu0 0
        %3206 = vmatprep.subr.bf16.mxu0 0
        %3207 = vmatpush1.bf16.xpose.msra.mxu0 0
        %3208 = vmatprep.subr.bf16.mxu0 0
        %3209 = vmatpush1.bf16.xpose.msra.mxu0 0
        %3210 = vmatprep.subr.bf16.mxu0 0
        %3211 = vmatpush1.bf16.xpose.msra.mxu0 0
        %3212 = vmatprep.mubr.bf16.mxu0 0
        %3213 = vmatmul.mubr.bf16.gmra.mrb[0].mxu0 %v3177
        %v3214 = vpop.f32.mrb[0].mxu0
        %v3215 = vadd.f32 %v460, %v3214
        %v3216 = vpop.f32.mrb[0].mxu0
        %v3217 = vpop.f32.mrb[0].mxu0
        %v3218 = vpop.f32.mrb[0].mxu0
        %3219 = vdwg.mxu0
        %v3220 = vsel %vm1356, %v3215, -inf
        %3221 = vmax.xlane.f32.xlu0 %v3220
        %v3222 = vpop.xlane.xlu0 %3221
        %v3223 = vsub.f32 %v3215, %v3222
        %v3224 = vmul.f32 %v3223, 1.442695
        %v3225 = vpow.pop %v3224
        %v3226 = vsel %vm1356, %v3225, 0.0
        %3227 = vadd.xlane.f32.xlu0 %v3226
        %v3228 = vpop.xlane.xlu0 %3227
        %v3229 = vrcp.pop %v3228
        %v3230 = vmul.f32 %v3225, %v3229
        %v3231 = vpack.c.bf16 %v3230, %v3230
        %v3233 = vsel %vm1356, %v3231, 0
        %v3236 = vsel %vm1372, %v3179, 0
        %3238 = vmatprep.subr.bf16.mxu0 0
        %3239 = vmatpush1.bf16.msra.mxu0 %v3236
        %3240 = vmatprep.subr.bf16.mxu0 0
        %3241 = vmatpush1.bf16.msra.mxu0 0
        %3242 = vmatprep.subr.bf16.mxu0 0
        %3243 = vmatpush1.bf16.msra.mxu0 0
        %3244 = vmatprep.subr.bf16.mxu0 0
        %3245 = vmatpush1.bf16.msra.mxu0 0
        %3246 = vmatprep.subr.bf16.mxu0 0
        %3247 = vmatpush1.bf16.msra.mxu0 0
        %3248 = vmatprep.subr.bf16.mxu0 0
        %3249 = vmatpush1.bf16.msra.mxu0 0
        %3250 = vmatprep.subr.bf16.mxu0 0
        %3251 = vmatpush1.bf16.msra.mxu0 0
        %3252 = vmatprep.subr.bf16.mxu0 0
        %3253 = vmatpush1.bf16.msra.mxu0 0
        %3254 = vmatprep.subr.bf16.mxu0 0
        %3255 = vmatpush1.bf16.msra.mxu0 0
        %3256 = vmatprep.subr.bf16.mxu0 0
        %3257 = vmatpush1.bf16.msra.mxu0 0
        %3258 = vmatprep.subr.bf16.mxu0 0
        %3259 = vmatpush1.bf16.msra.mxu0 0
        %3260 = vmatprep.subr.bf16.mxu0 0
        %3261 = vmatpush1.bf16.msra.mxu0 0
        %3262 = vmatprep.subr.bf16.mxu0 0
        %3263 = vmatpush1.bf16.msra.mxu0 0
        %3264 = vmatprep.subr.bf16.mxu0 0
        %3265 = vmatpush1.bf16.msra.mxu0 0
        %3266 = vmatprep.subr.bf16.mxu0 0
        %3267 = vmatpush1.bf16.msra.mxu0 0
        %3268 = vmatprep.subr.bf16.mxu0 0
        %3269 = vmatpush1.bf16.msra.mxu0 0
        %3270 = vmatprep.mubr.bf16.mxu0 0
        %3271 = vmatmul.mubr.bf16.gmra.mrb[0].mxu0 %v3233
        %v3272 = vpop.f32.mrb[0].mxu0
        %v3273 = vadd.f32 0.0, %v3272
        %v3274 = vpop.f32.mrb[0].mxu0
        %v3275 = vpop.f32.mrb[0].mxu0
        %v3276 = vpop.f32.mrb[0].mxu0
        %3277 = vdwg.mxu0
        %v3278 = vpack.c.bf16 %v2968, %v2968
        %v3279 = vpack.c.bf16 %v3050, %v3050
        %v3280 = vpack.c.bf16 %v3132, %v3132
        %3281 = vmatprep.subr.bf16.mxu0 0
        %3282 = vmatpush1.bf16.xpose.msra.mxu0 %v3279
        %3283 = vmatprep.subr.bf16.mxu0 0
        %3284 = vmatpush1.bf16.xpose.msra.mxu0 0
        %3285 = vmatprep.subr.bf16.mxu0 0
        %3286 = vmatpush1.bf16.xpose.msra.mxu0 0
        %3287 = vmatprep.subr.bf16.mxu0 0
        %3288 = vmatpush1.bf16.xpose.msra.mxu0 0
        %3289 = vmatprep.subr.bf16.mxu0 0
        %3290 = vmatpush1.bf16.xpose.msra.mxu0 0
        %3291 = vmatprep.subr.bf16.mxu0 0
        %3292 = vmatpush1.bf16.xpose.msra.mxu0 0
        %3293 = vmatprep.subr.bf16.mxu0 0
        %3294 = vmatpush1.bf16.xpose.msra.mxu0 0
        %3295 = vmatprep.subr.bf16.mxu0 0
        %3296 = vmatpush1.bf16.xpose.msra.mxu0 0
        %3297 = vmatprep.subr.bf16.mxu0 0
        %3298 = vmatpush1.bf16.xpose.msra.mxu0 0
        %3299 = vmatprep.subr.bf16.mxu0 0
        %3300 = vmatpush1.bf16.xpose.msra.mxu0 0
        %3301 = vmatprep.subr.bf16.mxu0 0
        %3302 = vmatpush1.bf16.xpose.msra.mxu0 0
        %3303 = vmatprep.subr.bf16.mxu0 0
        %3304 = vmatpush1.bf16.xpose.msra.mxu0 0
        %3305 = vmatprep.subr.bf16.mxu0 0
        %3306 = vmatpush1.bf16.xpose.msra.mxu0 0
        %3307 = vmatprep.subr.bf16.mxu0 0
        %3308 = vmatpush1.bf16.xpose.msra.mxu0 0
        %3309 = vmatprep.subr.bf16.mxu0 0
        %3310 = vmatpush1.bf16.xpose.msra.mxu0 0
        %3311 = vmatprep.subr.bf16.mxu0 0
        %3312 = vmatpush1.bf16.xpose.msra.mxu0 0
        %3313 = vmatprep.mubr.bf16.mxu0 0
        %3314 = vmatmul.mubr.bf16.gmra.mrb[0].mxu0 %v3278
        %v3315 = vpop.f32.mrb[0].mxu0
        %v3316 = vadd.f32 %v460, %v3315
        %v3317 = vpop.f32.mrb[0].mxu0
        %v3318 = vpop.f32.mrb[0].mxu0
        %v3319 = vpop.f32.mrb[0].mxu0
        %3320 = vdwg.mxu0
        %v3321 = vsel %vm1356, %v3316, -inf
        %3322 = vmax.xlane.f32.xlu0 %v3321
        %v3323 = vpop.xlane.xlu0 %3322
        %v3324 = vsub.f32 %v3316, %v3323
        %v3325 = vmul.f32 %v3324, 1.442695
        %v3326 = vpow.pop %v3325
        %v3327 = vsel %vm1356, %v3326, 0.0
        %3328 = vadd.xlane.f32.xlu0 %v3327
        %v3329 = vpop.xlane.xlu0 %3328
        %v3330 = vrcp.pop %v3329
        %v3331 = vmul.f32 %v3326, %v3330
        %v3332 = vpack.c.bf16 %v3331, %v3331
        %v3334 = vsel %vm1356, %v3332, 0
        %v3337 = vsel %vm1372, %v3280, 0
        %3339 = vmatprep.subr.bf16.mxu0 0
        %3340 = vmatpush1.bf16.msra.mxu0 %v3337
        %3341 = vmatprep.subr.bf16.mxu0 0
        %3342 = vmatpush1.bf16.msra.mxu0 0
        %3343 = vmatprep.subr.bf16.mxu0 0
        %3344 = vmatpush1.bf16.msra.mxu0 0
        %3345 = vmatprep.subr.bf16.mxu0 0
        %3346 = vmatpush1.bf16.msra.mxu0 0
        %3347 = vmatprep.subr.bf16.mxu0 0
        %3348 = vmatpush1.bf16.msra.mxu0 0
        %3349 = vmatprep.subr.bf16.mxu0 0
        %3350 = vmatpush1.bf16.msra.mxu0 0
        %3351 = vmatprep.subr.bf16.mxu0 0
        %3352 = vmatpush1.bf16.msra.mxu0 0
        %3353 = vmatprep.subr.bf16.mxu0 0
        %3354 = vmatpush1.bf16.msra.mxu0 0
        %3355 = vmatprep.subr.bf16.mxu0 0
        %3356 = vmatpush1.bf16.msra.mxu0 0
        %3357 = vmatprep.subr.bf16.mxu0 0
        %3358 = vmatpush1.bf16.msra.mxu0 0
        %3359 = vmatprep.subr.bf16.mxu0 0
        %3360 = vmatpush1.bf16.msra.mxu0 0
        %3361 = vmatprep.subr.bf16.mxu0 0
        %3362 = vmatpush1.bf16.msra.mxu0 0
        %3363 = vmatprep.subr.bf16.mxu0 0
        %3364 = vmatpush1.bf16.msra.mxu0 0
        %3365 = vmatprep.subr.bf16.mxu0 0
        %3366 = vmatpush1.bf16.msra.mxu0 0
        %3367 = vmatprep.subr.bf16.mxu0 0
        %3368 = vmatpush1.bf16.msra.mxu0 0
        %3369 = vmatprep.subr.bf16.mxu0 0
        %3370 = vmatpush1.bf16.msra.mxu0 0
        %3371 = vmatprep.mubr.bf16.mxu0 0
        %3372 = vmatmul.mubr.bf16.gmra.mrb[0].mxu0 %v3334
        %v3373 = vpop.f32.mrb[0].mxu0
        %v3374 = vadd.f32 0.0, %v3373
        %v3375 = vpop.f32.mrb[0].mxu0
        %v3376 = vpop.f32.mrb[0].mxu0
        %v3377 = vpop.f32.mrb[0].mxu0
        %3378 = vdwg.mxu0
        %v3379 = vpack.c.bf16 %v3007, %v3007
        %v3380 = vpack.c.bf16 %v3089, %v3089
        %v3381 = vpack.c.bf16 %v3171, %v3171
        %3382 = vmatprep.subr.bf16.mxu0 0
        %3383 = vmatpush1.bf16.xpose.msra.mxu0 %v3380
        %3384 = vmatprep.subr.bf16.mxu0 0
        %3385 = vmatpush1.bf16.xpose.msra.mxu0 0
        %3386 = vmatprep.subr.bf16.mxu0 0
        %3387 = vmatpush1.bf16.xpose.msra.mxu0 0
        %3388 = vmatprep.subr.bf16.mxu0 0
        %3389 = vmatpush1.bf16.xpose.msra.mxu0 0
        %3390 = vmatprep.subr.bf16.mxu0 0
        %3391 = vmatpush1.bf16.xpose.msra.mxu0 0
        %3392 = vmatprep.subr.bf16.mxu0 0
        %3393 = vmatpush1.bf16.xpose.msra.mxu0 0
        %3394 = vmatprep.subr.bf16.mxu0 0
        %3395 = vmatpush1.bf16.xpose.msra.mxu0 0
        %3396 = vmatprep.subr.bf16.mxu0 0
        %3397 = vmatpush1.bf16.xpose.msra.mxu0 0
        %3398 = vmatprep.subr.bf16.mxu0 0
        %3399 = vmatpush1.bf16.xpose.msra.mxu0 0
        %3400 = vmatprep.subr.bf16.mxu0 0
        %3401 = vmatpush1.bf16.xpose.msra.mxu0 0
        %3402 = vmatprep.subr.bf16.mxu0 0
        %3403 = vmatpush1.bf16.xpose.msra.mxu0 0
        %3404 = vmatprep.subr.bf16.mxu0 0
        %3405 = vmatpush1.bf16.xpose.msra.mxu0 0
        %3406 = vmatprep.subr.bf16.mxu0 0
        %3407 = vmatpush1.bf16.xpose.msra.mxu0 0
        %3408 = vmatprep.subr.bf16.mxu0 0
        %3409 = vmatpush1.bf16.xpose.msra.mxu0 0
        %3410 = vmatprep.subr.bf16.mxu0 0
        %3411 = vmatpush1.bf16.xpose.msra.mxu0 0
        %3412 = vmatprep.subr.bf16.mxu0 0
        %3413 = vmatpush1.bf16.xpose.msra.mxu0 0
        %3414 = vmatprep.mubr.bf16.mxu0 0
        %3415 = vmatmul.mubr.bf16.gmra.mrb[0].mxu0 %v3379
        %v3416 = vpop.f32.mrb[0].mxu0
        %v3417 = vadd.f32 %v460, %v3416
        %v3418 = vpop.f32.mrb[0].mxu0
        %v3419 = vpop.f32.mrb[0].mxu0
        %v3420 = vpop.f32.mrb[0].mxu0
        %3421 = vdwg.mxu0
        %v3422 = vsel %vm1356, %v3417, -inf
        %3423 = vmax.xlane.f32.xlu0 %v3422
        %v3424 = vpop.xlane.xlu0 %3423
        %v3425 = vsub.f32 %v3417, %v3424
        %v3426 = vmul.f32 %v3425, 1.442695
        %v3427 = vpow.pop %v3426
        %v3428 = vsel %vm1356, %v3427, 0.0
        %3429 = vadd.xlane.f32.xlu0 %v3428
        %v3430 = vpop.xlane.xlu0 %3429
        %v3431 = vrcp.pop %v3430
        %v3432 = vmul.f32 %v3427, %v3431
        %v3433 = vpack.c.bf16 %v3432, %v3432
        %v3435 = vsel %vm1356, %v3433, 0
        %v3438 = vsel %vm1372, %v3381, 0
        %3440 = vmatprep.subr.bf16.mxu0 0
        %3441 = vmatpush1.bf16.msra.mxu0 %v3438
        %3442 = vmatprep.subr.bf16.mxu0 0
        %3443 = vmatpush1.bf16.msra.mxu0 0
        %3444 = vmatprep.subr.bf16.mxu0 0
        %3445 = vmatpush1.bf16.msra.mxu0 0
        %3446 = vmatprep.subr.bf16.mxu0 0
        %3447 = vmatpush1.bf16.msra.mxu0 0
        %3448 = vmatprep.subr.bf16.mxu0 0
        %3449 = vmatpush1.bf16.msra.mxu0 0
        %3450 = vmatprep.subr.bf16.mxu0 0
        %3451 = vmatpush1.bf16.msra.mxu0 0
        %3452 = vmatprep.subr.bf16.mxu0 0
        %3453 = vmatpush1.bf16.msra.mxu0 0
        %3454 = vmatprep.subr.bf16.mxu0 0
        %3455 = vmatpush1.bf16.msra.mxu0 0
        %3456 = vmatprep.subr.bf16.mxu0 0
        %3457 = vmatpush1.bf16.msra.mxu0 0
        %3458 = vmatprep.subr.bf16.mxu0 0
        %3459 = vmatpush1.bf16.msra.mxu0 0
        %3460 = vmatprep.subr.bf16.mxu0 0
        %3461 = vmatpush1.bf16.msra.mxu0 0
        %3462 = vmatprep.subr.bf16.mxu0 0
        %3463 = vmatpush1.bf16.msra.mxu0 0
        %3464 = vmatprep.subr.bf16.mxu0 0
        %3465 = vmatpush1.bf16.msra.mxu0 0
        %3466 = vmatprep.subr.bf16.mxu0 0
        %3467 = vmatpush1.bf16.msra.mxu0 0
        %3468 = vmatprep.subr.bf16.mxu0 0
        %3469 = vmatpush1.bf16.msra.mxu0 0
        %3470 = vmatprep.subr.bf16.mxu0 0
        %3471 = vmatpush1.bf16.msra.mxu0 0
        %3472 = vmatprep.mubr.bf16.mxu0 0
        %3473 = vmatmul.mubr.bf16.gmra.mrb[0].mxu0 %v3435
        %v3474 = vpop.f32.mrb[0].mxu0
        %v3475 = vadd.f32 0.0, %v3474
        %v3476 = vpop.f32.mrb[0].mxu0
        %v3477 = vpop.f32.mrb[0].mxu0
        %v3478 = vpop.f32.mrb[0].mxu0
        %3479 = vdwg.mxu0
        %v3480 = vpack.c.bf16 %v3009, %v3009
        %v3481 = vpack.c.bf16 %v3091, %v3091
        %v3482 = vpack.c.bf16 %v3173, %v3173
        %3483 = vmatprep.subr.bf16.mxu0 0
        %3484 = vmatpush1.bf16.xpose.msra.mxu0 %v3481
        %3485 = vmatprep.subr.bf16.mxu0 0
        %3486 = vmatpush1.bf16.xpose.msra.mxu0 0
        %3487 = vmatprep.subr.bf16.mxu0 0
        %3488 = vmatpush1.bf16.xpose.msra.mxu0 0
        %3489 = vmatprep.subr.bf16.mxu0 0
        %3490 = vmatpush1.bf16.xpose.msra.mxu0 0
        %3491 = vmatprep.subr.bf16.mxu0 0
        %3492 = vmatpush1.bf16.xpose.msra.mxu0 0
        %3493 = vmatprep.subr.bf16.mxu0 0
        %3494 = vmatpush1.bf16.xpose.msra.mxu0 0
        %3495 = vmatprep.subr.bf16.mxu0 0
        %3496 = vmatpush1.bf16.xpose.msra.mxu0 0
        %3497 = vmatprep.subr.bf16.mxu0 0
        %3498 = vmatpush1.bf16.xpose.msra.mxu0 0
        %3499 = vmatprep.subr.bf16.mxu0 0
        %3500 = vmatpush1.bf16.xpose.msra.mxu0 0
        %3501 = vmatprep.subr.bf16.mxu0 0
        %3502 = vmatpush1.bf16.xpose.msra.mxu0 0
        %3503 = vmatprep.subr.bf16.mxu0 0
        %3504 = vmatpush1.bf16.xpose.msra.mxu0 0
        %3505 = vmatprep.subr.bf16.mxu0 0
        %3506 = vmatpush1.bf16.xpose.msra.mxu0 0
        %3507 = vmatprep.subr.bf16.mxu0 0
        %3508 = vmatpush1.bf16.xpose.msra.mxu0 0
        %3509 = vmatprep.subr.bf16.mxu0 0
        %3510 = vmatpush1.bf16.xpose.msra.mxu0 0
        %3511 = vmatprep.subr.bf16.mxu0 0
        %3512 = vmatpush1.bf16.xpose.msra.mxu0 0
        %3513 = vmatprep.subr.bf16.mxu0 0
        %3514 = vmatpush1.bf16.xpose.msra.mxu0 0
        %3515 = vmatprep.mubr.bf16.mxu0 0
        %3516 = vmatmul.mubr.bf16.gmra.mrb[0].mxu0 %v3480
        %v3517 = vpop.f32.mrb[0].mxu0
        %v3518 = vadd.f32 %v460, %v3517
        %v3519 = vpop.f32.mrb[0].mxu0
        %v3520 = vpop.f32.mrb[0].mxu0
        %v3521 = vpop.f32.mrb[0].mxu0
        %3522 = vdwg.mxu0
        %v3523 = vsel %vm1356, %v3518, -inf
        %3524 = vmax.xlane.f32.xlu0 %v3523
        %v3525 = vpop.xlane.xlu0 %3524
        %v3526 = vsub.f32 %v3518, %v3525
        %v3527 = vmul.f32 %v3526, 1.442695
        %v3528 = vpow.pop %v3527
        %v3529 = vsel %vm1356, %v3528, 0.0
        %3530 = vadd.xlane.f32.xlu0 %v3529
        %v3531 = vpop.xlane.xlu0 %3530
        %v3532 = vrcp.pop %v3531
        %v3533 = vmul.f32 %v3528, %v3532
        %v3534 = vpack.c.bf16 %v3533, %v3533
        %v3536 = vsel %vm1356, %v3534, 0
        %v3539 = vsel %vm1372, %v3482, 0
        %3541 = vmatprep.subr.bf16.mxu0 0
        %3542 = vmatpush1.bf16.msra.mxu0 %v3539
        %3543 = vmatprep.subr.bf16.mxu0 0
        %3544 = vmatpush1.bf16.msra.mxu0 0
        %3545 = vmatprep.subr.bf16.mxu0 0
        %3546 = vmatpush1.bf16.msra.mxu0 0
        %3547 = vmatprep.subr.bf16.mxu0 0
        %3548 = vmatpush1.bf16.msra.mxu0 0
        %3549 = vmatprep.subr.bf16.mxu0 0
        %3550 = vmatpush1.bf16.msra.mxu0 0
        %3551 = vmatprep.subr.bf16.mxu0 0
        %3552 = vmatpush1.bf16.msra.mxu0 0
        %3553 = vmatprep.subr.bf16.mxu0 0
        %3554 = vmatpush1.bf16.msra.mxu0 0
        %3555 = vmatprep.subr.bf16.mxu0 0
        %3556 = vmatpush1.bf16.msra.mxu0 0
        %3557 = vmatprep.subr.bf16.mxu0 0
        %3558 = vmatpush1.bf16.msra.mxu0 0
        %3559 = vmatprep.subr.bf16.mxu0 0
        %3560 = vmatpush1.bf16.msra.mxu0 0
        %3561 = vmatprep.subr.bf16.mxu0 0
        %3562 = vmatpush1.bf16.msra.mxu0 0
        %3563 = vmatprep.subr.bf16.mxu0 0
        %3564 = vmatpush1.bf16.msra.mxu0 0
        %3565 = vmatprep.subr.bf16.mxu0 0
        %3566 = vmatpush1.bf16.msra.mxu0 0
        %3567 = vmatprep.subr.bf16.mxu0 0
        %3568 = vmatpush1.bf16.msra.mxu0 0
        %3569 = vmatprep.subr.bf16.mxu0 0
        %3570 = vmatpush1.bf16.msra.mxu0 0
        %3571 = vmatprep.subr.bf16.mxu0 0
        %3572 = vmatpush1.bf16.msra.mxu0 0
        %3573 = vmatprep.mubr.bf16.mxu0 0
        %3574 = vmatmul.mubr.bf16.gmra.mrb[0].mxu0 %v3536
        %v3575 = vpop.f32.mrb[0].mxu0
        %v3576 = vadd.f32 0.0, %v3575
        %v3577 = vpop.f32.mrb[0].mxu0
        %v3578 = vpop.f32.mrb[0].mxu0
        %v3579 = vpop.f32.mrb[0].mxu0
        %3580 = vdwg.mxu0
        %v3581 = vpack.c.bf16 %v3273, %v3273
        %v3582 = vpack.c.bf16 %v3374, %v3374
        %v3583 = vpack.c.bf16 %v3475, %v3475
        %v3584 = vpack.c.bf16 %v3576, %v3576
        %s3585 = scalar_lea.vmem [#allocation4], 256
        %v3586 = vld [vmem:[%s3585] sm:$0xf]
        %v3587 = vld [vmem:[%s3585 + $0x4] sm:$0xf]
        %v3588 = vld [vmem:[%s3585 + $0x8] sm:$0xf]
        %v3589 = vld [vmem:[%s3585 + $0xc] sm:$0xf]
        %v3590 = vld [vmem:[%s3585 + $0x10] sm:$0xf]
        %v3591 = vld [vmem:[%s3585 + $0x14] sm:$0xf]
        %v3592 = vld [vmem:[%s3585 + $0x18] sm:$0xf]
        %v3593 = vld [vmem:[%s3585 + $0x1c] sm:$0xf]
        %v3594 = vld [vmem:[%s3585 + $0x20] sm:$0xf]
        %v3595 = vld [vmem:[%s3585 + $0x24] sm:$0xf]
        %v3596 = vld [vmem:[%s3585 + $0x28] sm:$0xf]
        %v3597 = vld [vmem:[%s3585 + $0x2c] sm:$0xf]
        %v3598 = vld [vmem:[%s3585 + $0x30] sm:$0xf]
        %v3599 = vld [vmem:[%s3585 + $0x34] sm:$0xf]
        %v3600 = vld [vmem:[%s3585 + $0x38] sm:$0xf]
        %v3601 = vld [vmem:[%s3585 + $0x3c] sm:$0xf]
        %v3602 = vld [vmem:[%s3585 + $0x40] sm:$0xf]
        %v3603 = vld [vmem:[%s3585 + $0x44] sm:$0xf]
        %v3604 = vld [vmem:[%s3585 + $0x48] sm:$0xf]
        %v3605 = vld [vmem:[%s3585 + $0x4c] sm:$0xf]
        %v3606 = vld [vmem:[%s3585 + $0x50] sm:$0xf]
        %v3607 = vld [vmem:[%s3585 + $0x54] sm:$0xf]
        %v3608 = vld [vmem:[%s3585 + $0x58] sm:$0xf]
        %v3609 = vld [vmem:[%s3585 + $0x5c] sm:$0xf]
        %v3610 = vld [vmem:[%s3585 + $0x60] sm:$0xf]
        %v3611 = vld [vmem:[%s3585 + $0x64] sm:$0xf]
        %v3612 = vld [vmem:[%s3585 + $0x68] sm:$0xf]
        %v3613 = vld [vmem:[%s3585 + $0x6c] sm:$0xf]
        %v3614 = vld [vmem:[%s3585 + $0x70] sm:$0xf]
        %v3615 = vld [vmem:[%s3585 + $0x74] sm:$0xf]
        %v3616 = vld [vmem:[%s3585 + $0x78] sm:$0xf]
        %v3617 = vld [vmem:[%s3585 + $0x7c] sm:$0xf]
        %v3618 = vld [vmem:[%s3585 + $0x80] sm:$0xf]
        %v3619 = vld [vmem:[%s3585 + $0x84] sm:$0xf]
        %v3620 = vld [vmem:[%s3585 + $0x88] sm:$0xf]
        %v3621 = vld [vmem:[%s3585 + $0x8c] sm:$0xf]
        %v3622 = vld [vmem:[%s3585 + $0x90] sm:$0xf]
        %v3623 = vld [vmem:[%s3585 + $0x94] sm:$0xf]
        %v3624 = vld [vmem:[%s3585 + $0x98] sm:$0xf]
        %v3625 = vld [vmem:[%s3585 + $0x9c] sm:$0xf]
        %v3626 = vld [vmem:[%s3585 + $0xa0] sm:$0xf]
        %v3627 = vld [vmem:[%s3585 + $0xa4] sm:$0xf]
        %v3628 = vld [vmem:[%s3585 + $0xa8] sm:$0xf]
        %v3629 = vld [vmem:[%s3585 + $0xac] sm:$0xf]
        %v3630 = vld [vmem:[%s3585 + $0xb0] sm:$0xf]
        %v3631 = vld [vmem:[%s3585 + $0xb4] sm:$0xf]
        %v3632 = vld [vmem:[%s3585 + $0xb8] sm:$0xf]
        %v3633 = vld [vmem:[%s3585 + $0xbc] sm:$0xf]
        %v3634 = vld [vmem:[%s3585 + $0xc0] sm:$0xf]
        %v3635 = vld [vmem:[%s3585 + $0xc4] sm:$0xf]
        %v3636 = vld [vmem:[%s3585 + $0xc8] sm:$0xf]
        %v3637 = vld [vmem:[%s3585 + $0xcc] sm:$0xf]
        %v3638 = vld [vmem:[%s3585 + $0xd0] sm:$0xf]
        %v3639 = vld [vmem:[%s3585 + $0xd4] sm:$0xf]
        %v3640 = vld [vmem:[%s3585 + $0xd8] sm:$0xf]
        %v3641 = vld [vmem:[%s3585 + $0xdc] sm:$0xf]
        %v3642 = vld [vmem:[%s3585 + $0xe0] sm:$0xf]
        %v3643 = vld [vmem:[%s3585 + $0xe4] sm:$0xf]
        %v3644 = vld [vmem:[%s3585 + $0xe8] sm:$0xf]
        %v3645 = vld [vmem:[%s3585 + $0xec] sm:$0xf]
        %v3646 = vld [vmem:[%s3585 + $0xf0] sm:$0xf]
        %v3647 = vld [vmem:[%s3585 + $0xf4] sm:$0xf]
        %v3648 = vld [vmem:[%s3585 + $0xf8] sm:$0xf]
        %v3649 = vld [vmem:[%s3585 + $0xfc] sm:$0xf]
        %s3650 = scalar_lea.vmem %s5, 1
        %v3651 = vld [vmem:[%s3650] sm:$0x1]
        %v3653 = vlaneseq
        %v3654 = vshrl.u32 %v3653, 7
        %v3655 = vsub.s32 0, %v3654
        %v3656 = vrot.slane %v3651, %v3655
        %v3722 = vunpack.c.l.b16 %v3586
        %v3723 = vunpack.c.l.b16 %v3587
        %v3724 = vunpack.c.l.b16 %v3588
        %v3725 = vunpack.c.l.b16 %v3589
        %v3726 = vunpack.c.l.b16 %v3590
        %v3727 = vunpack.c.l.b16 %v3591
        %v3728 = vunpack.c.l.b16 %v3592
        %v3729 = vunpack.c.l.b16 %v3593
        %v3730 = vunpack.c.l.b16 %v3594
        %v3731 = vunpack.c.l.b16 %v3595
        %v3732 = vunpack.c.l.b16 %v3596
        %v3733 = vunpack.c.l.b16 %v3597
        %v3734 = vunpack.c.l.b16 %v3598
        %v3735 = vunpack.c.l.b16 %v3599
        %v3736 = vunpack.c.l.b16 %v3600
        %v3737 = vunpack.c.l.b16 %v3601
        %v3738 = vunpack.c.l.b16 %v3602
        %v3739 = vunpack.c.l.b16 %v3603
        %v3740 = vunpack.c.l.b16 %v3604
        %v3741 = vunpack.c.l.b16 %v3605
        %v3742 = vunpack.c.l.b16 %v3606
        %v3743 = vunpack.c.l.b16 %v3607
        %v3744 = vunpack.c.l.b16 %v3608
        %v3745 = vunpack.c.l.b16 %v3609
        %v3746 = vunpack.c.l.b16 %v3610
        %v3747 = vunpack.c.l.b16 %v3611
        %v3748 = vunpack.c.l.b16 %v3612
        %v3749 = vunpack.c.l.b16 %v3613
        %v3750 = vunpack.c.l.b16 %v3614
        %v3751 = vunpack.c.l.b16 %v3615
        %v3752 = vunpack.c.l.b16 %v3616
        %v3753 = vunpack.c.l.b16 %v3617
        %v3754 = vunpack.c.l.b16 %v3618
        %v3755 = vunpack.c.l.b16 %v3619
        %v3756 = vunpack.c.l.b16 %v3620
        %v3757 = vunpack.c.l.b16 %v3621
        %v3758 = vunpack.c.l.b16 %v3622
        %v3759 = vunpack.c.l.b16 %v3623
        %v3760 = vunpack.c.l.b16 %v3624
        %v3761 = vunpack.c.l.b16 %v3625
        %v3762 = vunpack.c.l.b16 %v3626
        %v3763 = vunpack.c.l.b16 %v3627
        %v3764 = vunpack.c.l.b16 %v3628
        %v3765 = vunpack.c.l.b16 %v3629
        %v3766 = vunpack.c.l.b16 %v3630
        %v3767 = vunpack.c.l.b16 %v3631
        %v3768 = vunpack.c.l.b16 %v3632
        %v3769 = vunpack.c.l.b16 %v3633
        %v3770 = vunpack.c.l.b16 %v3634
        %v3771 = vunpack.c.l.b16 %v3635
        %v3772 = vunpack.c.l.b16 %v3636
        %v3773 = vunpack.c.l.b16 %v3637
        %v3774 = vunpack.c.l.b16 %v3638
        %v3775 = vunpack.c.l.b16 %v3639
        %v3776 = vunpack.c.l.b16 %v3640
        %v3777 = vunpack.c.l.b16 %v3641
        %v3778 = vunpack.c.l.b16 %v3642
        %v3779 = vunpack.c.l.b16 %v3643
        %v3780 = vunpack.c.l.b16 %v3644
        %v3781 = vunpack.c.l.b16 %v3645
        %v3782 = vunpack.c.l.b16 %v3646
        %v3783 = vunpack.c.l.b16 %v3647
        %v3784 = vunpack.c.l.b16 %v3648
        %v3785 = vunpack.c.l.b16 %v3649
        %v3786 = vpack.c.b16 %v3723, %v3722
        %v3787 = vpack.c.b16 %v3725, %v3724
        %v3788 = vpack.c.b16 %v3727, %v3726
        %v3789 = vpack.c.b16 %v3729, %v3728
        %v3790 = vpack.c.b16 %v3731, %v3730
        %v3791 = vpack.c.b16 %v3733, %v3732
        %v3792 = vpack.c.b16 %v3735, %v3734
        %v3793 = vpack.c.b16 %v3737, %v3736
        %v3794 = vpack.c.b16 %v3739, %v3738
        %v3795 = vpack.c.b16 %v3741, %v3740
        %v3796 = vpack.c.b16 %v3743, %v3742
        %v3797 = vpack.c.b16 %v3745, %v3744
        %v3798 = vpack.c.b16 %v3747, %v3746
        %v3799 = vpack.c.b16 %v3749, %v3748
        %v3800 = vpack.c.b16 %v3751, %v3750
        %v3801 = vpack.c.b16 %v3753, %v3752
        %v3802 = vpack.c.b16 %v3755, %v3754
        %v3803 = vpack.c.b16 %v3757, %v3756
        %v3804 = vpack.c.b16 %v3759, %v3758
        %v3805 = vpack.c.b16 %v3761, %v3760
        %v3806 = vpack.c.b16 %v3763, %v3762
        %v3807 = vpack.c.b16 %v3765, %v3764
        %v3808 = vpack.c.b16 %v3767, %v3766
        %v3809 = vpack.c.b16 %v3769, %v3768
        %v3810 = vpack.c.b16 %v3771, %v3770
        %v3811 = vpack.c.b16 %v3773, %v3772
        %v3812 = vpack.c.b16 %v3775, %v3774
        %v3813 = vpack.c.b16 %v3777, %v3776
        %v3814 = vpack.c.b16 %v3779, %v3778
        %v3815 = vpack.c.b16 %v3781, %v3780
        %v3816 = vpack.c.b16 %v3783, %v3782
        %v3817 = vpack.c.b16 %v3785, %v3784
        %3850 = vmatprep.subr.bf16.mxu0 0
        %3851 = vmatpush1.bf16.msra.mxu0 %v3786
        %3852 = vmatprep.subr.bf16.mxu0 0
        %3853 = vmatpush1.bf16.msra.mxu0 %v3787
        %3854 = vmatprep.subr.bf16.mxu0 0
        %3855 = vmatpush1.bf16.msra.mxu0 %v3788
        %3856 = vmatprep.subr.bf16.mxu0 0
        %3857 = vmatpush1.bf16.msra.mxu0 %v3789
        %3858 = vmatprep.subr.bf16.mxu0 0
        %3859 = vmatpush1.bf16.msra.mxu0 %v3790
        %3860 = vmatprep.subr.bf16.mxu0 0
        %3861 = vmatpush1.bf16.msra.mxu0 %v3791
        %3862 = vmatprep.subr.bf16.mxu0 0
        %3863 = vmatpush1.bf16.msra.mxu0 %v3792
        %3864 = vmatprep.subr.bf16.mxu0 0
        %3865 = vmatpush1.bf16.msra.mxu0 %v3793
        %3866 = vmatprep.subr.bf16.mxu0 0
        %3867 = vmatpush1.bf16.msra.mxu0 %v3794
        %3868 = vmatprep.subr.bf16.mxu0 0
        %3869 = vmatpush1.bf16.msra.mxu0 %v3795
        %3870 = vmatprep.subr.bf16.mxu0 0
        %3871 = vmatpush1.bf16.msra.mxu0 %v3796
        %3872 = vmatprep.subr.bf16.mxu0 0
        %3873 = vmatpush1.bf16.msra.mxu0 %v3797
        %3874 = vmatprep.subr.bf16.mxu0 0
        %3875 = vmatpush1.bf16.msra.mxu0 %v3798
        %3876 = vmatprep.subr.bf16.mxu0 0
        %3877 = vmatpush1.bf16.msra.mxu0 %v3799
        %3878 = vmatprep.subr.bf16.mxu0 0
        %3879 = vmatpush1.bf16.msra.mxu0 %v3800
        %3880 = vmatprep.subr.bf16.mxu0 0
        %3881 = vmatpush1.bf16.msra.mxu0 %v3801
        %3882 = vmatprep.mubr.bf16.mxu0 %v3582
        %3883 = vmatmul.mubr.bf16.gmra.mrb[0].mxu0 %v3581
        %v3884 = vpop.f32.mrb[0].mxu0
        %v3885 = vadd.f32 %v3656, %v3884
        %v3886 = vpop.f32.mrb[0].mxu0
        %v3887 = vpop.f32.mrb[0].mxu0
        %v3888 = vpop.f32.mrb[0].mxu0
        %3889 = vdwg.mxu0
        %3890 = vmatprep.subr.bf16.mxu0 0
        %3891 = vmatpush1.bf16.msra.mxu0 %v3802
        %3892 = vmatprep.subr.bf16.mxu0 0
        %3893 = vmatpush1.bf16.msra.mxu0 %v3803
        %3894 = vmatprep.subr.bf16.mxu0 0
        %3895 = vmatpush1.bf16.msra.mxu0 %v3804
        %3896 = vmatprep.subr.bf16.mxu0 0
        %3897 = vmatpush1.bf16.msra.mxu0 %v3805
        %3898 = vmatprep.subr.bf16.mxu0 0
        %3899 = vmatpush1.bf16.msra.mxu0 %v3806
        %3900 = vmatprep.subr.bf16.mxu0 0
        %3901 = vmatpush1.bf16.msra.mxu0 %v3807
        %3902 = vmatprep.subr.bf16.mxu0 0
        %3903 = vmatpush1.bf16.msra.mxu0 %v3808
        %3904 = vmatprep.subr.bf16.mxu0 0
        %3905 = vmatpush1.bf16.msra.mxu0 %v3809
        %3906 = vmatprep.subr.bf16.mxu0 0
        %3907 = vmatpush1.bf16.msra.mxu0 %v3810
        %3908 = vmatprep.subr.bf16.mxu0 0
        %3909 = vmatpush1.bf16.msra.mxu0 %v3811
        %3910 = vmatprep.subr.bf16.mxu0 0
        %3911 = vmatpush1.bf16.msra.mxu0 %v3812
        %3912 = vmatprep.subr.bf16.mxu0 0
        %3913 = vmatpush1.bf16.msra.mxu0 %v3813
        %3914 = vmatprep.subr.bf16.mxu0 0
        %3915 = vmatpush1.bf16.msra.mxu0 %v3814
        %3916 = vmatprep.subr.bf16.mxu0 0
        %3917 = vmatpush1.bf16.msra.mxu0 %v3815
        %3918 = vmatprep.subr.bf16.mxu0 0
        %3919 = vmatpush1.bf16.msra.mxu0 %v3816
        %3920 = vmatprep.subr.bf16.mxu0 0
        %3921 = vmatpush1.bf16.msra.mxu0 %v3817
        %3922 = vmatprep.mubr.bf16.mxu0 %v3584
        %3923 = vmatmul.mubr.bf16.gmra.mrb[0].mxu0 %v3583
        %v3924 = vpop.f32.mrb[0].mxu0
        %v3925 = vadd.f32 %v3885, %v3924
        %v3926 = vpop.f32.mrb[0].mxu0
        %v3927 = vpop.f32.mrb[0].mxu0
        %v3928 = vpop.f32.mrb[0].mxu0
        %3929 = vdwg.mxu0
        %v3930 = vadd.f32 %v2321, %v3925
        %s3931 = scalar_lea.vmem %s6, 1
        %v3932 = vld [vmem:[%s3931] sm:$0x1]
        %s3933 = scalar_lea.vmem %s7, 1
        %v3934 = vld [vmem:[%s3933] sm:$0x1]
        %3935 = vadd.xlane.f32.xlu0 %v3930
        %v3936 = vpop.xlane.xlu0 %3935
        %v3937 = vmul.f32 %v3936, 0.03125
        %v3938 = vmul.f32 %v3930, %v3930
        %3939 = vadd.xlane.f32.xlu0 %v3938
        %v3940 = vpop.xlane.xlu0 %3939
        %v3941 = vmul.f32 %v3940, 0.03125
        %v3942 = vmul.f32 %v3937, %v3937
        %v3943 = vsub.f32 %v3941, %v3942
        %v3944 = vsub.f32 %v3930, %v3937
        %v3945 = vadd.f32 %v3943, 1e-05
        %v3946 = vrsqrt.pop %v3945
        %v3947 = vmul.f32 %v3944, %v3946
        %v3949 = vlaneseq
        %v3950 = vshrl.u32 %v3949, 7
        %v3951 = vsub.s32 0, %v3950
        %v3952 = vrot.slane %v3932, %v3951
        %v3954 = vmul.f32 %v3947, %v3952
        %v3956 = vlaneseq
        %v3957 = vshrl.u32 %v3956, 7
        %v3958 = vsub.s32 0, %v3957
        %v3959 = vrot.slane %v3934, %v3958
        %v3961 = vadd.f32 %v3954, %v3959
        %v3962 = vpack.c.bf16 %v3961, %v3961
        %s3963 = scalar_lea.vmem %s8, 64
        %v3964 = vld [vmem:[%s3963] sm:$0xf]
        %v3965 = vld [vmem:[%s3963 + $0x4] sm:$0xf]
        %v3966 = vld [vmem:[%s3963 + $0x8] sm:$0xf]
        %v3967 = vld [vmem:[%s3963 + $0xc] sm:$0xf]
        %v3968 = vld [vmem:[%s3963 + $0x10] sm:$0xf]
        %v3969 = vld [vmem:[%s3963 + $0x14] sm:$0xf]
        %v3970 = vld [vmem:[%s3963 + $0x18] sm:$0xf]
        %v3971 = vld [vmem:[%s3963 + $0x1c] sm:$0xf]
        %v3972 = vld [vmem:[%s3963 + $0x20] sm:$0xf]
        %v3973 = vld [vmem:[%s3963 + $0x24] sm:$0xf]
        %v3974 = vld [vmem:[%s3963 + $0x28] sm:$0xf]
        %v3975 = vld [vmem:[%s3963 + $0x2c] sm:$0xf]
        %v3976 = vld [vmem:[%s3963 + $0x30] sm:$0xf]
        %v3977 = vld [vmem:[%s3963 + $0x34] sm:$0xf]
        %v3978 = vld [vmem:[%s3963 + $0x38] sm:$0xf]
        %v3979 = vld [vmem:[%s3963 + $0x3c] sm:$0xf]
        %s3980 = scalar_lea.vmem %s9, 1
        %v3981 = vld [vmem:[%s3980] sm:$0x1]
        %v3983 = vlaneseq
        %v3984 = vshrl.u32 %v3983, 7
        %v3985 = vsub.s32 0, %v3984
        %v3986 = vrot.slane %v3981, %v3985
        %v4004 = vunpack.c.l.b16 %v3964
        %v4005 = vunpack.c.l.b16 %v3965
        %v4006 = vunpack.c.l.b16 %v3966
        %v4007 = vunpack.c.l.b16 %v3967
        %v4008 = vunpack.c.l.b16 %v3968
        %v4009 = vunpack.c.l.b16 %v3969
        %v4010 = vunpack.c.l.b16 %v3970
        %v4011 = vunpack.c.l.b16 %v3971
        %v4012 = vunpack.c.l.b16 %v3972
        %v4013 = vunpack.c.l.b16 %v3973
        %v4014 = vunpack.c.l.b16 %v3974
        %v4015 = vunpack.c.l.b16 %v3975
        %v4016 = vunpack.c.l.b16 %v3976
        %v4017 = vunpack.c.l.b16 %v3977
        %v4018 = vunpack.c.l.b16 %v3978
        %v4019 = vunpack.c.l.b16 %v3979
        %v4020 = vpack.c.b16 %v4005, %v4004
        %v4021 = vpack.c.b16 %v4007, %v4006
        %v4022 = vpack.c.b16 %v4009, %v4008
        %v4023 = vpack.c.b16 %v4011, %v4010
        %v4024 = vpack.c.b16 %v4013, %v4012
        %v4025 = vpack.c.b16 %v4015, %v4014
        %v4026 = vpack.c.b16 %v4017, %v4016
        %v4027 = vpack.c.b16 %v4019, %v4018
        %4036 = vmatprep.subr.bf16.mxu0 0
        %4037 = vmatpush1.bf16.msra.mxu0 %v4020
        %4038 = vmatprep.subr.bf16.mxu0 0
        %4039 = vmatpush1.bf16.msra.mxu0 %v4021
        %4040 = vmatprep.subr.bf16.mxu0 0
        %4041 = vmatpush1.bf16.msra.mxu0 %v4022
        %4042 = vmatprep.subr.bf16.mxu0 0
        %4043 = vmatpush1.bf16.msra.mxu0 %v4023
        %4044 = vmatprep.subr.bf16.mxu0 0
        %4045 = vmatpush1.bf16.msra.mxu0 %v4024
        %4046 = vmatprep.subr.bf16.mxu0 0
        %4047 = vmatpush1.bf16.msra.mxu0 %v4025
        %4048 = vmatprep.subr.bf16.mxu0 0
        %4049 = vmatpush1.bf16.msra.mxu0 %v4026
        %4050 = vmatprep.subr.bf16.mxu0 0
        %4051 = vmatpush1.bf16.msra.mxu0 %v4027
        %4052 = vmatprep.subr.bf16.mxu0 0
        %4053 = vmatpush1.bf16.msra.mxu0 0
        %4054 = vmatprep.subr.bf16.mxu0 0
        %4055 = vmatpush1.bf16.msra.mxu0 0
        %4056 = vmatprep.subr.bf16.mxu0 0
        %4057 = vmatpush1.bf16.msra.mxu0 0
        %4058 = vmatprep.subr.bf16.mxu0 0
        %4059 = vmatpush1.bf16.msra.mxu0 0
        %4060 = vmatprep.subr.bf16.mxu0 0
        %4061 = vmatpush1.bf16.msra.mxu0 0
        %4062 = vmatprep.subr.bf16.mxu0 0
        %4063 = vmatpush1.bf16.msra.mxu0 0
        %4064 = vmatprep.subr.bf16.mxu0 0
        %4065 = vmatpush1.bf16.msra.mxu0 0
        %4066 = vmatprep.subr.bf16.mxu0 0
        %4067 = vmatpush1.bf16.msra.mxu0 0
        %4068 = vmatprep.mubr.bf16.mxu0 0
        %4069 = vmatmul.mubr.bf16.gmra.mrb[0].mxu0 %v3962
        %v4070 = vpop.f32.mrb[0].mxu0
        %v4071 = vadd.f32 %v3986, %v4070
        %v4072 = vpop.f32.mrb[0].mxu0
        %v4073 = vpop.f32.mrb[0].mxu0
        %v4074 = vpop.f32.mrb[0].mxu0
        %4075 = vdwg.mxu0
        %v4076 = vmax.f32 %v4071, 0.0
        %v4077 = vpack.c.bf16 %v4076, %v4076
        %s4078 = scalar_lea.vmem [#allocation6], 64
        %v4079 = vld [vmem:[%s4078] sm:$0xf]
        %v4080 = vld [vmem:[%s4078 + $0x4] sm:$0xf]
        %v4081 = vld [vmem:[%s4078 + $0x8] sm:$0xf]
        %v4082 = vld [vmem:[%s4078 + $0xc] sm:$0xf]
        %v4083 = vld [vmem:[%s4078 + $0x10] sm:$0xf]
        %v4084 = vld [vmem:[%s4078 + $0x14] sm:$0xf]
        %v4085 = vld [vmem:[%s4078 + $0x18] sm:$0xf]
        %v4086 = vld [vmem:[%s4078 + $0x1c] sm:$0xf]
        %v4087 = vld [vmem:[%s4078 + $0x20] sm:$0xf]
        %v4088 = vld [vmem:[%s4078 + $0x24] sm:$0xf]
        %v4089 = vld [vmem:[%s4078 + $0x28] sm:$0xf]
        %v4090 = vld [vmem:[%s4078 + $0x2c] sm:$0xf]
        %v4091 = vld [vmem:[%s4078 + $0x30] sm:$0xf]
        %v4092 = vld [vmem:[%s4078 + $0x34] sm:$0xf]
        %v4093 = vld [vmem:[%s4078 + $0x38] sm:$0xf]
        %v4094 = vld [vmem:[%s4078 + $0x3c] sm:$0xf]
        %s4095 = scalar_lea.vmem %s11, 1
        %v4096 = vld [vmem:[%s4095] sm:$0x1]
        %v4098 = vlaneseq
        %v4099 = vshrl.u32 %v4098, 7
        %v4100 = vsub.s32 0, %v4099
        %v4101 = vrot.slane %v4096, %v4100
        %v4119 = vunpack.c.l.b16 %v4079
        %v4120 = vunpack.c.l.b16 %v4080
        %v4121 = vunpack.c.l.b16 %v4081
        %v4122 = vunpack.c.l.b16 %v4082
        %v4123 = vunpack.c.l.b16 %v4083
        %v4124 = vunpack.c.l.b16 %v4084
        %v4125 = vunpack.c.l.b16 %v4085
        %v4126 = vunpack.c.l.b16 %v4086
        %v4127 = vunpack.c.l.b16 %v4087
        %v4128 = vunpack.c.l.b16 %v4088
        %v4129 = vunpack.c.l.b16 %v4089
        %v4130 = vunpack.c.l.b16 %v4090
        %v4131 = vunpack.c.l.b16 %v4091
        %v4132 = vunpack.c.l.b16 %v4092
        %v4133 = vunpack.c.l.b16 %v4093
        %v4134 = vunpack.c.l.b16 %v4094
        %v4135 = vpack.c.b16 %v4120, %v4119
        %v4136 = vpack.c.b16 %v4122, %v4121
        %v4137 = vpack.c.b16 %v4124, %v4123
        %v4138 = vpack.c.b16 %v4126, %v4125
        %v4139 = vpack.c.b16 %v4128, %v4127
        %v4140 = vpack.c.b16 %v4130, %v4129
        %v4141 = vpack.c.b16 %v4132, %v4131
        %v4142 = vpack.c.b16 %v4134, %v4133
        %4151 = vmatprep.subr.bf16.mxu0 0
        %4152 = vmatpush1.bf16.msra.mxu0 %v4135
        %4153 = vmatprep.subr.bf16.mxu0 0
        %4154 = vmatpush1.bf16.msra.mxu0 %v4136
        %4155 = vmatprep.subr.bf16.mxu0 0
        %4156 = vmatpush1.bf16.msra.mxu0 %v4137
        %4157 = vmatprep.subr.bf16.mxu0 0
        %4158 = vmatpush1.bf16.msra.mxu0 %v4138
        %4159 = vmatprep.subr.bf16.mxu0 0
        %4160 = vmatpush1.bf16.msra.mxu0 %v4139
        %4161 = vmatprep.subr.bf16.mxu0 0
        %4162 = vmatpush1.bf16.msra.mxu0 %v4140
        %4163 = vmatprep.subr.bf16.mxu0 0
        %4164 = vmatpush1.bf16.msra.mxu0 %v4141
        %4165 = vmatprep.subr.bf16.mxu0 0
        %4166 = vmatpush1.bf16.msra.mxu0 %v4142
        %4167 = vmatprep.subr.bf16.mxu0 0
        %4168 = vmatpush1.bf16.msra.mxu0 0
        %4169 = vmatprep.subr.bf16.mxu0 0
        %4170 = vmatpush1.bf16.msra.mxu0 0
        %4171 = vmatprep.subr.bf16.mxu0 0
        %4172 = vmatpush1.bf16.msra.mxu0 0
        %4173 = vmatprep.subr.bf16.mxu0 0
        %4174 = vmatpush1.bf16.msra.mxu0 0
        %4175 = vmatprep.subr.bf16.mxu0 0
        %4176 = vmatpush1.bf16.msra.mxu0 0
        %4177 = vmatprep.subr.bf16.mxu0 0
        %4178 = vmatpush1.bf16.msra.mxu0 0
        %4179 = vmatprep.subr.bf16.mxu0 0
        %4180 = vmatpush1.bf16.msra.mxu0 0
        %4181 = vmatprep.subr.bf16.mxu0 0
        %4182 = vmatpush1.bf16.msra.mxu0 0
        %4183 = vmatprep.mubr.bf16.mxu0 0
        %4184 = vmatmul.mubr.bf16.gmra.mrb[0].mxu0 %v4077
        %v4185 = vpop.f32.mrb[0].mxu0
        %v4186 = vadd.f32 %v4101, %v4185
        %v4187 = vpop.f32.mrb[0].mxu0
        %v4188 = vpop.f32.mrb[0].mxu0
        %v4189 = vpop.f32.mrb[0].mxu0
        %4190 = vdwg.mxu0
        %v4191 = vadd.f32 %v3930, %v4186
        %4192 = vst [vmem:[%s452] sm:$0xff] %v4191
        %p4193 = scmp.lt.s32.totalorder %s25, 1
        %s4194 = scalar_select %p4193, %s25, 1
        %s4195 = smul.addr %s4194, 8
        %s4196 = scalar_lea.vmem %s12, %s4195
        // Predicated region
        $region81: #{bigram_forward.2} parent=67 // pred_check
          %p4197 = pneg %p300
        $region82: #{bigram_forward.2} parent=67 // pred_check_branch
          %4199 = sbr.rel (%p4197) target = $region84
        $region83: #{bigram_forward.2} parent=67 // pred_region
          _
        $region84: #{bigram_forward.2} parent=67 // pred_fallthru
          _
      $region68: #{bigram_forward.2} parent=5 // pred_fallthru
        _
      %p4200 = scmp.le.s32.totalorder 2, %s20
      // Predicated region
      $region85: #{bigram_forward.2} parent=5 // pred_check
        %p4201 = pneg %p4200
      $region86: #{bigram_forward.2} parent=5 // pred_check_branch
        %4203 = sbr.rel (%p4201) target = $region88
      $region87: #{bigram_forward.2} parent=5 // pred_region
        %s4204 = ssub.s32 %s20, 2
        // Predicated region
        $region89: #{bigram_forward.2} parent=87 // pred_check
          %p4205 = pneg %p306
        $region90: #{bigram_forward.2} parent=87 // pred_check_branch
          %4207 = sbr.rel (%p4205) target = $region92
        $region91: #{bigram_forward.2} parent=87 // pred_region
          %p4208 = scmp.lt.s32.totalorder %s26, 1
          %s4209 = scalar_select %p4208, %s26, 1
          %s4210 = smul.addr %s4209, 8
          %s4211 = scalar_lea.vmem %s12, %s4210
        $region92: #{bigram_forward.2} parent=87 // pred_fallthru
          _
      $region88: #{bigram_forward.2} parent=5 // pred_fallthru
        _
    $region6: #{bigram_forward.2} parent=1 // loop_footer
      %s24 = sadd.s32 1, %s20
    $region7: #{bigram_forward.2} parent=1 // loop_footer_branch
      %19 = sbr.rel target = $region3
    $region8: #{bigram_forward.2} parent=1 // loop_exit
      _
    %4212 = vsyncpa [#allocation3], 1
    %s4213 = scalar_lea.sflag [#allocation3], 1
    %4214 = vsyncpa %s4213, 1
    %4215 = vsyncpa [#allocation5], 1

</llo_original>
